<compile_context>
chip_gen: v7x
topology: tpu7x:2x2x1
jax: 0.10.0
libtpu: 0.0.40
codegen_flags: <defaults>
</compile_context>

<pallas_src>
import functools

import jax
import jax.numpy as jnp
from jax.experimental import pallas as pl
from jax.experimental.pallas import tpu as pltpu


_VMEM_LIMIT = 48 * 1024 * 1024   # raised scoped-VMEM cap, safe on v5e/v6e/v7x


def _pick_tile(n, prefer=(512, 256, 128)):
    for t in prefer:
        if t <= n and n % t == 0:
            return t
    return n


# --------------------------------------------------------------------------
# Kernel A: t = relu(x @ Wt), p = relu(x @ Wp), tiled over rows.
# --------------------------------------------------------------------------
def _project_kernel(x_ref, wt_ref, wp_ref, t_ref, p_ref):
    x = x_ref[0]                                                       # (tm, Cin)
    t_ref[0] = jnp.maximum(
        jnp.dot(x, wt_ref[...], preferred_element_type=jnp.float32), 0.0
    ).astype(t_ref.dtype)
    p_ref[0] = jnp.maximum(
        jnp.dot(x, wp_ref[...], preferred_element_type=jnp.float32), 0.0
    ).astype(p_ref.dtype)


def project_tp(x_bnc, wt, wp, tm):
    B, N, Cin = x_bnc.shape
    Cmid = wt.shape[1]
    return pl.pallas_call(
        _project_kernel,
        out_shape=(jax.ShapeDtypeStruct((B, N, Cmid), jnp.float32),
                   jax.ShapeDtypeStruct((B, N, Cmid), jnp.float32)),
        grid=(B, N // tm),
        in_specs=[
            pl.BlockSpec((1, tm, Cin), lambda b, i: (b, i, 0)),
            pl.BlockSpec((Cin, Cmid), lambda b, i: (0, 0)),
            pl.BlockSpec((Cin, Cmid), lambda b, i: (0, 0)),
        ],
        out_specs=(pl.BlockSpec((1, tm, Cmid), lambda b, i: (b, i, 0)),
                   pl.BlockSpec((1, tm, Cmid), lambda b, i: (b, i, 0))),
        compiler_params=pltpu.CompilerParams(
            dimension_semantics=("parallel", "parallel")),
    )(x_bnc, wt, wp)


# --------------------------------------------------------------------------
# Kernel B: symmetric affinity tiles + row-sum accumulator.
#   att_sym[I,J] = 0.5 * (T_I P_J^T + P_I T_J^T)   (contract last dims, no .T)
#   rowsum[I]   += sum_J att_sym[I,J]              (accumulated over j axis)
# --------------------------------------------------------------------------
def _att_sym_kernel(ti_ref, pi_ref, tj_ref, pj_ref, att_ref, rs_ref):
    j = pl.program_id(2)
    dn = (((1,), (1,)), ((), ()))                   # contract last dims of both
    a = jax.lax.dot_general(ti_ref[0], pj_ref[0], dn,
                            preferred_element_type=jnp.float32)
    b = jax.lax.dot_general(pi_ref[0], tj_ref[0], dn,
                            preferred_element_type=jnp.float32)
    sym = 0.5 * (a + b)                             # (tq, tk)
    att_ref[0] = sym.astype(att_ref.dtype)

    @pl.when(j == 0)
    def _():
        rs_ref[...] = jnp.zeros_like(rs_ref)
    rs_ref[0] = rs_ref[0] + jnp.sum(sym, axis=1, keepdims=True)


def att_sym_rowsum(t, p, tq, tk, att_dtype=jnp.float32):
    B, N, Cmid = t.shape
    return pl.pallas_call(
        _att_sym_kernel,
        out_shape=(jax.ShapeDtypeStruct((B, N, N), att_dtype),
                   jax.ShapeDtypeStruct((B, N, 1), jnp.float32)),
        grid=(B, N // tq, N // tk),
        in_specs=[
            pl.BlockSpec((1, tq, Cmid), lambda b, i, j: (b, i, 0)),   # T_I
            pl.BlockSpec((1, tq, Cmid), lambda b, i, j: (b, i, 0)),   # P_I
            pl.BlockSpec((1, tk, Cmid), lambda b, i, j: (b, j, 0)),   # T_J
            pl.BlockSpec((1, tk, Cmid), lambda b, i, j: (b, j, 0)),   # P_J
        ],
        out_specs=(pl.BlockSpec((1, tq, tk), lambda b, i, j: (b, i, j)),
                   pl.BlockSpec((1, tq, 1), lambda b, i, j: (b, i, 0))),
        compiler_params=pltpu.CompilerParams(
            dimension_semantics=("parallel", "parallel", "arbitrary"),
            vmem_limit_bytes=_VMEM_LIMIT),
    )(t, p, t, p)


# --------------------------------------------------------------------------
# Kernel C: SNLUnit pre-BN path, tiled over rows of att, with d-scaling folded
#           in and per-tile partial BN statistics as extra outputs.
#   gw2_scaled = d * ((x @ Wg) @ W2)      (once per batch, VMEM scratch)
#   per row tile i:
#     x1 = (x_i @ Wg) @ W1
#     x2 = d_i * (att_i @ gw2_scaled)     (lane-dense Cin output for the N^2 matmul)
#     pre = x1 - x2 ; emit sum(pre), sum(pre^2) per channel
# --------------------------------------------------------------------------
def _snl_pre_kernel(x_ref, d_ref, att_ref, wg_ref, w1_ref, w2_ref,
                    pre_ref, psum_ref, psq_ref, gw2_ref, *, tm):
    i = pl.program_id(1)

    @pl.when(i == 0)
    def _():
        xf = x_ref[0]                                                  # (N, Cin)
        gf = jnp.dot(xf, wg_ref[...], preferred_element_type=jnp.float32)
        gw2 = jnp.dot(gf, w2_ref[...], preferred_element_type=jnp.float32)
        gw2_ref[...] = gw2 * d_ref[0]                                  # (N, Cin)

    row = pl.multiple_of(i * tm, tm)
    x_i = x_ref[0, pl.ds(row, tm), :]                                  # (tm, Cin)
    d_i = d_ref[0, pl.ds(row, tm), :]                                  # (tm, 1)
    g_i = jnp.dot(x_i, wg_ref[...], preferred_element_type=jnp.float32)
    x1 = jnp.dot(g_i, w1_ref[...], preferred_element_type=jnp.float32)
    att_i = att_ref[0].astype(jnp.float32)                             # (tm, N)
    x2 = d_i * jnp.dot(att_i, gw2_ref[...],
                       preferred_element_type=jnp.float32)             # (tm, Cin)
    pre = x1 - x2
    pre_ref[0] = pre.astype(pre_ref.dtype)
    psum_ref[0, 0] = jnp.sum(pre, axis=0, keepdims=True)               # (1, Cin)
    psq_ref[0, 0] = jnp.sum(pre * pre, axis=0, keepdims=True)          # (1, Cin)


def snl_unit_pre(x_bnc, d, att, wg, w1, w2, tm):
    B, N, Cin = x_bnc.shape
    Cmid = wg.shape[1]
    nt = N // tm
    return pl.pallas_call(
        functools.partial(_snl_pre_kernel, tm=tm),
        out_shape=(jax.ShapeDtypeStruct((B, N, Cin), jnp.float32),
                   jax.ShapeDtypeStruct((B, nt, 1, Cin), jnp.float32),
                   jax.ShapeDtypeStruct((B, nt, 1, Cin), jnp.float32)),
        grid=(B, nt),
        in_specs=[
            pl.BlockSpec((1, N, Cin), lambda b, i: (b, 0, 0)),   # x resident per batch
            pl.BlockSpec((1, N, 1), lambda b, i: (b, 0, 0)),     # d resident per batch
            pl.BlockSpec((1, tm, N), lambda b, i: (b, i, 0)),    # att row slab (streamed)
            pl.BlockSpec((Cin, Cmid), lambda b, i: (0, 0)),
            pl.BlockSpec((Cmid, Cin), lambda b, i: (0, 0)),
            pl.BlockSpec((Cmid, Cin), lambda b, i: (0, 0)),
        ],
        out_specs=(pl.BlockSpec((1, tm, Cin), lambda b, i: (b, i, 0)),
                   pl.BlockSpec((1, 1, 1, Cin), lambda b, i: (b, i, 0, 0)),
                   pl.BlockSpec((1, 1, 1, Cin), lambda b, i: (b, i, 0, 0))),
        scratch_shapes=[pltpu.VMEM((N, Cin), jnp.float32)],
        compiler_params=pltpu.CompilerParams(
            dimension_semantics=("parallel", "arbitrary"),
            vmem_limit_bytes=_VMEM_LIMIT),
    )(x_bnc, d, att, wg, w1, w2)


# --------------------------------------------------------------------------
# Kernel D: apply BN (precomputed per-channel scale/bias) + optional ReLU +
#           residual add, tiled over rows; residual aliased to the output.
# --------------------------------------------------------------------------
def _bn_apply_kernel(pre_ref, res_ref, scale_ref, bias_ref, out_ref, *, relu):
    y = pre_ref[0].astype(jnp.float32) * scale_ref[...] + bias_ref[...]
    if relu:
        y = jnp.maximum(y, 0.0)
    out_ref[0] = (y + res_ref[0].astype(jnp.float32)).astype(out_ref.dtype)


def bn_apply_residual(pre, residual, scale, bias, relu, tm):
    B, N, C = pre.shape
    return pl.pallas_call(
        functools.partial(_bn_apply_kernel, relu=relu),
        out_shape=jax.ShapeDtypeStruct((B, N, C), jnp.float32),
        grid=(B, N // tm),
        in_specs=[
            pl.BlockSpec((1, tm, C), lambda b, i: (b, i, 0)),
            pl.BlockSpec((1, tm, C), lambda b, i: (b, i, 0)),
            pl.BlockSpec((1, C), lambda b, i: (0, 0)),
            pl.BlockSpec((1, C), lambda b, i: (0, 0)),
        ],
        out_specs=pl.BlockSpec((1, tm, C), lambda b, i: (b, i, 0)),
        input_output_aliases={1: 0},                       # residual buffer reused
        compiler_params=pltpu.CompilerParams(
            dimension_semantics=("parallel", "parallel")),
    )(pre, residual, scale, bias)


# --------------------------------------------------------------------------
# SNLStage forward (glue around the kernels)
# --------------------------------------------------------------------------
def snl_stage_forward(x_nchw, params, relu=False, att_tile=None, row_tile=None,
                      att_dtype=jnp.float32, eps=1e-5):
    B, C, H, W = x_nchw.shape
    N = H * W
    x = x_nchw.reshape(B, C, N).transpose(0, 2, 1)                     # (B, N, C)

    tq = tk = att_tile if att_tile is not None else _pick_tile(N)
    tm = row_tile if row_tile is not None else _pick_tile(N)
    assert N % tq == 0 and N % tk == 0 and N % tm == 0

    # affinity (symmetric, unscaled) + row sums
    t, p = project_tp(x, params["wt"], params["wp"], tm)
    att_sym, rowsum = att_sym_rowsum(t, p, tq, tk, att_dtype)          # (B,N,N),(B,N,1)

    # d = sqrt(1/rowsum) where rowsum != 0 else 0  (tiny, pure jnp)
    safe = jnp.where(rowsum > 0.0, rowsum, 1.0)
    d = jnp.where(rowsum > 0.0, jax.lax.rsqrt(safe), 0.0)              # (B, N, 1)

    count = float(B * N)
    out = x
    for stage in params["stages"]:
        pre, psum, psq = snl_unit_pre(out, d, att_sym,
                                      stage["wg"], stage["w1"], stage["w2"], tm)
        # combine partial BN statistics (training-mode batch stats, biased var)
        mean = jnp.sum(psum, axis=(0, 1, 2)) / count                   # (C,)
        var = jnp.maximum(jnp.sum(psq, axis=(0, 1, 2)) / count - mean * mean, 0.0)
        scale = stage["gamma"] * jax.lax.rsqrt(var + eps)
        bias = stage["beta"] - mean * scale
        out = bn_apply_residual(pre, out, scale.reshape(1, C), bias.reshape(1, C),
                                relu, tm)
        # TODO(synk): torch training-mode BN also updates running_mean/var (a
        # stateful side effect); only the forward output is produced here.
    return out.transpose(0, 2, 1).reshape(B, C, H, W)                  # back to NCHW


# --------------------------------------------------------------------------
# Deterministic parameter init (kaiming_normal_, mode='fan_out', relu gain)
# Conv2d weight (out, in, 1, 1)  ->  stored transposed as (in, out).
# --------------------------------------------------------------------------
def _kaiming_fan_out_T(key, out_c, in_c):
    std = (2.0 / out_c) ** 0.5
    return (std * jax.random.normal(key, (out_c, in_c), jnp.float32)).T  # (in, out)


def init_params(key, inplanes, planes, stage_num):
    keys = jax.random.split(key, 2 + 3 * stage_num)
    params = {
        "wt": _kaiming_fan_out_T(keys[0], planes, inplanes),
        "wp": _kaiming_fan_out_T(keys[1], planes, inplanes),
        "stages": [],
    }
    for i in range(stage_num):
        kg, k1, k2 = keys[2 + 3 * i], keys[3 + 3 * i], keys[4 + 3 * i]
        params["stages"].append(dict(
            wg=_kaiming_fan_out_T(kg, planes, inplanes),      # (Cin, Cmid)
            w1=_kaiming_fan_out_T(k1, inplanes, planes),      # (Cmid, Cin)
            w2=_kaiming_fan_out_T(k2, inplanes, planes),      # (Cmid, Cin)
            gamma=jnp.ones((inplanes,), jnp.float32),
            beta=jnp.zeros((inplanes,), jnp.float32),
        ))
    return params


# --------------------------------------------------------------------------
# Pure-JAX reference (mirrors the PyTorch forward) for verification.
# --------------------------------------------------------------------------
def snl_stage_reference(x_nchw, params, relu=False, eps=1e-5):
    B, C, H, W = x_nchw.shape
    x = x_nchw.reshape(B, C, H * W).transpose(0, 2, 1)                   # (B, N, C)
    t = jnp.maximum(jnp.einsum("bnc,cm->bnm", x, params["wt"]), 0.0)
    p = jnp.maximum(jnp.einsum("bnc,cm->bnm", x, params["wp"]), 0.0)
    att = jnp.einsum("bnm,bkm->bnk", t, p)
    att = 0.5 * (att + jnp.swapaxes(att, 1, 2))
    d = jnp.sum(att, axis=2)
    d = jnp.where(d != 0.0, jnp.sqrt(1.0 / jnp.where(d != 0.0, d, 1.0)), 0.0)
    att = att * d[:, None, :] * d[:, :, None]
    out = x
    for s in params["stages"]:
        g = jnp.einsum("bnc,cm->bnm", out, s["wg"])
        x1 = jnp.einsum("bnm,mc->bnc", g, s["w1"])
        x2 = jnp.einsum("bnk,bkm->bnm", att, g)
        x2 = jnp.einsum("bnm,mc->bnc", x2, s["w2"])
        pre = x1 - x2
        mean = jnp.mean(pre, axis=(0, 1), keepdims=True)
        var = jnp.mean((pre - mean) ** 2, axis=(0, 1), keepdims=True)
        y = (pre - mean) * jax.lax.rsqrt(var + eps) * s["gamma"] + s["beta"]
        if relu:
            y = jnp.maximum(y, 0.0)
        out = y + out
    return out.transpose(0, 2, 1).reshape(B, C, H, W)


if __name__ == "__main__":
    B, inplanes, planes, H, W = 2, 8, 4, 16, 16   # N = 256 -> 2x2 att tiles of 128
    stage_num = 5
    relu = False

    key = jax.random.PRNGKey(0)
    kx, kp = jax.random.split(key)
    x = jax.random.normal(kx, (B, inplanes, H, W), jnp.float32)          # NCHW
    params = init_params(kp, inplanes, planes, stage_num)

    fwd = jax.jit(functools.partial(snl_stage_forward, relu=relu,
                                    att_tile=128, row_tile=128))
    out = jax.block_until_ready(fwd(x, params))

    ref = jax.block_until_ready(snl_stage_reference(x, params, relu=relu))
    assert out.shape == (B, inplanes, H, W)
    err = float(jnp.max(jnp.abs(out - ref)))
    assert jnp.allclose(out, ref, rtol=1e-3, atol=1e-3), err

    print("KERNEL_OK")
</pallas_src>

<mosaic_0001>
module attributes {stable_mosaic.version = 11 : i64} {
  func.func @_project_kernel(%arg0: i32, %arg1: i32, %arg2: memref<1x128x8xf32, #tpu.memory_space<vmem>>, %arg3: memref<8x4xf32, #tpu.memory_space<vmem>>, %arg4: memref<8x4xf32, #tpu.memory_space<vmem>>, %arg5: memref<1x128x4xf32, #tpu.memory_space<vmem>>, %arg6: memref<1x128x4xf32, #tpu.memory_space<vmem>>) attributes {dimension_semantics = [#tpu.dimension_semantics<parallel>, #tpu.dimension_semantics<parallel>], iteration_bounds = array<i64: 2, 2>, scalar_prefetch = 0 : i64, scratch_operands = 0 : i64, tpu.core_type = #tpu.core_type<tc>, window_params = [{transform_indices = @transform_0, window_bounds = array<i64: 1, 128, 8>}, {pipeline_mode = #tpu.pipeline_mode<synchronous>, transform_indices = @transform_1, window_bounds = array<i64: 8, 4>}, {pipeline_mode = #tpu.pipeline_mode<synchronous>, transform_indices = @transform_2, window_bounds = array<i64: 8, 4>}, {transform_indices = @transform_3, window_bounds = array<i64: 1, 128, 4>}, {transform_indices = @transform_4, window_bounds = array<i64: 1, 128, 4>}]} {
    %c0 = arith.constant 0 : index
    %c0_0 = arith.constant 0 : index
    %c0_1 = arith.constant 0 : index
    %0 = vector.load %arg2[%c0, %c0_0, %c0_1] : memref<1x128x8xf32, #tpu.memory_space<vmem>>, vector<1x128x8xf32>
    %1 = vector.shape_cast %0 : vector<1x128x8xf32> to vector<128x8xf32>
    %c0_2 = arith.constant 0 : index
    %c0_3 = arith.constant 0 : index
    %2 = vector.load %arg3[%c0_2, %c0_3] : memref<8x4xf32, #tpu.memory_space<vmem>>, vector<8x4xf32>
    %cst = arith.constant dense<0.000000e+00> : vector<128x4xf32>
    %3 = tpu.matmul %1, %2, %cst {dimension_numbers = #tpu.dot_dimension_numbers<[1], [0], [0], [1], [0, 0, 1, 1], [], []>} : vector<128x8xf32>, vector<8x4xf32>, vector<128x4xf32> -> vector<128x4xf32>
    %cst_4 = arith.constant 0.000000e+00 : f32
    %4 = vector.broadcast %cst_4 : f32 to vector<128x4xf32>
    %5 = arith.maximumf %3, %4 : vector<128x4xf32>
    %c0_5 = arith.constant 0 : index
    %c0_6 = arith.constant 0 : index
    %c0_7 = arith.constant 0 : index
    %6 = vector.load %arg5[%c0_5, %c0_6, %c0_7] : memref<1x128x4xf32, #tpu.memory_space<vmem>>, vector<1x128x4xf32>
    %7 = vector.shape_cast %6 : vector<1x128x4xf32> to vector<128x4xf32>
    %8 = vector.shape_cast %5 : vector<128x4xf32> to vector<1x128x4xf32>
    tpu.vector_store %arg5[%c0_5, %c0_6, %c0_7], %8 {strides = array<i32>} : memref<1x128x4xf32, #tpu.memory_space<vmem>>, vector<1x128x4xf32>,
    %c0_8 = arith.constant 0 : index
    %c0_9 = arith.constant 0 : index
    %9 = vector.load %arg4[%c0_8, %c0_9] : memref<8x4xf32, #tpu.memory_space<vmem>>, vector<8x4xf32>
    %cst_10 = arith.constant dense<0.000000e+00> : vector<128x4xf32>
    %10 = tpu.matmul %1, %9, %cst_10 {dimension_numbers = #tpu.dot_dimension_numbers<[1], [0], [0], [1], [0, 0, 1, 1], [], []>} : vector<128x8xf32>, vector<8x4xf32>, vector<128x4xf32> -> vector<128x4xf32>
    %cst_11 = arith.constant 0.000000e+00 : f32
    %11 = vector.broadcast %cst_11 : f32 to vector<128x4xf32>
    %12 = arith.maximumf %10, %11 : vector<128x4xf32>
    %c0_12 = arith.constant 0 : index
    %c0_13 = arith.constant 0 : index
    %c0_14 = arith.constant 0 : index
    %13 = vector.load %arg6[%c0_12, %c0_13, %c0_14] : memref<1x128x4xf32, #tpu.memory_space<vmem>>, vector<1x128x4xf32>
    %14 = vector.shape_cast %13 : vector<1x128x4xf32> to vector<128x4xf32>
    %15 = vector.shape_cast %12 : vector<128x4xf32> to vector<1x128x4xf32>
    tpu.vector_store %arg6[%c0_12, %c0_13, %c0_14], %15 {strides = array<i32>} : memref<1x128x4xf32, #tpu.memory_space<vmem>>, vector<1x128x4xf32>,
    return
  }
  func.func @transform_0(%arg0: i32, %arg1: i32) -> (i32, i32, i32) {
    %c0_i32 = arith.constant 0 : i32
    %c0_i32_0 = arith.constant 0 : i32
    return %arg0, %arg1, %c0_i32 : i32, i32, i32
  }
  func.func @transform_1(%arg0: i32, %arg1: i32) -> (i32, i32) {
    %c0_i32 = arith.constant 0 : i32
    %c0_i32_0 = arith.constant 0 : i32
    %c0_i32_1 = arith.constant 0 : i32
    return %c0_i32, %c0_i32_0 : i32, i32
  }
  func.func @transform_2(%arg0: i32, %arg1: i32) -> (i32, i32) {
    %c0_i32 = arith.constant 0 : i32
    %c0_i32_0 = arith.constant 0 : i32
    %c0_i32_1 = arith.constant 0 : i32
    return %c0_i32, %c0_i32_0 : i32, i32
  }
  func.func @transform_3(%arg0: i32, %arg1: i32) -> (i32, i32, i32) {
    %c0_i32 = arith.constant 0 : i32
    %c0_i32_0 = arith.constant 0 : i32
    return %arg0, %arg1, %c0_i32 : i32, i32, i32
  }
  func.func @transform_4(%arg0: i32, %arg1: i32) -> (i32, i32, i32) {
    %c0_i32 = arith.constant 0 : i32
    %c0_i32_0 = arith.constant 0 : i32
    return %arg0, %arg1, %c0_i32 : i32, i32, i32
  }
}

module attributes {stable_mosaic.version = 11 : i64} {
  func.func @_att_sym_kernel(%arg0: i32, %arg1: i32, %arg2: i32, %arg3: memref<1x128x4xf32, #tpu.memory_space<vmem>>, %arg4: memref<1x128x4xf32, #tpu.memory_space<vmem>>, %arg5: memref<1x128x4xf32, #tpu.memory_space<vmem>>, %arg6: memref<1x128x4xf32, #tpu.memory_space<vmem>>, %arg7: memref<1x128x128xf32, #tpu.memory_space<vmem>>, %arg8: memref<1x128x1xf32, #tpu.memory_space<vmem>>) attributes {dimension_semantics = [#tpu.dimension_semantics<parallel>, #tpu.dimension_semantics<parallel>, #tpu.dimension_semantics<arbitrary>], iteration_bounds = array<i64: 2, 2, 2>, scalar_prefetch = 0 : i64, scratch_operands = 0 : i64, tpu.core_type = #tpu.core_type<tc>, window_params = [{transform_indices = @transform_0, window_bounds = array<i64: 1, 128, 4>}, {transform_indices = @transform_1, window_bounds = array<i64: 1, 128, 4>}, {transform_indices = @transform_2, window_bounds = array<i64: 1, 128, 4>}, {transform_indices = @transform_3, window_bounds = array<i64: 1, 128, 4>}, {transform_indices = @transform_4, window_bounds = array<i64: 1, 128, 128>}, {transform_indices = @transform_5, window_bounds = array<i64: 1, 128, 1>}]} {
    %c0 = arith.constant 0 : index
    %c0_0 = arith.constant 0 : index
    %c0_1 = arith.constant 0 : index
    %0 = vector.load %arg3[%c0, %c0_0, %c0_1] : memref<1x128x4xf32, #tpu.memory_space<vmem>>, vector<1x128x4xf32>
    %1 = vector.shape_cast %0 : vector<1x128x4xf32> to vector<128x4xf32>
    %c0_2 = arith.constant 0 : index
    %c0_3 = arith.constant 0 : index
    %c0_4 = arith.constant 0 : index
    %2 = vector.load %arg6[%c0_2, %c0_3, %c0_4] : memref<1x128x4xf32, #tpu.memory_space<vmem>>, vector<1x128x4xf32>
    %3 = vector.shape_cast %2 : vector<1x128x4xf32> to vector<128x4xf32>
    %cst = arith.constant dense<0.000000e+00> : vector<128x128xf32>
    %4 = tpu.matmul %1, %3, %cst {dimension_numbers = #tpu.dot_dimension_numbers<[1], [1], [0], [0], [0, 0, 1, 0], [], []>} : vector<128x4xf32>, vector<128x4xf32>, vector<128x128xf32> -> vector<128x128xf32>
    %c0_5 = arith.constant 0 : index
    %c0_6 = arith.constant 0 : index
    %c0_7 = arith.constant 0 : index
    %5 = vector.load %arg4[%c0_5, %c0_6, %c0_7] : memref<1x128x4xf32, #tpu.memory_space<vmem>>, vector<1x128x4xf32>
    %6 = vector.shape_cast %5 : vector<1x128x4xf32> to vector<128x4xf32>
    %c0_8 = arith.constant 0 : index
    %c0_9 = arith.constant 0 : index
    %c0_10 = arith.constant 0 : index
    %7 = vector.load %arg5[%c0_8, %c0_9, %c0_10] : memref<1x128x4xf32, #tpu.memory_space<vmem>>, vector<1x128x4xf32>
    %8 = vector.shape_cast %7 : vector<1x128x4xf32> to vector<128x4xf32>
    %cst_11 = arith.constant dense<0.000000e+00> : vector<128x128xf32>
    %9 = tpu.matmul %6, %8, %cst_11 {dimension_numbers = #tpu.dot_dimension_numbers<[1], [1], [0], [0], [0, 0, 1, 0], [], []>} : vector<128x4xf32>, vector<128x4xf32>, vector<128x128xf32> -> vector<128x128xf32>
    %10 = arith.addf %4, %9 : vector<128x128xf32>
    %cst_12 = arith.constant 5.000000e-01 : f32
    %11 = vector.broadcast %cst_12 : f32 to vector<128x128xf32>
    %12 = arith.mulf %11, %10 : vector<128x128xf32>
    %c0_13 = arith.constant 0 : index
    %c0_14 = arith.constant 0 : index
    %c0_15 = arith.constant 0 : index
    %13 = vector.load %arg7[%c0_13, %c0_14, %c0_15] : memref<1x128x128xf32, #tpu.memory_space<vmem>>, vector<1x128x128xf32>
    %14 = vector.shape_cast %13 : vector<1x128x128xf32> to vector<128x128xf32>
    %15 = vector.shape_cast %12 : vector<128x128xf32> to vector<1x128x128xf32>
    tpu.vector_store %arg7[%c0_13, %c0_14, %c0_15], %15 {strides = array<i32>} : memref<1x128x128xf32, #tpu.memory_space<vmem>>, vector<1x128x128xf32>,
    %c0_i32 = arith.constant 0 : i32
    %16 = arith.cmpi eq, %arg2, %c0_i32 : i32
    %17 = arith.extui %16 : i1 to i32
    %c0_i32_16 = arith.constant 0 : i32
    %18 = arith.cmpi ne, %17, %c0_i32_16 : i32
    scf.if %18 {
      %cst_24 = arith.constant 0.000000e+00 : f32
      %27 = vector.broadcast %cst_24 : f32 to vector<1x128x1xf32>
      %c0_25 = arith.constant 0 : index
      %c0_26 = arith.constant 0 : index
      %c0_27 = arith.constant 0 : index
      %28 = vector.load %arg8[%c0_25, %c0_26, %c0_27] : memref<1x128x1xf32, #tpu.memory_space<vmem>>, vector<1x128x1xf32>
      tpu.vector_store %arg8[%c0_25, %c0_26, %c0_27], %27 {strides = array<i32>} : memref<1x128x1xf32, #tpu.memory_space<vmem>>, vector<1x128x1xf32>,
    } else {
    }
    %c0_17 = arith.constant 0 : index
    %c0_18 = arith.constant 0 : index
    %c0_19 = arith.constant 0 : index
    %19 = vector.load %arg8[%c0_17, %c0_18, %c0_19] : memref<1x128x1xf32, #tpu.memory_space<vmem>>, vector<1x128x1xf32>
    %20 = vector.shape_cast %19 : vector<1x128x1xf32> to vector<128x1xf32>
    %cst_20 = arith.constant dense<0.000000e+00> : vector<128xf32>
    %21 = vector.multi_reduction <add>, %12, %cst_20 [1] : vector<128x128xf32> to vector<128xf32>
    %22 = vector.shape_cast %21 : vector<128xf32> to vector<128x1xf32>
    %23 = arith.addf %20, %22 : vector<128x1xf32>
    %c0_21 = arith.constant 0 : index
    %c0_22 = arith.constant 0 : index
    %c0_23 = arith.constant 0 : index
    %24 = vector.load %arg8[%c0_21, %c0_22, %c0_23] : memref<1x128x1xf32, #tpu.memory_space<vmem>>, vector<1x128x1xf32>
    %25 = vector.shape_cast %24 : vector<1x128x1xf32> to vector<128x1xf32>
    %26 = vector.shape_cast %23 : vector<128x1xf32> to vector<1x128x1xf32>
    tpu.vector_store %arg8[%c0_21, %c0_22, %c0_23], %26 {strides = array<i32>} : memref<1x128x1xf32, #tpu.memory_space<vmem>>, vector<1x128x1xf32>,
    return
  }
  func.func @transform_0(%arg0: i32, %arg1: i32, %arg2: i32) -> (i32, i32, i32) {
    %c0_i32 = arith.constant 0 : i32
    %c0_i32_0 = arith.constant 0 : i32
    return %arg0, %arg1, %c0_i32 : i32, i32, i32
  }
  func.func @transform_1(%arg0: i32, %arg1: i32, %arg2: i32) -> (i32, i32, i32) {
    %c0_i32 = arith.constant 0 : i32
    %c0_i32_0 = arith.constant 0 : i32
    return %arg0, %arg1, %c0_i32 : i32, i32, i32
  }
  func.func @transform_2(%arg0: i32, %arg1: i32, %arg2: i32) -> (i32, i32, i32) {
    %c0_i32 = arith.constant 0 : i32
    %c0_i32_0 = arith.constant 0 : i32
    return %arg0, %arg2, %c0_i32 : i32, i32, i32
  }
  func.func @transform_3(%arg0: i32, %arg1: i32, %arg2: i32) -> (i32, i32, i32) {
    %c0_i32 = arith.constant 0 : i32
    %c0_i32_0 = arith.constant 0 : i32
    return %arg0, %arg2, %c0_i32 : i32, i32, i32
  }
  func.func @transform_4(%arg0: i32, %arg1: i32, %arg2: i32) -> (i32, i32, i32) {
    %c0_i32 = arith.constant 0 : i32
    return %arg0, %arg1, %arg2 : i32, i32, i32
  }
  func.func @transform_5(%arg0: i32, %arg1: i32, %arg2: i32) -> (i32, i32, i32) {
    %c0_i32 = arith.constant 0 : i32
    %c0_i32_0 = arith.constant 0 : i32
    return %arg0, %arg1, %c0_i32 : i32, i32, i32
  }
}

module attributes {stable_mosaic.version = 11 : i64} {
  func.func @_snl_pre_kernel(%arg0: i32, %arg1: i32, %arg2: memref<1x256x8xf32, #tpu.memory_space<vmem>>, %arg3: memref<1x256x1xf32, #tpu.memory_space<vmem>>, %arg4: memref<1x128x256xf32, #tpu.memory_space<vmem>>, %arg5: memref<8x4xf32, #tpu.memory_space<vmem>>, %arg6: memref<4x8xf32, #tpu.memory_space<vmem>>, %arg7: memref<4x8xf32, #tpu.memory_space<vmem>>, %arg8: memref<1x128x8xf32, #tpu.memory_space<vmem>>, %arg9: memref<1x1x1x8xf32, #tpu.memory_space<vmem>>, %arg10: memref<1x1x1x8xf32, #tpu.memory_space<vmem>>, %arg11: memref<256x8xf32, #tpu.memory_space<vmem>>) attributes {dimension_semantics = [#tpu.dimension_semantics<parallel>, #tpu.dimension_semantics<arbitrary>], iteration_bounds = array<i64: 2, 2>, scalar_prefetch = 0 : i64, scratch_operands = 1 : i64, tpu.core_type = #tpu.core_type<tc>, window_params = [{transform_indices = @transform_0, window_bounds = array<i64: 1, 256, 8>}, {transform_indices = @transform_1, window_bounds = array<i64: 1, 256, 1>}, {transform_indices = @transform_2, window_bounds = array<i64: 1, 128, 256>}, {pipeline_mode = #tpu.pipeline_mode<synchronous>, transform_indices = @transform_3, window_bounds = array<i64: 8, 4>}, {pipeline_mode = #tpu.pipeline_mode<synchronous>, transform_indices = @transform_4, window_bounds = array<i64: 4, 8>}, {pipeline_mode = #tpu.pipeline_mode<synchronous>, transform_indices = @transform_5, window_bounds = array<i64: 4, 8>}, {transform_indices = @transform_6, window_bounds = array<i64: 1, 128, 8>}, {transform_indices = @transform_7, window_bounds = array<i64: 1, 1, 1, 8>}, {transform_indices = @transform_8, window_bounds = array<i64: 1, 1, 1, 8>}]} {
    %c0_i32 = arith.constant 0 : i32
    %0 = arith.cmpi eq, %arg1, %c0_i32 : i32
    %1 = arith.extui %0 : i1 to i32
    %c0_i32_0 = arith.constant 0 : i32
    %2 = arith.cmpi ne, %1, %c0_i32_0 : i32
    scf.if %2 {
      %c0_28 = arith.constant 0 : index
      %c0_29 = arith.constant 0 : index
      %c0_30 = arith.constant 0 : index
      %36 = vector.load %arg2[%c0_28, %c0_29, %c0_30] : memref<1x256x8xf32, #tpu.memory_space<vmem>>, vector<1x256x8xf32>
      %37 = vector.shape_cast %36 : vector<1x256x8xf32> to vector<256x8xf32>
      %c0_31 = arith.constant 0 : index
      %c0_32 = arith.constant 0 : index
      %38 = vector.load %arg5[%c0_31, %c0_32] : memref<8x4xf32, #tpu.memory_space<vmem>>, vector<8x4xf32>
      %cst_33 = arith.constant dense<0.000000e+00> : vector<256x4xf32>
      %39 = tpu.matmul %37, %38, %cst_33 {dimension_numbers = #tpu.dot_dimension_numbers<[1], [0], [0], [1], [0, 0, 1, 1], [], []>} : vector<256x8xf32>, vector<8x4xf32>, vector<256x4xf32> -> vector<256x4xf32>
      %c0_34 = arith.constant 0 : index
      %c0_35 = arith.constant 0 : index
      %40 = vector.load %arg7[%c0_34, %c0_35] : memref<4x8xf32, #tpu.memory_space<vmem>>, vector<4x8xf32>
      %cst_36 = arith.constant dense<0.000000e+00> : vector<256x8xf32>
      %41 = tpu.matmul %39, %40, %cst_36 {dimension_numbers = #tpu.dot_dimension_numbers<[1], [0], [0], [1], [0, 0, 1, 1], [], []>} : vector<256x4xf32>, vector<4x8xf32>, vector<256x8xf32> -> vector<256x8xf32>
      %c0_37 = arith.constant 0 : index
      %c0_38 = arith.constant 0 : index
      %c0_39 = arith.constant 0 : index
      %42 = vector.load %arg3[%c0_37, %c0_38, %c0_39] : memref<1x256x1xf32, #tpu.memory_space<vmem>>, vector<1x256x1xf32>
      %43 = vector.shape_cast %42 : vector<1x256x1xf32> to vector<256x1xf32>
      %44 = vector.broadcast %43 : vector<256x1xf32> to vector<256x8xf32>
      %45 = arith.mulf %41, %44 : vector<256x8xf32>
      %c0_40 = arith.constant 0 : index
      %c0_41 = arith.constant 0 : index
      %46 = vector.load %arg11[%c0_40, %c0_41] : memref<256x8xf32, #tpu.memory_space<vmem>>, vector<256x8xf32>
      tpu.vector_store %arg11[%c0_40, %c0_41], %45 {strides = array<i32>} : memref<256x8xf32, #tpu.memory_space<vmem>>, vector<256x8xf32>,
    } else {
    }
    %c128_i32 = arith.constant 128 : i32
    %3 = arith.muli %arg1, %c128_i32 : i32
    %4 = tpu.assume_multiple %3, 128 : i32
    %c0 = arith.constant 0 : index
    %5 = arith.index_cast %4 : i32 to index
    %c0_1 = arith.constant 0 : index
    %6 = vector.load %arg2[%c0, %5, %c0_1] : memref<1x256x8xf32, #tpu.memory_space<vmem>>, vector<1x128x8xf32>
    %7 = vector.shape_cast %6 : vector<1x128x8xf32> to vector<128x8xf32>
    %c0_2 = arith.constant 0 : index
    %8 = arith.index_cast %4 : i32 to index
    %c0_3 = arith.constant 0 : index
    %9 = vector.load %arg3[%c0_2, %8, %c0_3] : memref<1x256x1xf32, #tpu.memory_space<vmem>>, vector<1x128x1xf32>
    %10 = vector.shape_cast %9 : vector<1x128x1xf32> to vector<128x1xf32>
    %c0_4 = arith.constant 0 : index
    %c0_5 = arith.constant 0 : index
    %11 = vector.load %arg5[%c0_4, %c0_5] : memref<8x4xf32, #tpu.memory_space<vmem>>, vector<8x4xf32>
    %cst = arith.constant dense<0.000000e+00> : vector<128x4xf32>
    %12 = tpu.matmul %7, %11, %cst {dimension_numbers = #tpu.dot_dimension_numbers<[1], [0], [0], [1], [0, 0, 1, 1], [], []>} : vector<128x8xf32>, vector<8x4xf32>, vector<128x4xf32> -> vector<128x4xf32>
    %c0_6 = arith.constant 0 : index
    %c0_7 = arith.constant 0 : index
    %13 = vector.load %arg6[%c0_6, %c0_7] : memref<4x8xf32, #tpu.memory_space<vmem>>, vector<4x8xf32>
    %cst_8 = arith.constant dense<0.000000e+00> : vector<128x8xf32>
    %14 = tpu.matmul %12, %13, %cst_8 {dimension_numbers = #tpu.dot_dimension_numbers<[1], [0], [0], [1], [0, 0, 1, 1], [], []>} : vector<128x4xf32>, vector<4x8xf32>, vector<128x8xf32> -> vector<128x8xf32>
    %c0_9 = arith.constant 0 : index
    %c0_10 = arith.constant 0 : index
    %c0_11 = arith.constant 0 : index
    %15 = vector.load %arg4[%c0_9, %c0_10, %c0_11] : memref<1x128x256xf32, #tpu.memory_space<vmem>>, vector<1x128x256xf32>
    %16 = vector.shape_cast %15 : vector<1x128x256xf32> to vector<128x256xf32>
    %c0_12 = arith.constant 0 : index
    %c0_13 = arith.constant 0 : index
    %17 = vector.load %arg11[%c0_12, %c0_13] : memref<256x8xf32, #tpu.memory_space<vmem>>, vector<256x8xf32>
    %cst_14 = arith.constant dense<0.000000e+00> : vector<128x8xf32>
    %18 = tpu.matmul %16, %17, %cst_14 {dimension_numbers = #tpu.dot_dimension_numbers<[1], [0], [0], [1], [0, 0, 1, 1], [], []>} : vector<128x256xf32>, vector<256x8xf32>, vector<128x8xf32> -> vector<128x8xf32>
    %19 = vector.broadcast %10 : vector<128x1xf32> to vector<128x8xf32>
    %20 = arith.mulf %19, %18 : vector<128x8xf32>
    %21 = arith.subf %14, %20 : vector<128x8xf32>
    %c0_15 = arith.constant 0 : index
    %c0_16 = arith.constant 0 : index
    %c0_17 = arith.constant 0 : index
    %22 = vector.load %arg8[%c0_15, %c0_16, %c0_17] : memref<1x128x8xf32, #tpu.memory_space<vmem>>, vector<1x128x8xf32>
    %23 = vector.shape_cast %22 : vector<1x128x8xf32> to vector<128x8xf32>
    %24 = vector.shape_cast %21 : vector<128x8xf32> to vector<1x128x8xf32>
    tpu.vector_store %arg8[%c0_15, %c0_16, %c0_17], %24 {strides = array<i32>} : memref<1x128x8xf32, #tpu.memory_space<vmem>>, vector<1x128x8xf32>,
    %cst_18 = arith.constant dense<0.000000e+00> : vector<8xf32>
    %25 = vector.multi_reduction <add>, %21, %cst_18 [0] : vector<128x8xf32> to vector<8xf32>
    %26 = vector.shape_cast %25 : vector<8xf32> to vector<1x8xf32>
    %c0_19 = arith.constant 0 : index
    %c0_20 = arith.constant 0 : index
    %c0_21 = arith.constant 0 : index
    %c0_22 = arith.constant 0 : index
    %27 = vector.load %arg9[%c0_19, %c0_20, %c0_21, %c0_22] : memref<1x1x1x8xf32, #tpu.memory_space<vmem>>, vector<1x1x1x8xf32>
    %28 = vector.shape_cast %27 : vector<1x1x1x8xf32> to vector<1x8xf32>
    %29 = vector.shape_cast %26 : vector<1x8xf32> to vector<1x1x1x8xf32>
    tpu.vector_store %arg9[%c0_19, %c0_20, %c0_21, %c0_22], %29 {strides = array<i32>} : memref<1x1x1x8xf32, #tpu.memory_space<vmem>>, vector<1x1x1x8xf32>,
    %30 = arith.mulf %21, %21 : vector<128x8xf32>
    %cst_23 = arith.constant dense<0.000000e+00> : vector<8xf32>
    %31 = vector.multi_reduction <add>, %30, %cst_23 [0] : vector<128x8xf32> to vector<8xf32>
    %32 = vector.shape_cast %31 : vector<8xf32> to vector<1x8xf32>
    %c0_24 = arith.constant 0 : index
    %c0_25 = arith.constant 0 : index
    %c0_26 = arith.constant 0 : index
    %c0_27 = arith.constant 0 : index
    %33 = vector.load %arg10[%c0_24, %c0_25, %c0_26, %c0_27] : memref<1x1x1x8xf32, #tpu.memory_space<vmem>>, vector<1x1x1x8xf32>
    %34 = vector.shape_cast %33 : vector<1x1x1x8xf32> to vector<1x8xf32>
    %35 = vector.shape_cast %32 : vector<1x8xf32> to vector<1x1x1x8xf32>
    tpu.vector_store %arg10[%c0_24, %c0_25, %c0_26, %c0_27], %35 {strides = array<i32>} : memref<1x1x1x8xf32, #tpu.memory_space<vmem>>, vector<1x1x1x8xf32>,
    return
  }
  func.func @transform_0(%arg0: i32, %arg1: i32) -> (i32, i32, i32) {
    %c0_i32 = arith.constant 0 : i32
    %c0_i32_0 = arith.constant 0 : i32
    %c0_i32_1 = arith.constant 0 : i32
    return %arg0, %c0_i32, %c0_i32_0 : i32, i32, i32
  }
  func.func @transform_1(%arg0: i32, %arg1: i32) -> (i32, i32, i32) {
    %c0_i32 = arith.constant 0 : i32
    %c0_i32_0 = arith.constant 0 : i32
    %c0_i32_1 = arith.constant 0 : i32
    return %arg0, %c0_i32, %c0_i32_0 : i32, i32, i32
  }
  func.func @transform_2(%arg0: i32, %arg1: i32) -> (i32, i32, i32) {
    %c0_i32 = arith.constant 0 : i32
    %c0_i32_0 = arith.constant 0 : i32
    return %arg0, %arg1, %c0_i32 : i32, i32, i32
  }
  func.func @transform_3(%arg0: i32, %arg1: i32) -> (i32, i32) {
    %c0_i32 = arith.constant 0 : i32
    %c0_i32_0 = arith.constant 0 : i32
    %c0_i32_1 = arith.constant 0 : i32
    return %c0_i32, %c0_i32_0 : i32, i32
  }
  func.func @transform_4(%arg0: i32, %arg1: i32) -> (i32, i32) {
    %c0_i32 = arith.constant 0 : i32
    %c0_i32_0 = arith.constant 0 : i32
    %c0_i32_1 = arith.constant 0 : i32
    return %c0_i32, %c0_i32_0 : i32, i32
  }
  func.func @transform_5(%arg0: i32, %arg1: i32) -> (i32, i32) {
    %c0_i32 = arith.constant 0 : i32
    %c0_i32_0 = arith.constant 0 : i32
    %c0_i32_1 = arith.constant 0 : i32
    return %c0_i32, %c0_i32_0 : i32, i32
  }
  func.func @transform_6(%arg0: i32, %arg1: i32) -> (i32, i32, i32) {
    %c0_i32 = arith.constant 0 : i32
    %c0_i32_0 = arith.constant 0 : i32
    return %arg0, %arg1, %c0_i32 : i32, i32, i32
  }
  func.func @transform_7(%arg0: i32, %arg1: i32) -> (i32, i32, i32, i32) {
    %c0_i32 = arith.constant 0 : i32
    %c0_i32_0 = arith.constant 0 : i32
    %c0_i32_1 = arith.constant 0 : i32
    return %arg0, %arg1, %c0_i32, %c0_i32_0 : i32, i32, i32, i32
  }
  func.func @transform_8(%arg0: i32, %arg1: i32) -> (i32, i32, i32, i32) {
    %c0_i32 = arith.constant 0 : i32
    %c0_i32_0 = arith.constant 0 : i32
    %c0_i32_1 = arith.constant 0 : i32
    return %arg0, %arg1, %c0_i32, %c0_i32_0 : i32, i32, i32, i32
  }
}

module attributes {stable_mosaic.version = 11 : i64} {
  func.func @_bn_apply_kernel(%arg0: i32, %arg1: i32, %arg2: memref<1x128x8xf32, #tpu.memory_space<vmem>>, %arg3: memref<1x128x8xf32, #tpu.memory_space<vmem>>, %arg4: memref<1x8xf32, #tpu.memory_space<vmem>>, %arg5: memref<1x8xf32, #tpu.memory_space<vmem>>, %arg6: memref<1x128x8xf32, #tpu.memory_space<vmem>>) attributes {dimension_semantics = [#tpu.dimension_semantics<parallel>, #tpu.dimension_semantics<parallel>], iteration_bounds = array<i64: 2, 2>, scalar_prefetch = 0 : i64, scratch_operands = 0 : i64, tpu.core_type = #tpu.core_type<tc>, window_params = [{transform_indices = @transform_0, window_bounds = array<i64: 1, 128, 8>}, {transform_indices = @transform_1, window_bounds = array<i64: 1, 128, 8>}, {pipeline_mode = #tpu.pipeline_mode<synchronous>, transform_indices = @transform_2, window_bounds = array<i64: 1, 8>}, {pipeline_mode = #tpu.pipeline_mode<synchronous>, transform_indices = @transform_3, window_bounds = array<i64: 1, 8>}, {transform_indices = @transform_4, window_bounds = array<i64: 1, 128, 8>}]} {
    %c0 = arith.constant 0 : index
    %c0_0 = arith.constant 0 : index
    %c0_1 = arith.constant 0 : index
    %0 = vector.load %arg2[%c0, %c0_0, %c0_1] : memref<1x128x8xf32, #tpu.memory_space<vmem>>, vector<1x128x8xf32>
    %1 = vector.shape_cast %0 : vector<1x128x8xf32> to vector<128x8xf32>
    %c0_2 = arith.constant 0 : index
    %c0_3 = arith.constant 0 : index
    %2 = vector.load %arg4[%c0_2, %c0_3] : memref<1x8xf32, #tpu.memory_space<vmem>>, vector<1x8xf32>
    %3 = vector.broadcast %2 : vector<1x8xf32> to vector<128x8xf32>
    %4 = arith.mulf %1, %3 : vector<128x8xf32>
    %c0_4 = arith.constant 0 : index
    %c0_5 = arith.constant 0 : index
    %5 = vector.load %arg5[%c0_4, %c0_5] : memref<1x8xf32, #tpu.memory_space<vmem>>, vector<1x8xf32>
    %6 = vector.broadcast %5 : vector<1x8xf32> to vector<128x8xf32>
    %7 = arith.addf %4, %6 : vector<128x8xf32>
    %c0_6 = arith.constant 0 : index
    %c0_7 = arith.constant 0 : index
    %c0_8 = arith.constant 0 : index
    %8 = vector.load %arg3[%c0_6, %c0_7, %c0_8] : memref<1x128x8xf32, #tpu.memory_space<vmem>>, vector<1x128x8xf32>
    %9 = vector.shape_cast %8 : vector<1x128x8xf32> to vector<128x8xf32>
    %10 = arith.addf %7, %9 : vector<128x8xf32>
    %c0_9 = arith.constant 0 : index
    %c0_10 = arith.constant 0 : index
    %c0_11 = arith.constant 0 : index
    %11 = vector.load %arg6[%c0_9, %c0_10, %c0_11] : memref<1x128x8xf32, #tpu.memory_space<vmem>>, vector<1x128x8xf32>
    %12 = vector.shape_cast %11 : vector<1x128x8xf32> to vector<128x8xf32>
    %13 = vector.shape_cast %10 : vector<128x8xf32> to vector<1x128x8xf32>
    tpu.vector_store %arg6[%c0_9, %c0_10, %c0_11], %13 {strides = array<i32>} : memref<1x128x8xf32, #tpu.memory_space<vmem>>, vector<1x128x8xf32>,
    return
  }
  func.func @transform_0(%arg0: i32, %arg1: i32) -> (i32, i32, i32) {
    %c0_i32 = arith.constant 0 : i32
    %c0_i32_0 = arith.constant 0 : i32
    return %arg0, %arg1, %c0_i32 : i32, i32, i32
  }
  func.func @transform_1(%arg0: i32, %arg1: i32) -> (i32, i32, i32) {
    %c0_i32 = arith.constant 0 : i32
    %c0_i32_0 = arith.constant 0 : i32
    return %arg0, %arg1, %c0_i32 : i32, i32, i32
  }
  func.func @transform_2(%arg0: i32, %arg1: i32) -> (i32, i32) {
    %c0_i32 = arith.constant 0 : i32
    %c0_i32_0 = arith.constant 0 : i32
    %c0_i32_1 = arith.constant 0 : i32
    return %c0_i32, %c0_i32_0 : i32, i32
  }
  func.func @transform_3(%arg0: i32, %arg1: i32) -> (i32, i32) {
    %c0_i32 = arith.constant 0 : i32
    %c0_i32_0 = arith.constant 0 : i32
    %c0_i32_1 = arith.constant 0 : i32
    return %c0_i32, %c0_i32_0 : i32, i32
  }
  func.func @transform_4(%arg0: i32, %arg1: i32) -> (i32, i32, i32) {
    %c0_i32 = arith.constant 0 : i32
    %c0_i32_0 = arith.constant 0 : i32
    return %arg0, %arg1, %c0_i32 : i32, i32, i32
  }
}

</mosaic_0001>

<llo_original>
// kernel: snl_stage_forward.13
$region0: #{snl_stage_forward.13}
  #allocation0 [shape = 'u32[]', space=smem, size = 0x4, offset = 0x4, fixed_abs, tag = 'smem constant byte address 0x4 - core index']
  #allocation1 [shape = 'u32[144,128]{1,0:T(1,128)}', space=vmem, size = 0x12000, scoped, tag = 'internal scratch']
  %s0 = inlined_call_operand.vmem [shape: f32[2,256,4], index: 0, kind: input, shape index: {}, may-alias: {0,2}]
  %s1 = inlined_call_operand.vmem [shape: f32[2,256,4], index: 1, kind: input, shape index: {}, may-alias: {1,3}]
  %s2 = inlined_call_operand.vmem [shape: f32[2,256,4], index: 2, kind: input, shape index: {}, may-alias: {0,2}]
  %s3 = inlined_call_operand.vmem [shape: f32[2,256,4], index: 3, kind: input, shape index: {}, may-alias: {1,3}]
  %s4 = inlined_call_operand.vmem [shape: f32[2,256,256], index: 4, kind: output, shape index: {0}]
  %s5 = inlined_call_operand.vmem [shape: f32[2,256,1], index: 5, kind: output, shape index: {1}]
  %6 = xla_tuple %s4, %s5
  %s7 = sld [smem:[#allocation0]]
  $region95: #{snl_stage_forward.13} parent=0
    _
  %s9 = ssub.s32 1, %s7
  %s10 = scalar_select 0, %s9, %s7
  $region1: #{snl_stage_forward.13} parent=0
    #allocation2 [shape = 'u8[131072]{0}', space=vmem, size = 0x20000, scoped, tag = 'output window, operand 0']
    loop: start=0, step=1, limit=10
    $region2: #{snl_stage_forward.13} parent=1 // loop_pre_header
      _
    $region3: #{snl_stage_forward.13} parent=1 // loop_header
      %s12 = sphi 0, %s16
      %p13 = scmp.ge.s32.totalorder %s12, 10
      %s19 = sphi 0, %s38
      %s20 = sphi 0, %s34
      %s21 = sphi 0, %s30
      %s22 = sphi 0, %s19
      %s23 = sphi 0, %s20
      %s24 = sphi 0, %s21
      %s25 = sphi 0, %s22
      %s26 = sphi 0, %s23
      %s27 = sphi 0, %s24
      %s43 = sphi 0, %s45
      %s46 = sphi 0, %s43
      %s47 = sphi 0, %s46
      %s63 = sphi 0, %s47
      %s71 = sphi 0, %s73
      %s74 = sphi 0, %s71
      %s75 = sphi 0, %s74
      %s91 = sphi 0, %s75
      %s99 = sphi 0, %s101
      %s102 = sphi 0, %s99
      %s103 = sphi 0, %s102
      %s119 = sphi 0, %s103
      %s127 = sphi 0, %s129
      %s130 = sphi 0, %s127
      %s131 = sphi 0, %s130
      %s147 = sphi 0, %s131
      %s157 = sphi 0, %s159
      %s160 = sphi 0, %s157
      %s161 = sphi 0, %s160
      %s177 = sphi 0, %s161
      %s185 = sphi 0, %s187
      %s188 = sphi 0, %s185
      %s189 = sphi 0, %s188
      %s205 = sphi 0, %s189
    $region4: #{snl_stage_forward.13} parent=1 // loop_header_branch
      %15 = sbr.rel (%p13) target = $region8
    $region5: #{snl_stage_forward.13} parent=1 // loop_body
      %s17 = ssub.s32 %s12, 1
      %s18 = ssub.s32 %s12, 2
      %s28 = sadd.s32 1, %s21
      %p29 = scmp.ge.s32.totalorder %s28, 2
      %s30 = scalar_select %p29, 0, %s28
      %s31 = sadd.s32 1, %s20
      %s32 = scalar_select %p29, %s31, %s20
      %p33 = scmp.ge.s32.totalorder %s32, 2
      %s34 = scalar_select %p33, 0, %s32
      %s35 = sadd.s32 1, %s19
      %s36 = scalar_select %p33, %s35, %s19
      %p37 = scmp.ge.s32.totalorder %s36, 2
      %s38 = scalar_select %p37, 0, %s36
      %s39 = ssub.s32 %s19, %s38
      %s40 = ssub.s32 %s20, %s34
      %s41 = sor.u32 %s39, %s40
      %p42 = scmp.eq.s32.totalorder %s41, 0
      %s44 = sadd.s32 %s43, 1
      %s45 = scalar_select %p42, %s43, %s44
      %p48 = pneg %p42
      %p49 = scmp.eq.s32.totalorder %s12, 7
      %p50 = por %p48, %p49
      %p51 = scmp.ne.s32.totalorder %s43, %s46
      %p52 = scmp.eq.s32.totalorder %s12, 0
      %p53 = por %p51, %p52
      %p54 = scmp.ne.s32.totalorder %s43, %s46
      %p55 = scmp.eq.s32.totalorder %s17, 7
      %p56 = por %p54, %p55
      %p57 = scmp.ne.s32.totalorder %s46, %s47
      %p58 = scmp.eq.s32.totalorder %s17, 0
      %p59 = por %p57, %p58
      %p60 = scmp.ne.s32.totalorder %s46, %s47
      %p61 = scmp.eq.s32.totalorder %s18, 7
      %p62 = por %p60, %p61
      %p64 = scmp.ne.s32.totalorder %s47, %s63
      %p65 = scmp.eq.s32.totalorder %s18, 0
      %p66 = por %p64, %p65
      %s67 = ssub.s32 %s19, %s38
      %s68 = ssub.s32 %s20, %s34
      %s69 = sor.u32 %s67, %s68
      %p70 = scmp.eq.s32.totalorder %s69, 0
      %s72 = sadd.s32 %s71, 1
      %s73 = scalar_select %p70, %s71, %s72
      %p76 = pneg %p70
      %p77 = scmp.eq.s32.totalorder %s12, 7
      %p78 = por %p76, %p77
      %p79 = scmp.ne.s32.totalorder %s71, %s74
      %p80 = scmp.eq.s32.totalorder %s12, 0
      %p81 = por %p79, %p80
      %p82 = scmp.ne.s32.totalorder %s71, %s74
      %p83 = scmp.eq.s32.totalorder %s17, 7
      %p84 = por %p82, %p83
      %p85 = scmp.ne.s32.totalorder %s74, %s75
      %p86 = scmp.eq.s32.totalorder %s17, 0
      %p87 = por %p85, %p86
      %p88 = scmp.ne.s32.totalorder %s74, %s75
      %p89 = scmp.eq.s32.totalorder %s18, 7
      %p90 = por %p88, %p89
      %p92 = scmp.ne.s32.totalorder %s75, %s91
      %p93 = scmp.eq.s32.totalorder %s18, 0
      %p94 = por %p92, %p93
      %s95 = ssub.s32 %s19, %s38
      %s96 = ssub.s32 %s21, %s30
      %s97 = sor.u32 %s95, %s96
      %p98 = scmp.eq.s32.totalorder %s97, 0
      %s100 = sadd.s32 %s99, 1
      %s101 = scalar_select %p98, %s99, %s100
      %p104 = pneg %p98
      %p105 = scmp.eq.s32.totalorder %s12, 7
      %p106 = por %p104, %p105
      %p107 = scmp.ne.s32.totalorder %s99, %s102
      %p108 = scmp.eq.s32.totalorder %s12, 0
      %p109 = por %p107, %p108
      %p110 = scmp.ne.s32.totalorder %s99, %s102
      %p111 = scmp.eq.s32.totalorder %s17, 7
      %p112 = por %p110, %p111
      %p113 = scmp.ne.s32.totalorder %s102, %s103
      %p114 = scmp.eq.s32.totalorder %s17, 0
      %p115 = por %p113, %p114
      %p116 = scmp.ne.s32.totalorder %s102, %s103
      %p117 = scmp.eq.s32.totalorder %s18, 7
      %p118 = por %p116, %p117
      %p120 = scmp.ne.s32.totalorder %s103, %s119
      %p121 = scmp.eq.s32.totalorder %s18, 0
      %p122 = por %p120, %p121
      %s123 = ssub.s32 %s19, %s38
      %s124 = ssub.s32 %s21, %s30
      %s125 = sor.u32 %s123, %s124
      %p126 = scmp.eq.s32.totalorder %s125, 0
      %s128 = sadd.s32 %s127, 1
      %s129 = scalar_select %p126, %s127, %s128
      %p132 = pneg %p126
      %p133 = scmp.eq.s32.totalorder %s12, 7
      %p134 = por %p132, %p133
      %p135 = scmp.ne.s32.totalorder %s127, %s130
      %p136 = scmp.eq.s32.totalorder %s12, 0
      %p137 = por %p135, %p136
      %p138 = scmp.ne.s32.totalorder %s127, %s130
      %p139 = scmp.eq.s32.totalorder %s17, 7
      %p140 = por %p138, %p139
      %p141 = scmp.ne.s32.totalorder %s130, %s131
      %p142 = scmp.eq.s32.totalorder %s17, 0
      %p143 = por %p141, %p142
      %p144 = scmp.ne.s32.totalorder %s130, %s131
      %p145 = scmp.eq.s32.totalorder %s18, 7
      %p146 = por %p144, %p145
      %p148 = scmp.ne.s32.totalorder %s131, %s147
      %p149 = scmp.eq.s32.totalorder %s18, 0
      %p150 = por %p148, %p149
      %s151 = ssub.s32 %s19, %s38
      %s152 = ssub.s32 %s20, %s34
      %s153 = sor.u32 %s151, %s152
      %s154 = ssub.s32 %s21, %s30
      %s155 = sor.u32 %s153, %s154
      %p156 = scmp.eq.s32.totalorder %s155, 0
      %s158 = sadd.s32 %s157, 1
      %s159 = scalar_select %p156, %s157, %s158
      %p162 = pneg %p156
      %p163 = scmp.eq.s32.totalorder %s12, 7
      %p164 = por %p162, %p163
      %p165 = scmp.ne.s32.totalorder %s157, %s160
      %p166 = scmp.eq.s32.totalorder %s12, 0
      %p167 = por %p165, %p166
      %p168 = scmp.ne.s32.totalorder %s157, %s160
      %p169 = scmp.eq.s32.totalorder %s17, 7
      %p170 = por %p168, %p169
      %p171 = scmp.ne.s32.totalorder %s160, %s161
      %p172 = scmp.eq.s32.totalorder %s17, 0
      %p173 = por %p171, %p172
      %p174 = scmp.ne.s32.totalorder %s160, %s161
      %p175 = scmp.eq.s32.totalorder %s18, 7
      %p176 = por %p174, %p175
      %p178 = scmp.ne.s32.totalorder %s161, %s177
      %p179 = scmp.eq.s32.totalorder %s18, 0
      %p180 = por %p178, %p179
      %s181 = ssub.s32 %s19, %s38
      %s182 = ssub.s32 %s20, %s34
      %s183 = sor.u32 %s181, %s182
      %p184 = scmp.eq.s32.totalorder %s183, 0
      %s186 = sadd.s32 %s185, 1
      %s187 = scalar_select %p184, %s185, %s186
      %p190 = pneg %p184
      %p191 = scmp.eq.s32.totalorder %s12, 7
      %p192 = por %p190, %p191
      %p193 = scmp.ne.s32.totalorder %s185, %s188
      %p194 = scmp.eq.s32.totalorder %s12, 0
      %p195 = por %p193, %p194
      %p196 = scmp.ne.s32.totalorder %s185, %s188
      %p197 = scmp.eq.s32.totalorder %s17, 7
      %p198 = por %p196, %p197
      %p199 = scmp.ne.s32.totalorder %s188, %s189
      %p200 = scmp.eq.s32.totalorder %s17, 0
      %p201 = por %p199, %p200
      %p202 = scmp.ne.s32.totalorder %s188, %s189
      %p203 = scmp.eq.s32.totalorder %s18, 7
      %p204 = por %p202, %p203
      %p206 = scmp.ne.s32.totalorder %s189, %s205
      %p207 = scmp.eq.s32.totalorder %s18, 0
      %p208 = por %p206, %p207
      %p209 = scmp.le.s32.totalorder 1, %s12
      %p210 = scmp.lt.s32.totalorder %s12, 9
      %p211 = pnand %p209, %p210
      %p212 = pneg %p211
      // Predicated region
      $region9: #{snl_stage_forward.13} parent=5 // pred_check
        _
      $region10: #{snl_stage_forward.13} parent=5 // pred_check_branch
        %214 = sbr.rel (%p211) target = $region12
      $region11: #{snl_stage_forward.13} parent=5 // pred_region
        %s215 = ssub.s32 %s12, 1
      $region12: #{snl_stage_forward.13} parent=5 // pred_fallthru
        _
      %p216 = scmp.lt.s32.totalorder %s12, 8
      // Predicated region
      $region13: #{snl_stage_forward.13} parent=5 // pred_check
        %p217 = pneg %p216
      $region14: #{snl_stage_forward.13} parent=5 // pred_check_branch
        %219 = sbr.rel (%p217) target = $region16
      $region15: #{snl_stage_forward.13} parent=5 // pred_region
        // Predicated region
        $region17: #{snl_stage_forward.13} parent=15 // pred_check
          %p220 = pneg %p53
        $region18: #{snl_stage_forward.13} parent=15 // pred_check_branch
          %222 = sbr.rel (%p220) target = $region20
        $region19: #{snl_stage_forward.13} parent=15 // pred_region
          %s223 = smul.u32 16, %s20
          %p224 = scmp.lt.s32.totalorder %s19, 1
          %s225 = scalar_select %p224, %s19, 1
          %p226 = scmp.lt.s32.totalorder %s223, 31
          %s227 = scalar_select %p226, %s223, 31
          %s228 = smul.addr %s225, 32
          %s229 = sadd.s32 %s227, %s228
          %s230 = smul.addr %s229, 8
          %s231 = scalar_lea.vmem %s0, %s230
          %s232 = smul.u32 16, %s20
        $region20: #{snl_stage_forward.13} parent=15 // pred_fallthru
          _
        // Predicated region
        $region21: #{snl_stage_forward.13} parent=15 // pred_check
          %p233 = pneg %p81
        $region22: #{snl_stage_forward.13} parent=15 // pred_check_branch
          %235 = sbr.rel (%p233) target = $region24
        $region23: #{snl_stage_forward.13} parent=15 // pred_region
          %s236 = smul.u32 16, %s20
          %p237 = scmp.lt.s32.totalorder %s19, 1
          %s238 = scalar_select %p237, %s19, 1
          %p239 = scmp.lt.s32.totalorder %s236, 31
          %s240 = scalar_select %p239, %s236, 31
          %s241 = smul.addr %s238, 32
          %s242 = sadd.s32 %s240, %s241
          %s243 = smul.addr %s242, 8
          %s244 = scalar_lea.vmem %s1, %s243
          %s245 = smul.u32 16, %s20
        $region24: #{snl_stage_forward.13} parent=15 // pred_fallthru
          _
        // Predicated region
        $region25: #{snl_stage_forward.13} parent=15 // pred_check
          %p246 = pneg %p109
        $region26: #{snl_stage_forward.13} parent=15 // pred_check_branch
          %248 = sbr.rel (%p246) target = $region28
        $region27: #{snl_stage_forward.13} parent=15 // pred_region
          %s249 = smul.u32 16, %s21
          %p250 = scmp.lt.s32.totalorder %s19, 1
          %s251 = scalar_select %p250, %s19, 1
          %p252 = scmp.lt.s32.totalorder %s249, 31
          %s253 = scalar_select %p252, %s249, 31
          %s254 = smul.addr %s251, 32
          %s255 = sadd.s32 %s253, %s254
          %s256 = smul.addr %s255, 8
          %s257 = scalar_lea.vmem %s2, %s256
          %s258 = smul.u32 16, %s21
        $region28: #{snl_stage_forward.13} parent=15 // pred_fallthru
          _
        // Predicated region
        $region29: #{snl_stage_forward.13} parent=15 // pred_check
          %p259 = pneg %p137
        $region30: #{snl_stage_forward.13} parent=15 // pred_check_branch
          %261 = sbr.rel (%p259) target = $region32
        $region31: #{snl_stage_forward.13} parent=15 // pred_region
          %s262 = smul.u32 16, %s21
          %p263 = scmp.lt.s32.totalorder %s19, 1
          %s264 = scalar_select %p263, %s19, 1
          %p265 = scmp.lt.s32.totalorder %s262, 31
          %s266 = scalar_select %p265, %s262, 31
          %s267 = smul.addr %s264, 32
          %s268 = sadd.s32 %s266, %s267
          %s269 = smul.addr %s268, 8
          %s270 = scalar_lea.vmem %s3, %s269
          %s271 = smul.u32 16, %s21
        $region32: #{snl_stage_forward.13} parent=15 // pred_fallthru
          _
      $region16: #{snl_stage_forward.13} parent=5 // pred_fallthru
        _
      %p272 = scmp.le.s32.totalorder 1, %s12
      %p273 = scmp.lt.s32.totalorder %s12, 9
      %p274 = pnand %p272, %p273
      %p275 = pneg %p274
      // Predicated region
      $region33: #{snl_stage_forward.13} parent=5 // pred_check
        _
      $region34: #{snl_stage_forward.13} parent=5 // pred_check_branch
        %277 = sbr.rel (%p274) target = $region36
      $region35: #{snl_stage_forward.13} parent=5 // pred_region
        %s278 = ssub.s32 %s12, 1
        %s279 = smul.u32 16, %s23
        %p280 = scmp.lt.s32.totalorder %s22, 1
        %s281 = scalar_select %p280, %s22, 1
        %p282 = scmp.lt.s32.totalorder %s279, 31
        %s283 = scalar_select %p282, %s279, 31
        %s284 = smul.addr %s281, 32
        %s285 = sadd.s32 %s283, %s284
        %s286 = smul.addr %s285, 8
        %s287 = scalar_lea.vmem %s0, %s286
        %p288 = pneg %p59
        %p289 = pneg %p56
        %s290 = smul.u32 16, %s23
        %p291 = scmp.lt.s32.totalorder %s22, 1
        %s292 = scalar_select %p291, %s22, 1
        %p293 = scmp.lt.s32.totalorder %s290, 31
        %s294 = scalar_select %p293, %s290, 31
        %s295 = smul.addr %s292, 32
        %s296 = sadd.s32 %s294, %s295
        %s297 = smul.addr %s296, 8
        %s298 = scalar_lea.vmem %s1, %s297
        %p299 = pneg %p87
        %p300 = pneg %p84
        %s301 = smul.u32 16, %s24
        %p302 = scmp.lt.s32.totalorder %s22, 1
        %s303 = scalar_select %p302, %s22, 1
        %p304 = scmp.lt.s32.totalorder %s301, 31
        %s305 = scalar_select %p304, %s301, 31
        %s306 = smul.addr %s303, 32
        %s307 = sadd.s32 %s305, %s306
        %s308 = smul.addr %s307, 8
        %s309 = scalar_lea.vmem %s2, %s308
        %p310 = pneg %p115
        %p311 = pneg %p112
        %s312 = smul.u32 16, %s24
        %p313 = scmp.lt.s32.totalorder %s22, 1
        %s314 = scalar_select %p313, %s22, 1
        %p315 = scmp.lt.s32.totalorder %s312, 31
        %s316 = scalar_select %p315, %s312, 31
        %s317 = smul.addr %s314, 32
        %s318 = sadd.s32 %s316, %s317
        %s319 = smul.addr %s318, 8
        %s320 = scalar_lea.vmem %s3, %s319
        %p321 = pneg %p143
        %p322 = pneg %p140
        %p323 = pneg %p173
        %p324 = pneg %p170
        %s325 = sand.u32 %s160, 1
        %s326 = sand.u32 %s160, 1
        %s327 = smul.addr %s326, 128
        %s328 = scalar_lea.vmem [#allocation2], %s327
        %p329 = pneg %p201
        %p330 = pneg %p198
        %s331 = smul.u32 16, %s23
        %p332 = scmp.lt.s32.totalorder %s22, 1
        %s333 = scalar_select %p332, %s22, 1
        %p334 = scmp.lt.s32.totalorder %s331, 31
        %s335 = scalar_select %p334, %s331, 31
        %s336 = smul.addr %s333, 32
        %s337 = sadd.s32 %s335, %s336
        %s338 = smul.addr %s337, 8
        %s339 = scalar_lea.vmem %s5, %s338
        %s340 = smul.u32 16, %s23
        %p341 = scmp.lt.s32.totalorder %s22, 1
        %s342 = scalar_select %p341, %s22, 1
        %p343 = scmp.lt.s32.totalorder %s340, 31
        %s344 = scalar_select %p343, %s340, 31
        %s345 = smul.addr %s342, 32
        %s346 = sadd.s32 %s344, %s345
        %s347 = smul.addr %s346, 8
        %s348 = scalar_lea.vmem %s0, %s347
        %s349 = smul.u32 16, %s23
        %s350 = smul.u32 16, %s23
        %p351 = scmp.lt.s32.totalorder %s22, 1
        %s352 = scalar_select %p351, %s22, 1
        %p353 = scmp.lt.s32.totalorder %s350, 31
        %s354 = scalar_select %p353, %s350, 31
        %s355 = smul.addr %s352, 32
        %s356 = sadd.s32 %s354, %s355
        %s357 = smul.addr %s356, 8
        %s358 = scalar_lea.vmem %s1, %s357
        %s359 = smul.u32 16, %s23
        %s360 = smul.u32 16, %s24
        %p361 = scmp.lt.s32.totalorder %s22, 1
        %s362 = scalar_select %p361, %s22, 1
        %p363 = scmp.lt.s32.totalorder %s360, 31
        %s364 = scalar_select %p363, %s360, 31
        %s365 = smul.addr %s362, 32
        %s366 = sadd.s32 %s364, %s365
        %s367 = smul.addr %s366, 8
        %s368 = scalar_lea.vmem %s2, %s367
        %s369 = smul.u32 16, %s24
        %s370 = smul.u32 16, %s24
        %p371 = scmp.lt.s32.totalorder %s22, 1
        %s372 = scalar_select %p371, %s22, 1
        %p373 = scmp.lt.s32.totalorder %s370, 31
        %s374 = scalar_select %p373, %s370, 31
        %s375 = smul.addr %s372, 32
        %s376 = sadd.s32 %s374, %s375
        %s377 = smul.addr %s376, 8
        %s378 = scalar_lea.vmem %s3, %s377
        %s379 = smul.u32 16, %s24
        %s380 = smul.u32 16, %s23
        %s381 = smul.u32 16, %s23
        %p382 = scmp.lt.s32.totalorder %s22, 1
        %s383 = scalar_select %p382, %s22, 1
        %p384 = scmp.lt.s32.totalorder %s381, 31
        %s385 = scalar_select %p384, %s381, 31
        %s386 = smul.addr %s383, 32
        %s387 = sadd.s32 %s385, %s386
        %s388 = smul.addr %s387, 8
        %s389 = scalar_lea.vmem %s5, %s388
        %s390 = smul.u32 16, %s23
        %v391 = vld [vmem:[%s348] sm:$0xff]
        %v392 = vld [vmem:[%s348 + $0x8] sm:$0xff]
        %v393 = vld [vmem:[%s348 + $0x10] sm:$0xff]
        %v394 = vld [vmem:[%s348 + $0x18] sm:$0xff]
        %v395 = vld [vmem:[%s348 + $0x20] sm:$0xff]
        %v396 = vld [vmem:[%s348 + $0x28] sm:$0xff]
        %v397 = vld [vmem:[%s348 + $0x30] sm:$0xff]
        %v398 = vld [vmem:[%s348 + $0x38] sm:$0xff]
        %v399 = vld [vmem:[%s348 + $0x40] sm:$0xff]
        %v400 = vld [vmem:[%s348 + $0x48] sm:$0xff]
        %v401 = vld [vmem:[%s348 + $0x50] sm:$0xff]
        %v402 = vld [vmem:[%s348 + $0x58] sm:$0xff]
        %v403 = vld [vmem:[%s348 + $0x60] sm:$0xff]
        %v404 = vld [vmem:[%s348 + $0x68] sm:$0xff]
        %v405 = vld [vmem:[%s348 + $0x70] sm:$0xff]
        %v406 = vld [vmem:[%s348 + $0x78] sm:$0xff]
        %v407 = vld [vmem:[%s378] sm:$0xff]
        %v408 = vld [vmem:[%s378 + $0x8] sm:$0xff]
        %v409 = vld [vmem:[%s378 + $0x10] sm:$0xff]
        %v410 = vld [vmem:[%s378 + $0x18] sm:$0xff]
        %v411 = vld [vmem:[%s378 + $0x20] sm:$0xff]
        %v412 = vld [vmem:[%s378 + $0x28] sm:$0xff]
        %v413 = vld [vmem:[%s378 + $0x30] sm:$0xff]
        %v414 = vld [vmem:[%s378 + $0x38] sm:$0xff]
        %v415 = vld [vmem:[%s378 + $0x40] sm:$0xff]
        %v416 = vld [vmem:[%s378 + $0x48] sm:$0xff]
        %v417 = vld [vmem:[%s378 + $0x50] sm:$0xff]
        %v418 = vld [vmem:[%s378 + $0x58] sm:$0xff]
        %v419 = vld [vmem:[%s378 + $0x60] sm:$0xff]
        %v420 = vld [vmem:[%s378 + $0x68] sm:$0xff]
        %v421 = vld [vmem:[%s378 + $0x70] sm:$0xff]
        %v422 = vld [vmem:[%s378 + $0x78] sm:$0xff]
        %v423 = vld [vmem:[%s358] sm:$0xff]
        %v424 = vld [vmem:[%s358 + $0x8] sm:$0xff]
        %v425 = vld [vmem:[%s358 + $0x10] sm:$0xff]
        %v426 = vld [vmem:[%s358 + $0x18] sm:$0xff]
        %v427 = vld [vmem:[%s358 + $0x20] sm:$0xff]
        %v428 = vld [vmem:[%s358 + $0x28] sm:$0xff]
        %v429 = vld [vmem:[%s358 + $0x30] sm:$0xff]
        %v430 = vld [vmem:[%s358 + $0x38] sm:$0xff]
        %v431 = vld [vmem:[%s358 + $0x40] sm:$0xff]
        %v432 = vld [vmem:[%s358 + $0x48] sm:$0xff]
        %v433 = vld [vmem:[%s358 + $0x50] sm:$0xff]
        %v434 = vld [vmem:[%s358 + $0x58] sm:$0xff]
        %v435 = vld [vmem:[%s358 + $0x60] sm:$0xff]
        %v436 = vld [vmem:[%s358 + $0x68] sm:$0xff]
        %v437 = vld [vmem:[%s358 + $0x70] sm:$0xff]
        %v438 = vld [vmem:[%s358 + $0x78] sm:$0xff]
        %v439 = vld [vmem:[%s368] sm:$0xff]
        %v440 = vld [vmem:[%s368 + $0x8] sm:$0xff]
        %v441 = vld [vmem:[%s368 + $0x10] sm:$0xff]
        %v442 = vld [vmem:[%s368 + $0x18] sm:$0xff]
        %v443 = vld [vmem:[%s368 + $0x20] sm:$0xff]
        %v444 = vld [vmem:[%s368 + $0x28] sm:$0xff]
        %v445 = vld [vmem:[%s368 + $0x30] sm:$0xff]
        %v446 = vld [vmem:[%s368 + $0x38] sm:$0xff]
        %v447 = vld [vmem:[%s368 + $0x40] sm:$0xff]
        %v448 = vld [vmem:[%s368 + $0x48] sm:$0xff]
        %v449 = vld [vmem:[%s368 + $0x50] sm:$0xff]
        %v450 = vld [vmem:[%s368 + $0x58] sm:$0xff]
        %v451 = vld [vmem:[%s368 + $0x60] sm:$0xff]
        %v452 = vld [vmem:[%s368 + $0x68] sm:$0xff]
        %v453 = vld [vmem:[%s368 + $0x70] sm:$0xff]
        %v454 = vld [vmem:[%s368 + $0x78] sm:$0xff]
        %vm455 = vcmask 31744
        %v457 = vsel %vm455, %v423, 0
        %v460 = vsel %vm455, %v424, 0
        %v463 = vsel %vm455, %v425, 0
        %v466 = vsel %vm455, %v426, 0
        %v469 = vsel %vm455, %v427, 0
        %v472 = vsel %vm455, %v428, 0
        %v475 = vsel %vm455, %v429, 0
        %v478 = vsel %vm455, %v430, 0
        %v481 = vsel %vm455, %v431, 0
        %v484 = vsel %vm455, %v432, 0
        %v487 = vsel %vm455, %v433, 0
        %v490 = vsel %vm455, %v434, 0
        %v493 = vsel %vm455, %v435, 0
        %v496 = vsel %vm455, %v436, 0
        %v499 = vsel %vm455, %v437, 0
        %v502 = vsel %vm455, %v438, 0
        %v505 = vsel %vm455, %v439, 0
        %v508 = vsel %vm455, %v440, 0
        %v511 = vsel %vm455, %v441, 0
        %v514 = vsel %vm455, %v442, 0
        %v517 = vsel %vm455, %v443, 0
        %v520 = vsel %vm455, %v444, 0
        %v523 = vsel %vm455, %v445, 0
        %v526 = vsel %vm455, %v446, 0
        %v529 = vsel %vm455, %v447, 0
        %v532 = vsel %vm455, %v448, 0
        %v535 = vsel %vm455, %v449, 0
        %v538 = vsel %vm455, %v450, 0
        %v541 = vsel %vm455, %v451, 0
        %v544 = vsel %vm455, %v452, 0
        %v547 = vsel %vm455, %v453, 0
        %v550 = vsel %vm455, %v454, 0
        %552 = vmatprep.subr.mxu0 0.0
        %553 = vmatpush1.xpose.msra.mxu0 %v505
        %554 = vmatprep.subr.mxu0 0.0
        %555 = vmatpush1.xpose.msra.mxu0 %v508
        %556 = vmatprep.subr.mxu0 0.0
        %557 = vmatpush1.xpose.msra.mxu0 %v511
        %558 = vmatprep.subr.mxu0 0.0
        %559 = vmatpush1.xpose.msra.mxu0 %v514
        %560 = vmatprep.subr.mxu0 0.0
        %561 = vmatpush1.xpose.msra.mxu0 %v517
        %562 = vmatprep.subr.mxu0 0.0
        %563 = vmatpush1.xpose.msra.mxu0 %v520
        %564 = vmatprep.subr.mxu0 0.0
        %565 = vmatpush1.xpose.msra.mxu0 %v523
        %566 = vmatprep.subr.mxu0 0.0
        %567 = vmatpush1.xpose.msra.mxu0 %v526
        %568 = vmatprep.subr.mxu0 0.0
        %569 = vmatpush1.xpose.msra.mxu0 %v529
        %570 = vmatprep.subr.mxu0 0.0
        %571 = vmatpush1.xpose.msra.mxu0 %v532
        %572 = vmatprep.subr.mxu0 0.0
        %573 = vmatpush1.xpose.msra.mxu0 %v535
        %574 = vmatprep.subr.mxu0 0.0
        %575 = vmatpush1.xpose.msra.mxu0 %v538
        %576 = vmatprep.subr.mxu0 0.0
        %577 = vmatpush1.xpose.msra.mxu0 %v541
        %578 = vmatprep.subr.mxu0 0.0
        %579 = vmatpush1.xpose.msra.mxu0 %v544
        %580 = vmatprep.subr.mxu0 0.0
        %581 = vmatpush1.xpose.msra.mxu0 %v547
        %582 = vmatprep.subr.mxu0 0.0
        %583 = vmatpush1.xpose.msra.mxu0 %v550
        %584 = vmatprep.subr.mxu0 0.0
        %585 = vmatpush1.xpose.msra.mxu0 0.0
        %586 = vmatprep.subr.mxu0 0.0
        %587 = vmatpush1.xpose.msra.mxu0 0.0
        %588 = vmatprep.subr.mxu0 0.0
        %589 = vmatpush1.xpose.msra.mxu0 0.0
        %590 = vmatprep.subr.mxu0 0.0
        %591 = vmatpush1.xpose.msra.mxu0 0.0
        %592 = vmatprep.subr.mxu0 0.0
        %593 = vmatpush1.xpose.msra.mxu0 0.0
        %594 = vmatprep.subr.mxu0 0.0
        %595 = vmatpush1.xpose.msra.mxu0 0.0
        %596 = vmatprep.subr.mxu0 0.0
        %597 = vmatpush1.xpose.msra.mxu0 0.0
        %598 = vmatprep.subr.mxu0 0.0
        %599 = vmatpush1.xpose.msra.mxu0 0.0
        %600 = vmatprep.subr.mxu0 0.0
        %601 = vmatpush1.xpose.msra.mxu0 0.0
        %602 = vmatprep.subr.mxu0 0.0
        %603 = vmatpush1.xpose.msra.mxu0 0.0
        %604 = vmatprep.subr.mxu0 0.0
        %605 = vmatpush1.xpose.msra.mxu0 0.0
        %606 = vmatprep.subr.mxu0 0.0
        %607 = vmatpush1.xpose.msra.mxu0 0.0
        %608 = vmatprep.subr.mxu0 0.0
        %609 = vmatpush1.xpose.msra.mxu0 0.0
        %610 = vmatprep.subr.mxu0 0.0
        %611 = vmatpush1.xpose.msra.mxu0 0.0
        %612 = vmatprep.subr.mxu0 0.0
        %613 = vmatpush1.xpose.msra.mxu0 0.0
        %614 = vmatprep.subr.mxu0 0.0
        %615 = vmatpush1.xpose.msra.mxu0 0.0
        %616 = vmatprep.mubr.f32.mxu0 0.0
        %617 = vmatmul.mubr.f32.gmra.mrb[0].mxu0 %v457
        %v618 = vpop.f32.mrb[0].mxu0
        %v619 = vadd.f32 0.0, %v618
        %v620 = vpop.f32.mrb[0].mxu0
        %621 = vmatprep.mubr.f32.mxu0 0.0
        %622 = vmatmul.mubr.f32.gmra.mrb[0].mxu0 %v460
        %v623 = vpop.f32.mrb[0].mxu0
        %v624 = vadd.f32 0.0, %v623
        %v625 = vpop.f32.mrb[0].mxu0
        %626 = vmatprep.mubr.f32.mxu0 0.0
        %627 = vmatmul.mubr.f32.gmra.mrb[0].mxu0 %v463
        %v628 = vpop.f32.mrb[0].mxu0
        %v629 = vadd.f32 0.0, %v628
        %v630 = vpop.f32.mrb[0].mxu0
        %631 = vmatprep.mubr.f32.mxu0 0.0
        %632 = vmatmul.mubr.f32.gmra.mrb[0].mxu0 %v466
        %v633 = vpop.f32.mrb[0].mxu0
        %v634 = vadd.f32 0.0, %v633
        %v635 = vpop.f32.mrb[0].mxu0
        %636 = vmatprep.mubr.f32.mxu0 0.0
        %637 = vmatmul.mubr.f32.gmra.mrb[0].mxu0 %v469
        %v638 = vpop.f32.mrb[0].mxu0
        %v639 = vadd.f32 0.0, %v638
        %v640 = vpop.f32.mrb[0].mxu0
        %641 = vmatprep.mubr.f32.mxu0 0.0
        %642 = vmatmul.mubr.f32.gmra.mrb[0].mxu0 %v472
        %v643 = vpop.f32.mrb[0].mxu0
        %v644 = vadd.f32 0.0, %v643
        %v645 = vpop.f32.mrb[0].mxu0
        %646 = vmatprep.mubr.f32.mxu0 0.0
        %647 = vmatmul.mubr.f32.gmra.mrb[0].mxu0 %v475
        %v648 = vpop.f32.mrb[0].mxu0
        %v649 = vadd.f32 0.0, %v648
        %v650 = vpop.f32.mrb[0].mxu0
        %651 = vmatprep.mubr.f32.mxu0 0.0
        %652 = vmatmul.mubr.f32.gmra.mrb[0].mxu0 %v478
        %v653 = vpop.f32.mrb[0].mxu0
        %v654 = vadd.f32 0.0, %v653
        %v655 = vpop.f32.mrb[0].mxu0
        %656 = vmatprep.mubr.f32.mxu0 0.0
        %657 = vmatmul.mubr.f32.gmra.mrb[0].mxu0 %v481
        %v658 = vpop.f32.mrb[0].mxu0
        %v659 = vadd.f32 0.0, %v658
        %v660 = vpop.f32.mrb[0].mxu0
        %661 = vmatprep.mubr.f32.mxu0 0.0
        %662 = vmatmul.mubr.f32.gmra.mrb[0].mxu0 %v484
        %v663 = vpop.f32.mrb[0].mxu0
        %v664 = vadd.f32 0.0, %v663
        %v665 = vpop.f32.mrb[0].mxu0
        %666 = vmatprep.mubr.f32.mxu0 0.0
        %667 = vmatmul.mubr.f32.gmra.mrb[0].mxu0 %v487
        %v668 = vpop.f32.mrb[0].mxu0
        %v669 = vadd.f32 0.0, %v668
        %v670 = vpop.f32.mrb[0].mxu0
        %671 = vmatprep.mubr.f32.mxu0 0.0
        %672 = vmatmul.mubr.f32.gmra.mrb[0].mxu0 %v490
        %v673 = vpop.f32.mrb[0].mxu0
        %v674 = vadd.f32 0.0, %v673
        %v675 = vpop.f32.mrb[0].mxu0
        %676 = vmatprep.mubr.f32.mxu0 0.0
        %677 = vmatmul.mubr.f32.gmra.mrb[0].mxu0 %v493
        %v678 = vpop.f32.mrb[0].mxu0
        %v679 = vadd.f32 0.0, %v678
        %v680 = vpop.f32.mrb[0].mxu0
        %681 = vmatprep.mubr.f32.mxu0 0.0
        %682 = vmatmul.mubr.f32.gmra.mrb[0].mxu0 %v496
        %v683 = vpop.f32.mrb[0].mxu0
        %v684 = vadd.f32 0.0, %v683
        %v685 = vpop.f32.mrb[0].mxu0
        %686 = vmatprep.mubr.f32.mxu0 0.0
        %687 = vmatmul.mubr.f32.gmra.mrb[0].mxu0 %v499
        %v688 = vpop.f32.mrb[0].mxu0
        %v689 = vadd.f32 0.0, %v688
        %v690 = vpop.f32.mrb[0].mxu0
        %691 = vmatprep.mubr.f32.mxu0 0.0
        %692 = vmatmul.mubr.f32.gmra.mrb[0].mxu0 %v502
        %v693 = vpop.f32.mrb[0].mxu0
        %v694 = vadd.f32 0.0, %v693
        %v695 = vpop.f32.mrb[0].mxu0
        %696 = vdwg.mxu0
        %v698 = vsel %vm455, %v391, 0
        %v701 = vsel %vm455, %v392, 0
        %v704 = vsel %vm455, %v393, 0
        %v707 = vsel %vm455, %v394, 0
        %v710 = vsel %vm455, %v395, 0
        %v713 = vsel %vm455, %v396, 0
        %v716 = vsel %vm455, %v397, 0
        %v719 = vsel %vm455, %v398, 0
        %v722 = vsel %vm455, %v399, 0
        %v725 = vsel %vm455, %v400, 0
        %v728 = vsel %vm455, %v401, 0
        %v731 = vsel %vm455, %v402, 0
        %v734 = vsel %vm455, %v403, 0
        %v737 = vsel %vm455, %v404, 0
        %v740 = vsel %vm455, %v405, 0
        %v743 = vsel %vm455, %v406, 0
        %v746 = vsel %vm455, %v407, 0
        %v749 = vsel %vm455, %v408, 0
        %v752 = vsel %vm455, %v409, 0
        %v755 = vsel %vm455, %v410, 0
        %v758 = vsel %vm455, %v411, 0
        %v761 = vsel %vm455, %v412, 0
        %v764 = vsel %vm455, %v413, 0
        %v767 = vsel %vm455, %v414, 0
        %v770 = vsel %vm455, %v415, 0
        %v773 = vsel %vm455, %v416, 0
        %v776 = vsel %vm455, %v417, 0
        %v779 = vsel %vm455, %v418, 0
        %v782 = vsel %vm455, %v419, 0
        %v785 = vsel %vm455, %v420, 0
        %v788 = vsel %vm455, %v421, 0
        %v791 = vsel %vm455, %v422, 0
        %793 = vmatprep.subr.mxu0 0.0
        %794 = vmatpush1.xpose.msra.mxu0 %v746
        %795 = vmatprep.subr.mxu0 0.0
        %796 = vmatpush1.xpose.msra.mxu0 %v749
        %797 = vmatprep.subr.mxu0 0.0
        %798 = vmatpush1.xpose.msra.mxu0 %v752
        %799 = vmatprep.subr.mxu0 0.0
        %800 = vmatpush1.xpose.msra.mxu0 %v755
        %801 = vmatprep.subr.mxu0 0.0
        %802 = vmatpush1.xpose.msra.mxu0 %v758
        %803 = vmatprep.subr.mxu0 0.0
        %804 = vmatpush1.xpose.msra.mxu0 %v761
        %805 = vmatprep.subr.mxu0 0.0
        %806 = vmatpush1.xpose.msra.mxu0 %v764
        %807 = vmatprep.subr.mxu0 0.0
        %808 = vmatpush1.xpose.msra.mxu0 %v767
        %809 = vmatprep.subr.mxu0 0.0
        %810 = vmatpush1.xpose.msra.mxu0 %v770
        %811 = vmatprep.subr.mxu0 0.0
        %812 = vmatpush1.xpose.msra.mxu0 %v773
        %813 = vmatprep.subr.mxu0 0.0
        %814 = vmatpush1.xpose.msra.mxu0 %v776
        %815 = vmatprep.subr.mxu0 0.0
        %816 = vmatpush1.xpose.msra.mxu0 %v779
        %817 = vmatprep.subr.mxu0 0.0
        %818 = vmatpush1.xpose.msra.mxu0 %v782
        %819 = vmatprep.subr.mxu0 0.0
        %820 = vmatpush1.xpose.msra.mxu0 %v785
        %821 = vmatprep.subr.mxu0 0.0
        %822 = vmatpush1.xpose.msra.mxu0 %v788
        %823 = vmatprep.subr.mxu0 0.0
        %824 = vmatpush1.xpose.msra.mxu0 %v791
        %825 = vmatprep.subr.mxu0 0.0
        %826 = vmatpush1.xpose.msra.mxu0 0.0
        %827 = vmatprep.subr.mxu0 0.0
        %828 = vmatpush1.xpose.msra.mxu0 0.0
        %829 = vmatprep.subr.mxu0 0.0
        %830 = vmatpush1.xpose.msra.mxu0 0.0
        %831 = vmatprep.subr.mxu0 0.0
        %832 = vmatpush1.xpose.msra.mxu0 0.0
        %833 = vmatprep.subr.mxu0 0.0
        %834 = vmatpush1.xpose.msra.mxu0 0.0
        %835 = vmatprep.subr.mxu0 0.0
        %836 = vmatpush1.xpose.msra.mxu0 0.0
        %837 = vmatprep.subr.mxu0 0.0
        %838 = vmatpush1.xpose.msra.mxu0 0.0
        %839 = vmatprep.subr.mxu0 0.0
        %840 = vmatpush1.xpose.msra.mxu0 0.0
        %841 = vmatprep.subr.mxu0 0.0
        %842 = vmatpush1.xpose.msra.mxu0 0.0
        %843 = vmatprep.subr.mxu0 0.0
        %844 = vmatpush1.xpose.msra.mxu0 0.0
        %845 = vmatprep.subr.mxu0 0.0
        %846 = vmatpush1.xpose.msra.mxu0 0.0
        %847 = vmatprep.subr.mxu0 0.0
        %848 = vmatpush1.xpose.msra.mxu0 0.0
        %849 = vmatprep.subr.mxu0 0.0
        %850 = vmatpush1.xpose.msra.mxu0 0.0
        %851 = vmatprep.subr.mxu0 0.0
        %852 = vmatpush1.xpose.msra.mxu0 0.0
        %853 = vmatprep.subr.mxu0 0.0
        %854 = vmatpush1.xpose.msra.mxu0 0.0
        %855 = vmatprep.subr.mxu0 0.0
        %856 = vmatpush1.xpose.msra.mxu0 0.0
        %857 = vmatprep.mubr.f32.mxu0 0.0
        %858 = vmatmul.mubr.f32.gmra.mrb[0].mxu0 %v698
        %v859 = vpop.f32.mrb[0].mxu0
        %v860 = vadd.f32 %v619, %v859
        %v861 = vpop.f32.mrb[0].mxu0
        %862 = vmatprep.mubr.f32.mxu0 0.0
        %863 = vmatmul.mubr.f32.gmra.mrb[0].mxu0 %v701
        %v864 = vpop.f32.mrb[0].mxu0
        %v865 = vadd.f32 %v624, %v864
        %v866 = vpop.f32.mrb[0].mxu0
        %867 = vmatprep.mubr.f32.mxu0 0.0
        %868 = vmatmul.mubr.f32.gmra.mrb[0].mxu0 %v704
        %v869 = vpop.f32.mrb[0].mxu0
        %v870 = vadd.f32 %v629, %v869
        %v871 = vpop.f32.mrb[0].mxu0
        %872 = vmatprep.mubr.f32.mxu0 0.0
        %873 = vmatmul.mubr.f32.gmra.mrb[0].mxu0 %v707
        %v874 = vpop.f32.mrb[0].mxu0
        %v875 = vadd.f32 %v634, %v874
        %v876 = vpop.f32.mrb[0].mxu0
        %877 = vmatprep.mubr.f32.mxu0 0.0
        %878 = vmatmul.mubr.f32.gmra.mrb[0].mxu0 %v710
        %v879 = vpop.f32.mrb[0].mxu0
        %v880 = vadd.f32 %v639, %v879
        %v881 = vpop.f32.mrb[0].mxu0
        %882 = vmatprep.mubr.f32.mxu0 0.0
        %883 = vmatmul.mubr.f32.gmra.mrb[0].mxu0 %v713
        %v884 = vpop.f32.mrb[0].mxu0
        %v885 = vadd.f32 %v644, %v884
        %v886 = vpop.f32.mrb[0].mxu0
        %887 = vmatprep.mubr.f32.mxu0 0.0
        %888 = vmatmul.mubr.f32.gmra.mrb[0].mxu0 %v716
        %v889 = vpop.f32.mrb[0].mxu0
        %v890 = vadd.f32 %v649, %v889
        %v891 = vpop.f32.mrb[0].mxu0
        %892 = vmatprep.mubr.f32.mxu0 0.0
        %893 = vmatmul.mubr.f32.gmra.mrb[0].mxu0 %v719
        %v894 = vpop.f32.mrb[0].mxu0
        %v895 = vadd.f32 %v654, %v894
        %v896 = vpop.f32.mrb[0].mxu0
        %897 = vmatprep.mubr.f32.mxu0 0.0
        %898 = vmatmul.mubr.f32.gmra.mrb[0].mxu0 %v722
        %v899 = vpop.f32.mrb[0].mxu0
        %v900 = vadd.f32 %v659, %v899
        %v901 = vpop.f32.mrb[0].mxu0
        %902 = vmatprep.mubr.f32.mxu0 0.0
        %903 = vmatmul.mubr.f32.gmra.mrb[0].mxu0 %v725
        %v904 = vpop.f32.mrb[0].mxu0
        %v905 = vadd.f32 %v664, %v904
        %v906 = vpop.f32.mrb[0].mxu0
        %907 = vmatprep.mubr.f32.mxu0 0.0
        %908 = vmatmul.mubr.f32.gmra.mrb[0].mxu0 %v728
        %v909 = vpop.f32.mrb[0].mxu0
        %v910 = vadd.f32 %v669, %v909
        %v911 = vpop.f32.mrb[0].mxu0
        %912 = vmatprep.mubr.f32.mxu0 0.0
        %913 = vmatmul.mubr.f32.gmra.mrb[0].mxu0 %v731
        %v914 = vpop.f32.mrb[0].mxu0
        %v915 = vadd.f32 %v674, %v914
        %v916 = vpop.f32.mrb[0].mxu0
        %917 = vmatprep.mubr.f32.mxu0 0.0
        %918 = vmatmul.mubr.f32.gmra.mrb[0].mxu0 %v734
        %v919 = vpop.f32.mrb[0].mxu0
        %v920 = vadd.f32 %v679, %v919
        %v921 = vpop.f32.mrb[0].mxu0
        %922 = vmatprep.mubr.f32.mxu0 0.0
        %923 = vmatmul.mubr.f32.gmra.mrb[0].mxu0 %v737
        %v924 = vpop.f32.mrb[0].mxu0
        %v925 = vadd.f32 %v684, %v924
        %v926 = vpop.f32.mrb[0].mxu0
        %927 = vmatprep.mubr.f32.mxu0 0.0
        %928 = vmatmul.mubr.f32.gmra.mrb[0].mxu0 %v740
        %v929 = vpop.f32.mrb[0].mxu0
        %v930 = vadd.f32 %v689, %v929
        %v931 = vpop.f32.mrb[0].mxu0
        %932 = vmatprep.mubr.f32.mxu0 0.0
        %933 = vmatmul.mubr.f32.gmra.mrb[0].mxu0 %v743
        %v934 = vpop.f32.mrb[0].mxu0
        %v935 = vadd.f32 %v694, %v934
        %v936 = vpop.f32.mrb[0].mxu0
        %937 = vdwg.mxu0
        %v938 = vmul.f32 %v860, 0.5
        %v939 = vmul.f32 %v865, 0.5
        %v940 = vmul.f32 %v870, 0.5
        %v941 = vmul.f32 %v875, 0.5
        %v942 = vmul.f32 %v880, 0.5
        %v943 = vmul.f32 %v885, 0.5
        %v944 = vmul.f32 %v890, 0.5
        %v945 = vmul.f32 %v895, 0.5
        %v946 = vmul.f32 %v900, 0.5
        %v947 = vmul.f32 %v905, 0.5
        %v948 = vmul.f32 %v910, 0.5
        %v949 = vmul.f32 %v915, 0.5
        %v950 = vmul.f32 %v920, 0.5
        %v951 = vmul.f32 %v925, 0.5
        %v952 = vmul.f32 %v930, 0.5
        %v953 = vmul.f32 %v935, 0.5
        %954 = vst [vmem:[%s328] sm:$0xff] %v938
        %955 = vst [vmem:[%s328 + $0x8] sm:$0xff] %v939
        %956 = vst [vmem:[%s328 + $0x10] sm:$0xff] %v940
        %957 = vst [vmem:[%s328 + $0x18] sm:$0xff] %v941
        %958 = vst [vmem:[%s328 + $0x20] sm:$0xff] %v942
        %959 = vst [vmem:[%s328 + $0x28] sm:$0xff] %v943
        %960 = vst [vmem:[%s328 + $0x30] sm:$0xff] %v944
        %961 = vst [vmem:[%s328 + $0x38] sm:$0xff] %v945
        %962 = vst [vmem:[%s328 + $0x40] sm:$0xff] %v946
        %963 = vst [vmem:[%s328 + $0x48] sm:$0xff] %v947
        %964 = vst [vmem:[%s328 + $0x50] sm:$0xff] %v948
        %965 = vst [vmem:[%s328 + $0x58] sm:$0xff] %v949
        %966 = vst [vmem:[%s328 + $0x60] sm:$0xff] %v950
        %967 = vst [vmem:[%s328 + $0x68] sm:$0xff] %v951
        %968 = vst [vmem:[%s328 + $0x70] sm:$0xff] %v952
        %969 = vst [vmem:[%s328 + $0x78] sm:$0xff] %v953
        %p970 = scmp.eq.s32.totalorder %s24, 0
        // Predicated region
        $region37: #{snl_stage_forward.13} parent=35 // pred_check
          %p971 = pneg %p970
        $region38: #{snl_stage_forward.13} parent=35 // pred_check_branch
          %973 = sbr.rel (%p971) target = $region40
        $region39: #{snl_stage_forward.13} parent=35 // pred_region
          %vm974 = vcmask 7168
          %975 = vst.msk [vmem:[%s389] sm:$0xff] %vm974, 0.0
          %976 = vst.msk [vmem:[%s389 + $0x8] sm:$0xff] %vm974, 0.0
          %977 = vst.msk [vmem:[%s389 + $0x10] sm:$0xff] %vm974, 0.0
          %978 = vst.msk [vmem:[%s389 + $0x18] sm:$0xff] %vm974, 0.0
          %979 = vst.msk [vmem:[%s389 + $0x20] sm:$0xff] %vm974, 0.0
          %980 = vst.msk [vmem:[%s389 + $0x28] sm:$0xff] %vm974, 0.0
          %981 = vst.msk [vmem:[%s389 + $0x30] sm:$0xff] %vm974, 0.0
          %982 = vst.msk [vmem:[%s389 + $0x38] sm:$0xff] %vm974, 0.0
          %983 = vst.msk [vmem:[%s389 + $0x40] sm:$0xff] %vm974, 0.0
          %984 = vst.msk [vmem:[%s389 + $0x48] sm:$0xff] %vm974, 0.0
          %985 = vst.msk [vmem:[%s389 + $0x50] sm:$0xff] %vm974, 0.0
          %986 = vst.msk [vmem:[%s389 + $0x58] sm:$0xff] %vm974, 0.0
          %987 = vst.msk [vmem:[%s389 + $0x60] sm:$0xff] %vm974, 0.0
          %988 = vst.msk [vmem:[%s389 + $0x68] sm:$0xff] %vm974, 0.0
          %989 = vst.msk [vmem:[%s389 + $0x70] sm:$0xff] %vm974, 0.0
          %990 = vst.msk [vmem:[%s389 + $0x78] sm:$0xff] %vm974, 0.0
        $region40: #{snl_stage_forward.13} parent=35 // pred_fallthru
          _
        %v991 = vld [vmem:[%s389] sm:$0xff]
        %v992 = vld [vmem:[%s389 + $0x8] sm:$0xff]
        %v993 = vld [vmem:[%s389 + $0x10] sm:$0xff]
        %v994 = vld [vmem:[%s389 + $0x18] sm:$0xff]
        %v995 = vld [vmem:[%s389 + $0x20] sm:$0xff]
        %v996 = vld [vmem:[%s389 + $0x28] sm:$0xff]
        %v997 = vld [vmem:[%s389 + $0x30] sm:$0xff]
        %v998 = vld [vmem:[%s389 + $0x38] sm:$0xff]
        %v999 = vld [vmem:[%s389 + $0x40] sm:$0xff]
        %v1000 = vld [vmem:[%s389 + $0x48] sm:$0xff]
        %v1001 = vld [vmem:[%s389 + $0x50] sm:$0xff]
        %v1002 = vld [vmem:[%s389 + $0x58] sm:$0xff]
        %v1003 = vld [vmem:[%s389 + $0x60] sm:$0xff]
        %v1004 = vld [vmem:[%s389 + $0x68] sm:$0xff]
        %v1005 = vld [vmem:[%s389 + $0x70] sm:$0xff]
        %v1006 = vld [vmem:[%s389 + $0x78] sm:$0xff]
        %1007 = vadd.xlane.f32.xlu0 %v938
        %v1008 = vpop.xlane.xlu0 %1007
        %1009 = vadd.xlane.f32.xlu0 %v939
        %v1010 = vpop.xlane.xlu0 %1009
        %1011 = vadd.xlane.f32.xlu0 %v940
        %v1012 = vpop.xlane.xlu0 %1011
        %1013 = vadd.xlane.f32.xlu0 %v941
        %v1014 = vpop.xlane.xlu0 %1013
        %1015 = vadd.xlane.f32.xlu0 %v942
        %v1016 = vpop.xlane.xlu0 %1015
        %1017 = vadd.xlane.f32.xlu0 %v943
        %v1018 = vpop.xlane.xlu0 %1017
        %1019 = vadd.xlane.f32.xlu0 %v944
        %v1020 = vpop.xlane.xlu0 %1019
        %1021 = vadd.xlane.f32.xlu0 %v945
        %v1022 = vpop.xlane.xlu0 %1021
        %1023 = vadd.xlane.f32.xlu0 %v946
        %v1024 = vpop.xlane.xlu0 %1023
        %1025 = vadd.xlane.f32.xlu0 %v947
        %v1026 = vpop.xlane.xlu0 %1025
        %1027 = vadd.xlane.f32.xlu0 %v948
        %v1028 = vpop.xlane.xlu0 %1027
        %1029 = vadd.xlane.f32.xlu0 %v949
        %v1030 = vpop.xlane.xlu0 %1029
        %1031 = vadd.xlane.f32.xlu0 %v950
        %v1032 = vpop.xlane.xlu0 %1031
        %1033 = vadd.xlane.f32.xlu0 %v951
        %v1034 = vpop.xlane.xlu0 %1033
        %1035 = vadd.xlane.f32.xlu0 %v952
        %v1036 = vpop.xlane.xlu0 %1035
        %1037 = vadd.xlane.f32.xlu0 %v953
        %v1038 = vpop.xlane.xlu0 %1037
        %v1039 = vadd.f32 %v991, %v1008
        %v1040 = vadd.f32 %v992, %v1010
        %v1041 = vadd.f32 %v993, %v1012
        %v1042 = vadd.f32 %v994, %v1014
        %v1043 = vadd.f32 %v995, %v1016
        %v1044 = vadd.f32 %v996, %v1018
        %v1045 = vadd.f32 %v997, %v1020
        %v1046 = vadd.f32 %v998, %v1022
        %v1047 = vadd.f32 %v999, %v1024
        %v1048 = vadd.f32 %v1000, %v1026
        %v1049 = vadd.f32 %v1001, %v1028
        %v1050 = vadd.f32 %v1002, %v1030
        %v1051 = vadd.f32 %v1003, %v1032
        %v1052 = vadd.f32 %v1004, %v1034
        %v1053 = vadd.f32 %v1005, %v1036
        %v1054 = vadd.f32 %v1006, %v1038
        %vm1055 = vcmask 7168
        %1056 = vst.msk [vmem:[%s389] sm:$0xff] %vm1055, %v1039
        %1057 = vst.msk [vmem:[%s389 + $0x8] sm:$0xff] %vm1055, %v1040
        %1058 = vst.msk [vmem:[%s389 + $0x10] sm:$0xff] %vm1055, %v1041
        %1059 = vst.msk [vmem:[%s389 + $0x18] sm:$0xff] %vm1055, %v1042
        %1060 = vst.msk [vmem:[%s389 + $0x20] sm:$0xff] %vm1055, %v1043
        %1061 = vst.msk [vmem:[%s389 + $0x28] sm:$0xff] %vm1055, %v1044
        %1062 = vst.msk [vmem:[%s389 + $0x30] sm:$0xff] %vm1055, %v1045
        %1063 = vst.msk [vmem:[%s389 + $0x38] sm:$0xff] %vm1055, %v1046
        %1064 = vst.msk [vmem:[%s389 + $0x40] sm:$0xff] %vm1055, %v1047
        %1065 = vst.msk [vmem:[%s389 + $0x48] sm:$0xff] %vm1055, %v1048
        %1066 = vst.msk [vmem:[%s389 + $0x50] sm:$0xff] %vm1055, %v1049
        %1067 = vst.msk [vmem:[%s389 + $0x58] sm:$0xff] %vm1055, %v1050
        %1068 = vst.msk [vmem:[%s389 + $0x60] sm:$0xff] %vm1055, %v1051
        %1069 = vst.msk [vmem:[%s389 + $0x68] sm:$0xff] %vm1055, %v1052
        %1070 = vst.msk [vmem:[%s389 + $0x70] sm:$0xff] %vm1055, %v1053
        %1071 = vst.msk [vmem:[%s389 + $0x78] sm:$0xff] %vm1055, %v1054
        %s1072 = sand.u32 %s160, 1
        %s1073 = sand.u32 %s160, 1
        %s1074 = smul.addr %s1073, 128
        %s1075 = scalar_lea.vmem [#allocation2], %s1074
        %s1076 = smul.u32 16, %s23
        %p1077 = scmp.lt.s32.totalorder %s22, 1
        %s1078 = scalar_select %p1077, %s22, 1
        %p1079 = scmp.lt.s32.totalorder %s1076, 31
        %s1080 = scalar_select %p1079, %s1076, 31
        %s1081 = smul.addr %s1078, 32
        %s1082 = sadd.s32 %s1080, %s1081
        %s1083 = smul.addr %s1082, 8
        %s1084 = scalar_lea.vmem %s5, %s1083
        // Predicated region
        $region41: #{snl_stage_forward.13} parent=35 // pred_check
          %p1085 = pneg %p170
        $region42: #{snl_stage_forward.13} parent=35 // pred_check_branch
          %1087 = sbr.rel (%p1085) target = $region44
        $region43: #{snl_stage_forward.13} parent=35 // pred_region
          %s1088 = smul.u32 16, %s23
          %s1089 = smul.addr %s1088, 2
          %s1090 = sadd.s32 %s24, %s1089
          %s1091 = smul.addr %s22, 64
          %s1092 = sadd.s32 %s1090, %s1091
          %s1093 = smul.addr %s1092, 8
          %s1094 = scalar_lea.vmem %s4, %s1093
          // Predicated region
          $region45: #{snl_stage_forward.13} parent=43 // pred_check
            _
          $region46: #{snl_stage_forward.13} parent=43 // pred_check_branch
            %1096 = sbr.rel (0) target = $region48
          $region47: #{snl_stage_forward.13} parent=43 // pred_region
            // Predicated region
            $region49: #{snl_stage_forward.13} parent=47 // pred_check
              _
            $region50: #{snl_stage_forward.13} parent=47 // pred_check_branch
              %1098 = sbr.rel (0) target = $region52
            $region51: #{snl_stage_forward.13} parent=47 // pred_region
              // Predicated region
              $region64: #{snl_stage_forward.13} parent=51 // pred_check
                _
              $region65: #{snl_stage_forward.13} parent=51 // pred_check_branch
                %1143 = sbr.rel (0) target = $region67
              $region66: #{snl_stage_forward.13} parent=51 // pred_region
                loop: start=0, step=1, limit=1
                $region68: #{snl_stage_forward.13} parent=66 // loop_pre_header
                  _
                $region69: #{snl_stage_forward.13} parent=66 // loop_header
                  %s1145 = sphi 0, %s1149
                  %p1146 = scmp.ge.s32.totalorder %s1145, 1
                  %s1150 = sphi %s1075, %s1075
                  %s1151 = sphi %s1094, %s1094
                $region70: #{snl_stage_forward.13} parent=66 // loop_header_branch
                  %1148 = sbr.rel (%p1146) target = $region74
                $region71: #{snl_stage_forward.13} parent=66 // loop_body
                  %v1152 = vld [vmem:[%s1150] sm:$0xff]
                  %1153 = vst [vmem:[%s1151] sm:$0xff] %v1152
                  %v1154 = vld [vmem:[%s1150 + $0x8] sm:$0xff]
                  %1155 = vst [vmem:[%s1151 + $0x10] sm:$0xff] %v1154
                  %v1156 = vld [vmem:[%s1150 + $0x10] sm:$0xff]
                  %1157 = vst [vmem:[%s1151 + $0x20] sm:$0xff] %v1156
                  %v1158 = vld [vmem:[%s1150 + $0x18] sm:$0xff]
                  %1159 = vst [vmem:[%s1151 + $0x30] sm:$0xff] %v1158
                  %v1160 = vld [vmem:[%s1150 + $0x20] sm:$0xff]
                  %1161 = vst [vmem:[%s1151 + $0x40] sm:$0xff] %v1160
                  %v1162 = vld [vmem:[%s1150 + $0x28] sm:$0xff]
                  %1163 = vst [vmem:[%s1151 + $0x50] sm:$0xff] %v1162
                  %v1164 = vld [vmem:[%s1150 + $0x30] sm:$0xff]
                  %1165 = vst [vmem:[%s1151 + $0x60] sm:$0xff] %v1164
                  %v1166 = vld [vmem:[%s1150 + $0x38] sm:$0xff]
                  %1167 = vst [vmem:[%s1151 + $0x70] sm:$0xff] %v1166
                  %v1168 = vld [vmem:[%s1150 + $0x40] sm:$0xff]
                  %1169 = vst [vmem:[%s1151 + $0x80] sm:$0xff] %v1168
                  %v1170 = vld [vmem:[%s1150 + $0x48] sm:$0xff]
                  %1171 = vst [vmem:[%s1151 + $0x90] sm:$0xff] %v1170
                  %v1172 = vld [vmem:[%s1150 + $0x50] sm:$0xff]
                  %1173 = vst [vmem:[%s1151 + $0xa0] sm:$0xff] %v1172
                  %v1174 = vld [vmem:[%s1150 + $0x58] sm:$0xff]
                  %1175 = vst [vmem:[%s1151 + $0xb0] sm:$0xff] %v1174
                  %v1176 = vld [vmem:[%s1150 + $0x60] sm:$0xff]
                  %1177 = vst [vmem:[%s1151 + $0xc0] sm:$0xff] %v1176
                  %v1178 = vld [vmem:[%s1150 + $0x68] sm:$0xff]
                  %1179 = vst [vmem:[%s1151 + $0xd0] sm:$0xff] %v1178
                  %v1180 = vld [vmem:[%s1150 + $0x70] sm:$0xff]
                  %1181 = vst [vmem:[%s1151 + $0xe0] sm:$0xff] %v1180
                  %v1182 = vld [vmem:[%s1150 + $0x78] sm:$0xff]
                  %1183 = vst [vmem:[%s1151 + $0xf0] sm:$0xff] %v1182
                $region72: #{snl_stage_forward.13} parent=66 // loop_footer
                  %s1149 = sadd.s32 1, %s1145
                $region73: #{snl_stage_forward.13} parent=66 // loop_footer_branch
                  %1144 = sbr.rel target = $region69
                $region74: #{snl_stage_forward.13} parent=66 // loop_exit
                  _
              $region67: #{snl_stage_forward.13} parent=51 // pred_fallthru
                _
              // Predicated region
              $region75: #{snl_stage_forward.13} parent=51 // pred_check
                _
              $region76: #{snl_stage_forward.13} parent=51 // pred_check_branch
                %1185 = sbr.rel target = $region78
              $region77: #{snl_stage_forward.13} parent=51 // pred_region
                _
              $region78: #{snl_stage_forward.13} parent=51 // pred_fallthru
                _
            $region52: #{snl_stage_forward.13} parent=47 // pred_fallthru
              _
            // Predicated region
            $region53: #{snl_stage_forward.13} parent=47 // pred_check
              _
            $region54: #{snl_stage_forward.13} parent=47 // pred_check_branch
              %1100 = sbr.rel target = $region56
            $region55: #{snl_stage_forward.13} parent=47 // pred_region
              loop: start=0, step=1, limit=1
              $region57: #{snl_stage_forward.13} parent=55 // loop_pre_header
                _
              $region58: #{snl_stage_forward.13} parent=55 // loop_header
                %s1103 = sphi 0, %s1107
                %p1104 = scmp.ge.s32.totalorder %s1103, 1
                %s1108 = sphi %s1075, %s1075
                %s1109 = sphi %s1094, %s1094
              $region59: #{snl_stage_forward.13} parent=55 // loop_header_branch
                %1106 = sbr.rel (%p1104) target = $region63
              $region60: #{snl_stage_forward.13} parent=55 // loop_body
                %v1110 = vld [vmem:[%s1108] sm:$0xff]
                %1111 = vst [vmem:[%s1109] sm:$0xff] %v1110
                %v1112 = vld [vmem:[%s1108 + $0x8] sm:$0xff]
                %1113 = vst [vmem:[%s1109 + $0x10] sm:$0xff] %v1112
                %v1114 = vld [vmem:[%s1108 + $0x10] sm:$0xff]
                %1115 = vst [vmem:[%s1109 + $0x20] sm:$0xff] %v1114
                %v1116 = vld [vmem:[%s1108 + $0x18] sm:$0xff]
                %1117 = vst [vmem:[%s1109 + $0x30] sm:$0xff] %v1116
                %v1118 = vld [vmem:[%s1108 + $0x20] sm:$0xff]
                %1119 = vst [vmem:[%s1109 + $0x40] sm:$0xff] %v1118
                %v1120 = vld [vmem:[%s1108 + $0x28] sm:$0xff]
                %1121 = vst [vmem:[%s1109 + $0x50] sm:$0xff] %v1120
                %v1122 = vld [vmem:[%s1108 + $0x30] sm:$0xff]
                %1123 = vst [vmem:[%s1109 + $0x60] sm:$0xff] %v1122
                %v1124 = vld [vmem:[%s1108 + $0x38] sm:$0xff]
                %1125 = vst [vmem:[%s1109 + $0x70] sm:$0xff] %v1124
                %v1126 = vld [vmem:[%s1108 + $0x40] sm:$0xff]
                %1127 = vst [vmem:[%s1109 + $0x80] sm:$0xff] %v1126
                %v1128 = vld [vmem:[%s1108 + $0x48] sm:$0xff]
                %1129 = vst [vmem:[%s1109 + $0x90] sm:$0xff] %v1128
                %v1130 = vld [vmem:[%s1108 + $0x50] sm:$0xff]
                %1131 = vst [vmem:[%s1109 + $0xa0] sm:$0xff] %v1130
                %v1132 = vld [vmem:[%s1108 + $0x58] sm:$0xff]
                %1133 = vst [vmem:[%s1109 + $0xb0] sm:$0xff] %v1132
                %v1134 = vld [vmem:[%s1108 + $0x60] sm:$0xff]
                %1135 = vst [vmem:[%s1109 + $0xc0] sm:$0xff] %v1134
                %v1136 = vld [vmem:[%s1108 + $0x68] sm:$0xff]
                %1137 = vst [vmem:[%s1109 + $0xd0] sm:$0xff] %v1136
                %v1138 = vld [vmem:[%s1108 + $0x70] sm:$0xff]
                %1139 = vst [vmem:[%s1109 + $0xe0] sm:$0xff] %v1138
                %v1140 = vld [vmem:[%s1108 + $0x78] sm:$0xff]
                %1141 = vst [vmem:[%s1109 + $0xf0] sm:$0xff] %v1140
              $region61: #{snl_stage_forward.13} parent=55 // loop_footer
                %s1107 = sadd.s32 1, %s1103
              $region62: #{snl_stage_forward.13} parent=55 // loop_footer_branch
                %1102 = sbr.rel target = $region58
              $region63: #{snl_stage_forward.13} parent=55 // loop_exit
                _
            $region56: #{snl_stage_forward.13} parent=47 // pred_fallthru
              _
          $region48: #{snl_stage_forward.13} parent=43 // pred_fallthru
            _
          %1186 = vnop
        $region44: #{snl_stage_forward.13} parent=35 // pred_fallthru
          _
        // Predicated region
        $region79: #{snl_stage_forward.13} parent=35 // pred_check
          %p1187 = pneg %p198
        $region80: #{snl_stage_forward.13} parent=35 // pred_check_branch
          %1189 = sbr.rel (%p1187) target = $region82
        $region81: #{snl_stage_forward.13} parent=35 // pred_region
          %s1190 = smul.u32 16, %s23
        $region82: #{snl_stage_forward.13} parent=35 // pred_fallthru
          _
      $region36: #{snl_stage_forward.13} parent=5 // pred_fallthru
        _
      %p1191 = scmp.le.s32.totalorder 2, %s12
      // Predicated region
      $region83: #{snl_stage_forward.13} parent=5 // pred_check
        %p1192 = pneg %p1191
      $region84: #{snl_stage_forward.13} parent=5 // pred_check_branch
        %1194 = sbr.rel (%p1192) target = $region86
      $region85: #{snl_stage_forward.13} parent=5 // pred_region
        %s1195 = ssub.s32 %s12, 2
        // Predicated region
        $region87: #{snl_stage_forward.13} parent=85 // pred_check
          %p1196 = pneg %p176
        $region88: #{snl_stage_forward.13} parent=85 // pred_check_branch
          %1198 = sbr.rel (%p1196) target = $region90
        $region89: #{snl_stage_forward.13} parent=85 // pred_region
          %s1199 = sand.u32 %s161, 1
          %s1200 = sand.u32 %s161, 1
          %s1201 = smul.addr %s1200, 128
          %s1202 = scalar_lea.vmem [#allocation2], %s1201
        $region90: #{snl_stage_forward.13} parent=85 // pred_fallthru
          _
        // Predicated region
        $region91: #{snl_stage_forward.13} parent=85 // pred_check
          %p1203 = pneg %p204
        $region92: #{snl_stage_forward.13} parent=85 // pred_check_branch
          %1205 = sbr.rel (%p1203) target = $region94
        $region93: #{snl_stage_forward.13} parent=85 // pred_region
          %s1206 = smul.u32 16, %s26
          %p1207 = scmp.lt.s32.totalorder %s25, 1
          %s1208 = scalar_select %p1207, %s25, 1
          %p1209 = scmp.lt.s32.totalorder %s1206, 31
          %s1210 = scalar_select %p1209, %s1206, 31
          %s1211 = smul.addr %s1208, 32
          %s1212 = sadd.s32 %s1210, %s1211
          %s1213 = smul.addr %s1212, 8
          %s1214 = scalar_lea.vmem %s5, %s1213
        $region94: #{snl_stage_forward.13} parent=85 // pred_fallthru
          _
      $region86: #{snl_stage_forward.13} parent=5 // pred_fallthru
        _
    $region6: #{snl_stage_forward.13} parent=1 // loop_footer
      %s16 = sadd.s32 1, %s12
    $region7: #{snl_stage_forward.13} parent=1 // loop_footer_branch
      %11 = sbr.rel target = $region3
    $region8: #{snl_stage_forward.13} parent=1 // loop_exit
      _

// kernel: snl_stage_forward.12
$region0: #{snl_stage_forward.12}
  #allocation0 [shape = 'u32[]', space=smem, size = 0x4, offset = 0x4, fixed_abs, tag = 'smem constant byte address 0x4 - core index']
  #allocation1 [shape = 'u32[144,128]{1,0:T(1,128)}', space=vmem, size = 0x12000, scoped, tag = 'internal scratch']
  %s0 = inlined_call_operand.vmem [shape: f32[2,256,8], index: 0, kind: input, shape index: {}]
  %s1 = inlined_call_operand.vmem [shape: f32[8,4], index: 1, kind: input, shape index: {}]
  %s2 = inlined_call_operand.vmem [shape: f32[8,4], index: 2, kind: input, shape index: {}]
  %s3 = inlined_call_operand.vmem [shape: f32[2,256,4], index: 3, kind: output, shape index: {0}]
  %s4 = inlined_call_operand.vmem [shape: f32[2,256,4], index: 4, kind: output, shape index: {1}]
  %5 = xla_tuple %s3, %s4
  %s6 = sld [smem:[#allocation0]]
  $region53: #{snl_stage_forward.12} parent=0
    _
  %s8 = ssub.s32 1, %s6
  %s9 = scalar_select 0, %s8, %s6
  loop: start=0, step=1, limit=6
  $region2: #{snl_stage_forward.12} parent=0 // loop_pre_header
    _
  $region3: #{snl_stage_forward.12} parent=0 // loop_header
    %s11 = sphi 0, %s15
    %p12 = scmp.ge.s32.totalorder %s11, 6
    %s18 = sphi 0, %s30
    %s19 = sphi 0, %s26
    %s20 = sphi 0, %s18
    %s21 = sphi 0, %s19
    %s22 = sphi 0, %s20
    %s23 = sphi 0, %s21
    %s35 = sphi 0, %s37
    %s38 = sphi 0, %s35
    %s39 = sphi 0, %s38
    %s55 = sphi 0, %s39
    %s59 = sphi 0, %s59
    %s61 = sphi 0, %s59
    %s62 = sphi 0, %s61
    %s76 = sphi 0, %s62
    %s80 = sphi 0, %s80
    %s82 = sphi 0, %s80
    %s83 = sphi 0, %s82
    %s97 = sphi 0, %s83
    %s105 = sphi 0, %s107
    %s108 = sphi 0, %s105
    %s109 = sphi 0, %s108
    %s125 = sphi 0, %s109
    %s133 = sphi 0, %s135
    %s136 = sphi 0, %s133
    %s137 = sphi 0, %s136
    %s153 = sphi 0, %s137
  $region4: #{snl_stage_forward.12} parent=0 // loop_header_branch
    %14 = sbr.rel (%p12) target = $region8
  $region5: #{snl_stage_forward.12} parent=0 // loop_body
    %s16 = ssub.s32 %s11, 1
    %s17 = ssub.s32 %s11, 2
    %s24 = sadd.s32 1, %s19
    %p25 = scmp.ge.s32.totalorder %s24, 2
    %s26 = scalar_select %p25, 0, %s24
    %s27 = sadd.s32 1, %s18
    %s28 = scalar_select %p25, %s27, %s18
    %p29 = scmp.ge.s32.totalorder %s28, 2
    %s30 = scalar_select %p29, 0, %s28
    %s31 = ssub.s32 %s18, %s30
    %s32 = ssub.s32 %s19, %s26
    %s33 = sor.u32 %s31, %s32
    %p34 = scmp.eq.s32.totalorder %s33, 0
    %s36 = sadd.s32 %s35, 1
    %s37 = scalar_select %p34, %s35, %s36
    %p40 = pneg %p34
    %p41 = scmp.eq.s32.totalorder %s11, 3
    %p42 = por %p40, %p41
    %p43 = scmp.ne.s32.totalorder %s35, %s38
    %p44 = scmp.eq.s32.totalorder %s11, 0
    %p45 = por %p43, %p44
    %p46 = scmp.ne.s32.totalorder %s35, %s38
    %p47 = scmp.eq.s32.totalorder %s16, 3
    %p48 = por %p46, %p47
    %p49 = scmp.ne.s32.totalorder %s38, %s39
    %p50 = scmp.eq.s32.totalorder %s16, 0
    %p51 = por %p49, %p50
    %p52 = scmp.ne.s32.totalorder %s38, %s39
    %p53 = scmp.eq.s32.totalorder %s17, 3
    %p54 = por %p52, %p53
    %p56 = scmp.ne.s32.totalorder %s39, %s55
    %p57 = scmp.eq.s32.totalorder %s17, 0
    %p58 = por %p56, %p57
    %s60 = sadd.s32 %s59, 1
    %p63 = scmp.eq.s32.totalorder %s11, 3
    %p64 = scmp.ne.s32.totalorder %s59, %s61
    %p65 = scmp.eq.s32.totalorder %s11, 0
    %p66 = por %p64, %p65
    %p67 = scmp.ne.s32.totalorder %s59, %s61
    %p68 = scmp.eq.s32.totalorder %s16, 3
    %p69 = por %p67, %p68
    %p70 = scmp.ne.s32.totalorder %s61, %s62
    %p71 = scmp.eq.s32.totalorder %s16, 0
    %p72 = por %p70, %p71
    %p73 = scmp.ne.s32.totalorder %s61, %s62
    %p74 = scmp.eq.s32.totalorder %s17, 3
    %p75 = por %p73, %p74
    %p77 = scmp.ne.s32.totalorder %s62, %s76
    %p78 = scmp.eq.s32.totalorder %s17, 0
    %p79 = por %p77, %p78
    %s81 = sadd.s32 %s80, 1
    %p84 = scmp.eq.s32.totalorder %s11, 3
    %p85 = scmp.ne.s32.totalorder %s80, %s82
    %p86 = scmp.eq.s32.totalorder %s11, 0
    %p87 = por %p85, %p86
    %p88 = scmp.ne.s32.totalorder %s80, %s82
    %p89 = scmp.eq.s32.totalorder %s16, 3
    %p90 = por %p88, %p89
    %p91 = scmp.ne.s32.totalorder %s82, %s83
    %p92 = scmp.eq.s32.totalorder %s16, 0
    %p93 = por %p91, %p92
    %p94 = scmp.ne.s32.totalorder %s82, %s83
    %p95 = scmp.eq.s32.totalorder %s17, 3
    %p96 = por %p94, %p95
    %p98 = scmp.ne.s32.totalorder %s83, %s97
    %p99 = scmp.eq.s32.totalorder %s17, 0
    %p100 = por %p98, %p99
    %s101 = ssub.s32 %s18, %s30
    %s102 = ssub.s32 %s19, %s26
    %s103 = sor.u32 %s101, %s102
    %p104 = scmp.eq.s32.totalorder %s103, 0
    %s106 = sadd.s32 %s105, 1
    %s107 = scalar_select %p104, %s105, %s106
    %p110 = pneg %p104
    %p111 = scmp.eq.s32.totalorder %s11, 3
    %p112 = por %p110, %p111
    %p113 = scmp.ne.s32.totalorder %s105, %s108
    %p114 = scmp.eq.s32.totalorder %s11, 0
    %p115 = por %p113, %p114
    %p116 = scmp.ne.s32.totalorder %s105, %s108
    %p117 = scmp.eq.s32.totalorder %s16, 3
    %p118 = por %p116, %p117
    %p119 = scmp.ne.s32.totalorder %s108, %s109
    %p120 = scmp.eq.s32.totalorder %s16, 0
    %p121 = por %p119, %p120
    %p122 = scmp.ne.s32.totalorder %s108, %s109
    %p123 = scmp.eq.s32.totalorder %s17, 3
    %p124 = por %p122, %p123
    %p126 = scmp.ne.s32.totalorder %s109, %s125
    %p127 = scmp.eq.s32.totalorder %s17, 0
    %p128 = por %p126, %p127
    %s129 = ssub.s32 %s18, %s30
    %s130 = ssub.s32 %s19, %s26
    %s131 = sor.u32 %s129, %s130
    %p132 = scmp.eq.s32.totalorder %s131, 0
    %s134 = sadd.s32 %s133, 1
    %s135 = scalar_select %p132, %s133, %s134
    %p138 = pneg %p132
    %p139 = scmp.eq.s32.totalorder %s11, 3
    %p140 = por %p138, %p139
    %p141 = scmp.ne.s32.totalorder %s133, %s136
    %p142 = scmp.eq.s32.totalorder %s11, 0
    %p143 = por %p141, %p142
    %p144 = scmp.ne.s32.totalorder %s133, %s136
    %p145 = scmp.eq.s32.totalorder %s16, 3
    %p146 = por %p144, %p145
    %p147 = scmp.ne.s32.totalorder %s136, %s137
    %p148 = scmp.eq.s32.totalorder %s16, 0
    %p149 = por %p147, %p148
    %p150 = scmp.ne.s32.totalorder %s136, %s137
    %p151 = scmp.eq.s32.totalorder %s17, 3
    %p152 = por %p150, %p151
    %p154 = scmp.ne.s32.totalorder %s137, %s153
    %p155 = scmp.eq.s32.totalorder %s17, 0
    %p156 = por %p154, %p155
    %p157 = scmp.le.s32.totalorder 1, %s11
    %p158 = scmp.lt.s32.totalorder %s11, 5
    %p159 = pnand %p157, %p158
    %p160 = pneg %p159
    // Predicated region
    $region9: #{snl_stage_forward.12} parent=5 // pred_check
      _
    $region10: #{snl_stage_forward.12} parent=5 // pred_check_branch
      %162 = sbr.rel (%p159) target = $region12
    $region11: #{snl_stage_forward.12} parent=5 // pred_region
      %s163 = ssub.s32 %s11, 1
      // Predicated region
      $region13: #{snl_stage_forward.12} parent=11 // pred_check
        %p164 = pneg %p72
      $region14: #{snl_stage_forward.12} parent=11 // pred_check_branch
        %166 = sbr.rel (%p164) target = $region16
      $region15: #{snl_stage_forward.12} parent=11 // pred_region
        _
      $region16: #{snl_stage_forward.12} parent=11 // pred_fallthru
        _
      // Predicated region
      $region17: #{snl_stage_forward.12} parent=11 // pred_check
        %p167 = pneg %p93
      $region18: #{snl_stage_forward.12} parent=11 // pred_check_branch
        %169 = sbr.rel (%p167) target = $region20
      $region19: #{snl_stage_forward.12} parent=11 // pred_region
        _
      $region20: #{snl_stage_forward.12} parent=11 // pred_fallthru
        _
    $region12: #{snl_stage_forward.12} parent=5 // pred_fallthru
      _
    %p170 = scmp.lt.s32.totalorder %s11, 4
    // Predicated region
    $region21: #{snl_stage_forward.12} parent=5 // pred_check
      %p171 = pneg %p170
    $region22: #{snl_stage_forward.12} parent=5 // pred_check_branch
      %173 = sbr.rel (%p171) target = $region24
    $region23: #{snl_stage_forward.12} parent=5 // pred_region
      // Predicated region
      $region25: #{snl_stage_forward.12} parent=23 // pred_check
        %p174 = pneg %p45
      $region26: #{snl_stage_forward.12} parent=23 // pred_check_branch
        %176 = sbr.rel (%p174) target = $region28
      $region27: #{snl_stage_forward.12} parent=23 // pred_region
        %s177 = smul.u32 16, %s19
        %p178 = scmp.lt.s32.totalorder %s18, 1
        %s179 = scalar_select %p178, %s18, 1
        %p180 = scmp.lt.s32.totalorder %s177, 31
        %s181 = scalar_select %p180, %s177, 31
        %s182 = smul.addr %s179, 32
        %s183 = sadd.s32 %s181, %s182
        %s184 = smul.addr %s183, 8
        %s185 = scalar_lea.vmem %s0, %s184
        %s186 = smul.u32 16, %s19
      $region28: #{snl_stage_forward.12} parent=23 // pred_fallthru
        _
    $region24: #{snl_stage_forward.12} parent=5 // pred_fallthru
      _
    %p187 = scmp.le.s32.totalorder 1, %s11
    %p188 = scmp.lt.s32.totalorder %s11, 5
    %p189 = pnand %p187, %p188
    %p190 = pneg %p189
    // Predicated region
    $region29: #{snl_stage_forward.12} parent=5 // pred_check
      _
    $region30: #{snl_stage_forward.12} parent=5 // pred_check_branch
      %192 = sbr.rel (%p189) target = $region32
    $region31: #{snl_stage_forward.12} parent=5 // pred_region
      %s193 = ssub.s32 %s11, 1
      %s194 = smul.u32 16, %s21
      %p195 = scmp.lt.s32.totalorder %s20, 1
      %s196 = scalar_select %p195, %s20, 1
      %p197 = scmp.lt.s32.totalorder %s194, 31
      %s198 = scalar_select %p197, %s194, 31
      %s199 = smul.addr %s196, 32
      %s200 = sadd.s32 %s198, %s199
      %s201 = smul.addr %s200, 8
      %s202 = scalar_lea.vmem %s0, %s201
      %p203 = pneg %p51
      %p204 = pneg %p48
      %p205 = pneg %p72
      %p206 = pneg %p69
      %p207 = pneg %p93
      %p208 = pneg %p90
      %p209 = pneg %p121
      %p210 = pneg %p118
      %s211 = smul.u32 16, %s21
      %p212 = scmp.lt.s32.totalorder %s20, 1
      %s213 = scalar_select %p212, %s20, 1
      %p214 = scmp.lt.s32.totalorder %s211, 31
      %s215 = scalar_select %p214, %s211, 31
      %s216 = smul.addr %s213, 32
      %s217 = sadd.s32 %s215, %s216
      %s218 = smul.addr %s217, 8
      %s219 = scalar_lea.vmem %s3, %s218
      %p220 = pneg %p149
      %p221 = pneg %p146
      %s222 = smul.u32 16, %s21
      %p223 = scmp.lt.s32.totalorder %s20, 1
      %s224 = scalar_select %p223, %s20, 1
      %p225 = scmp.lt.s32.totalorder %s222, 31
      %s226 = scalar_select %p225, %s222, 31
      %s227 = smul.addr %s224, 32
      %s228 = sadd.s32 %s226, %s227
      %s229 = smul.addr %s228, 8
      %s230 = scalar_lea.vmem %s4, %s229
      %s231 = smul.u32 16, %s21
      %p232 = scmp.lt.s32.totalorder %s20, 1
      %s233 = scalar_select %p232, %s20, 1
      %p234 = scmp.lt.s32.totalorder %s231, 31
      %s235 = scalar_select %p234, %s231, 31
      %s236 = smul.addr %s233, 32
      %s237 = sadd.s32 %s235, %s236
      %s238 = smul.addr %s237, 8
      %s239 = scalar_lea.vmem %s0, %s238
      %s240 = smul.u32 16, %s21
      %s241 = smul.u32 16, %s21
      %p242 = scmp.lt.s32.totalorder %s20, 1
      %s243 = scalar_select %p242, %s20, 1
      %p244 = scmp.lt.s32.totalorder %s241, 31
      %s245 = scalar_select %p244, %s241, 31
      %s246 = smul.addr %s243, 32
      %s247 = sadd.s32 %s245, %s246
      %s248 = smul.addr %s247, 8
      %s249 = scalar_lea.vmem %s3, %s248
      %s250 = smul.u32 16, %s21
      %s251 = smul.u32 16, %s21
      %p252 = scmp.lt.s32.totalorder %s20, 1
      %s253 = scalar_select %p252, %s20, 1
      %p254 = scmp.lt.s32.totalorder %s251, 31
      %s255 = scalar_select %p254, %s251, 31
      %s256 = smul.addr %s253, 32
      %s257 = sadd.s32 %s255, %s256
      %s258 = smul.addr %s257, 8
      %s259 = scalar_lea.vmem %s4, %s258
      %s260 = smul.u32 16, %s21
      %v261 = vld [vmem:[%s239] sm:$0xff]
      %v262 = vld [vmem:[%s239 + $0x8] sm:$0xff]
      %v263 = vld [vmem:[%s239 + $0x10] sm:$0xff]
      %v264 = vld [vmem:[%s239 + $0x18] sm:$0xff]
      %v265 = vld [vmem:[%s239 + $0x20] sm:$0xff]
      %v266 = vld [vmem:[%s239 + $0x28] sm:$0xff]
      %v267 = vld [vmem:[%s239 + $0x30] sm:$0xff]
      %v268 = vld [vmem:[%s239 + $0x38] sm:$0xff]
      %v269 = vld [vmem:[%s239 + $0x40] sm:$0xff]
      %v270 = vld [vmem:[%s239 + $0x48] sm:$0xff]
      %v271 = vld [vmem:[%s239 + $0x50] sm:$0xff]
      %v272 = vld [vmem:[%s239 + $0x58] sm:$0xff]
      %v273 = vld [vmem:[%s239 + $0x60] sm:$0xff]
      %v274 = vld [vmem:[%s239 + $0x68] sm:$0xff]
      %v275 = vld [vmem:[%s239 + $0x70] sm:$0xff]
      %v276 = vld [vmem:[%s239 + $0x78] sm:$0xff]
      %v277 = vld [vmem:[%s1] sm:$0xff]
      %vm278 = vcmask 64512
      %v280 = vsel %vm278, %v261, 0
      %v283 = vsel %vm278, %v262, 0
      %v286 = vsel %vm278, %v263, 0
      %v289 = vsel %vm278, %v264, 0
      %v292 = vsel %vm278, %v265, 0
      %v295 = vsel %vm278, %v266, 0
      %v298 = vsel %vm278, %v267, 0
      %v301 = vsel %vm278, %v268, 0
      %v304 = vsel %vm278, %v269, 0
      %v307 = vsel %vm278, %v270, 0
      %v310 = vsel %vm278, %v271, 0
      %v313 = vsel %vm278, %v272, 0
      %v316 = vsel %vm278, %v273, 0
      %v319 = vsel %vm278, %v274, 0
      %v322 = vsel %vm278, %v275, 0
      %v325 = vsel %vm278, %v276, 0
      %327 = vmatprep.subr.mxu0 0.0
      %328 = vmatpush1.msra.mxu0 %v277
      %329 = vmatprep.subr.mxu0 0.0
      %330 = vmatpush1.msra.mxu0 0.0
      %331 = vmatprep.subr.mxu0 0.0
      %332 = vmatpush1.msra.mxu0 0.0
      %333 = vmatprep.subr.mxu0 0.0
      %334 = vmatpush1.msra.mxu0 0.0
      %335 = vmatprep.subr.mxu0 0.0
      %336 = vmatpush1.msra.mxu0 0.0
      %337 = vmatprep.subr.mxu0 0.0
      %338 = vmatpush1.msra.mxu0 0.0
      %339 = vmatprep.subr.mxu0 0.0
      %340 = vmatpush1.msra.mxu0 0.0
      %341 = vmatprep.subr.mxu0 0.0
      %342 = vmatpush1.msra.mxu0 0.0
      %343 = vmatprep.subr.mxu0 0.0
      %344 = vmatpush1.msra.mxu0 0.0
      %345 = vmatprep.subr.mxu0 0.0
      %346 = vmatpush1.msra.mxu0 0.0
      %347 = vmatprep.subr.mxu0 0.0
      %348 = vmatpush1.msra.mxu0 0.0
      %349 = vmatprep.subr.mxu0 0.0
      %350 = vmatpush1.msra.mxu0 0.0
      %351 = vmatprep.subr.mxu0 0.0
      %352 = vmatpush1.msra.mxu0 0.0
      %353 = vmatprep.subr.mxu0 0.0
      %354 = vmatpush1.msra.mxu0 0.0
      %355 = vmatprep.subr.mxu0 0.0
      %356 = vmatpush1.msra.mxu0 0.0
      %357 = vmatprep.subr.mxu0 0.0
      %358 = vmatpush1.msra.mxu0 0.0
      %359 = vmatprep.subr.mxu0 0.0
      %360 = vmatpush1.msra.mxu0 0.0
      %361 = vmatprep.subr.mxu0 0.0
      %362 = vmatpush1.msra.mxu0 0.0
      %363 = vmatprep.subr.mxu0 0.0
      %364 = vmatpush1.msra.mxu0 0.0
      %365 = vmatprep.subr.mxu0 0.0
      %366 = vmatpush1.msra.mxu0 0.0
      %367 = vmatprep.subr.mxu0 0.0
      %368 = vmatpush1.msra.mxu0 0.0
      %369 = vmatprep.subr.mxu0 0.0
      %370 = vmatpush1.msra.mxu0 0.0
      %371 = vmatprep.subr.mxu0 0.0
      %372 = vmatpush1.msra.mxu0 0.0
      %373 = vmatprep.subr.mxu0 0.0
      %374 = vmatpush1.msra.mxu0 0.0
      %375 = vmatprep.subr.mxu0 0.0
      %376 = vmatpush1.msra.mxu0 0.0
      %377 = vmatprep.subr.mxu0 0.0
      %378 = vmatpush1.msra.mxu0 0.0
      %379 = vmatprep.subr.mxu0 0.0
      %380 = vmatpush1.msra.mxu0 0.0
      %381 = vmatprep.subr.mxu0 0.0
      %382 = vmatpush1.msra.mxu0 0.0
      %383 = vmatprep.subr.mxu0 0.0
      %384 = vmatpush1.msra.mxu0 0.0
      %385 = vmatprep.subr.mxu0 0.0
      %386 = vmatpush1.msra.mxu0 0.0
      %387 = vmatprep.subr.mxu0 0.0
      %388 = vmatpush1.msra.mxu0 0.0
      %389 = vmatprep.subr.mxu0 0.0
      %390 = vmatpush1.msra.mxu0 0.0
      %391 = vmatprep.mubr.f32.mxu0 0.0
      %392 = vmatmul.mubr.f32.gmra.mrb[0].mxu0 %v280
      %v393 = vpop.f32.mrb[0].mxu0
      %v394 = vadd.f32 0.0, %v393
      %v395 = vpop.f32.mrb[0].mxu0
      %396 = vmatprep.mubr.f32.mxu0 0.0
      %397 = vmatmul.mubr.f32.gmra.mrb[0].mxu0 %v283
      %v398 = vpop.f32.mrb[0].mxu0
      %v399 = vadd.f32 0.0, %v398
      %v400 = vpop.f32.mrb[0].mxu0
      %401 = vmatprep.mubr.f32.mxu0 0.0
      %402 = vmatmul.mubr.f32.gmra.mrb[0].mxu0 %v286
      %v403 = vpop.f32.mrb[0].mxu0
      %v404 = vadd.f32 0.0, %v403
      %v405 = vpop.f32.mrb[0].mxu0
      %406 = vmatprep.mubr.f32.mxu0 0.0
      %407 = vmatmul.mubr.f32.gmra.mrb[0].mxu0 %v289
      %v408 = vpop.f32.mrb[0].mxu0
      %v409 = vadd.f32 0.0, %v408
      %v410 = vpop.f32.mrb[0].mxu0
      %411 = vmatprep.mubr.f32.mxu0 0.0
      %412 = vmatmul.mubr.f32.gmra.mrb[0].mxu0 %v292
      %v413 = vpop.f32.mrb[0].mxu0
      %v414 = vadd.f32 0.0, %v413
      %v415 = vpop.f32.mrb[0].mxu0
      %416 = vmatprep.mubr.f32.mxu0 0.0
      %417 = vmatmul.mubr.f32.gmra.mrb[0].mxu0 %v295
      %v418 = vpop.f32.mrb[0].mxu0
      %v419 = vadd.f32 0.0, %v418
      %v420 = vpop.f32.mrb[0].mxu0
      %421 = vmatprep.mubr.f32.mxu0 0.0
      %422 = vmatmul.mubr.f32.gmra.mrb[0].mxu0 %v298
      %v423 = vpop.f32.mrb[0].mxu0
      %v424 = vadd.f32 0.0, %v423
      %v425 = vpop.f32.mrb[0].mxu0
      %426 = vmatprep.mubr.f32.mxu0 0.0
      %427 = vmatmul.mubr.f32.gmra.mrb[0].mxu0 %v301
      %v428 = vpop.f32.mrb[0].mxu0
      %v429 = vadd.f32 0.0, %v428
      %v430 = vpop.f32.mrb[0].mxu0
      %431 = vmatprep.mubr.f32.mxu0 0.0
      %432 = vmatmul.mubr.f32.gmra.mrb[0].mxu0 %v304
      %v433 = vpop.f32.mrb[0].mxu0
      %v434 = vadd.f32 0.0, %v433
      %v435 = vpop.f32.mrb[0].mxu0
      %436 = vmatprep.mubr.f32.mxu0 0.0
      %437 = vmatmul.mubr.f32.gmra.mrb[0].mxu0 %v307
      %v438 = vpop.f32.mrb[0].mxu0
      %v439 = vadd.f32 0.0, %v438
      %v440 = vpop.f32.mrb[0].mxu0
      %441 = vmatprep.mubr.f32.mxu0 0.0
      %442 = vmatmul.mubr.f32.gmra.mrb[0].mxu0 %v310
      %v443 = vpop.f32.mrb[0].mxu0
      %v444 = vadd.f32 0.0, %v443
      %v445 = vpop.f32.mrb[0].mxu0
      %446 = vmatprep.mubr.f32.mxu0 0.0
      %447 = vmatmul.mubr.f32.gmra.mrb[0].mxu0 %v313
      %v448 = vpop.f32.mrb[0].mxu0
      %v449 = vadd.f32 0.0, %v448
      %v450 = vpop.f32.mrb[0].mxu0
      %451 = vmatprep.mubr.f32.mxu0 0.0
      %452 = vmatmul.mubr.f32.gmra.mrb[0].mxu0 %v316
      %v453 = vpop.f32.mrb[0].mxu0
      %v454 = vadd.f32 0.0, %v453
      %v455 = vpop.f32.mrb[0].mxu0
      %456 = vmatprep.mubr.f32.mxu0 0.0
      %457 = vmatmul.mubr.f32.gmra.mrb[0].mxu0 %v319
      %v458 = vpop.f32.mrb[0].mxu0
      %v459 = vadd.f32 0.0, %v458
      %v460 = vpop.f32.mrb[0].mxu0
      %461 = vmatprep.mubr.f32.mxu0 0.0
      %462 = vmatmul.mubr.f32.gmra.mrb[0].mxu0 %v322
      %v463 = vpop.f32.mrb[0].mxu0
      %v464 = vadd.f32 0.0, %v463
      %v465 = vpop.f32.mrb[0].mxu0
      %466 = vmatprep.mubr.f32.mxu0 0.0
      %467 = vmatmul.mubr.f32.gmra.mrb[0].mxu0 %v325
      %v468 = vpop.f32.mrb[0].mxu0
      %v469 = vadd.f32 0.0, %v468
      %v470 = vpop.f32.mrb[0].mxu0
      %471 = vdwg.mxu0
      %v472 = vmax.f32 %v394, 0.0
      %v473 = vmax.f32 %v399, 0.0
      %v474 = vmax.f32 %v404, 0.0
      %v475 = vmax.f32 %v409, 0.0
      %v476 = vmax.f32 %v414, 0.0
      %v477 = vmax.f32 %v419, 0.0
      %v478 = vmax.f32 %v424, 0.0
      %v479 = vmax.f32 %v429, 0.0
      %v480 = vmax.f32 %v434, 0.0
      %v481 = vmax.f32 %v439, 0.0
      %v482 = vmax.f32 %v444, 0.0
      %v483 = vmax.f32 %v449, 0.0
      %v484 = vmax.f32 %v454, 0.0
      %v485 = vmax.f32 %v459, 0.0
      %v486 = vmax.f32 %v464, 0.0
      %v487 = vmax.f32 %v469, 0.0
      %vm488 = vcmask 31744
      %489 = vst.msk [vmem:[%s249] sm:$0xff] %vm488, %v472
      %490 = vst.msk [vmem:[%s249 + $0x8] sm:$0xff] %vm488, %v473
      %491 = vst.msk [vmem:[%s249 + $0x10] sm:$0xff] %vm488, %v474
      %492 = vst.msk [vmem:[%s249 + $0x18] sm:$0xff] %vm488, %v475
      %493 = vst.msk [vmem:[%s249 + $0x20] sm:$0xff] %vm488, %v476
      %494 = vst.msk [vmem:[%s249 + $0x28] sm:$0xff] %vm488, %v477
      %495 = vst.msk [vmem:[%s249 + $0x30] sm:$0xff] %vm488, %v478
      %496 = vst.msk [vmem:[%s249 + $0x38] sm:$0xff] %vm488, %v479
      %497 = vst.msk [vmem:[%s249 + $0x40] sm:$0xff] %vm488, %v480
      %498 = vst.msk [vmem:[%s249 + $0x48] sm:$0xff] %vm488, %v481
      %499 = vst.msk [vmem:[%s249 + $0x50] sm:$0xff] %vm488, %v482
      %500 = vst.msk [vmem:[%s249 + $0x58] sm:$0xff] %vm488, %v483
      %501 = vst.msk [vmem:[%s249 + $0x60] sm:$0xff] %vm488, %v484
      %502 = vst.msk [vmem:[%s249 + $0x68] sm:$0xff] %vm488, %v485
      %503 = vst.msk [vmem:[%s249 + $0x70] sm:$0xff] %vm488, %v486
      %504 = vst.msk [vmem:[%s249 + $0x78] sm:$0xff] %vm488, %v487
      %v505 = vld [vmem:[%s2] sm:$0xff]
      %506 = vmatprep.subr.mxu0 0.0
      %507 = vmatpush1.msra.mxu0 %v505
      %508 = vmatprep.subr.mxu0 0.0
      %509 = vmatpush1.msra.mxu0 0.0
      %510 = vmatprep.subr.mxu0 0.0
      %511 = vmatpush1.msra.mxu0 0.0
      %512 = vmatprep.subr.mxu0 0.0
      %513 = vmatpush1.msra.mxu0 0.0
      %514 = vmatprep.subr.mxu0 0.0
      %515 = vmatpush1.msra.mxu0 0.0
      %516 = vmatprep.subr.mxu0 0.0
      %517 = vmatpush1.msra.mxu0 0.0
      %518 = vmatprep.subr.mxu0 0.0
      %519 = vmatpush1.msra.mxu0 0.0
      %520 = vmatprep.subr.mxu0 0.0
      %521 = vmatpush1.msra.mxu0 0.0
      %522 = vmatprep.subr.mxu0 0.0
      %523 = vmatpush1.msra.mxu0 0.0
      %524 = vmatprep.subr.mxu0 0.0
      %525 = vmatpush1.msra.mxu0 0.0
      %526 = vmatprep.subr.mxu0 0.0
      %527 = vmatpush1.msra.mxu0 0.0
      %528 = vmatprep.subr.mxu0 0.0
      %529 = vmatpush1.msra.mxu0 0.0
      %530 = vmatprep.subr.mxu0 0.0
      %531 = vmatpush1.msra.mxu0 0.0
      %532 = vmatprep.subr.mxu0 0.0
      %533 = vmatpush1.msra.mxu0 0.0
      %534 = vmatprep.subr.mxu0 0.0
      %535 = vmatpush1.msra.mxu0 0.0
      %536 = vmatprep.subr.mxu0 0.0
      %537 = vmatpush1.msra.mxu0 0.0
      %538 = vmatprep.subr.mxu0 0.0
      %539 = vmatpush1.msra.mxu0 0.0
      %540 = vmatprep.subr.mxu0 0.0
      %541 = vmatpush1.msra.mxu0 0.0
      %542 = vmatprep.subr.mxu0 0.0
      %543 = vmatpush1.msra.mxu0 0.0
      %544 = vmatprep.subr.mxu0 0.0
      %545 = vmatpush1.msra.mxu0 0.0
      %546 = vmatprep.subr.mxu0 0.0
      %547 = vmatpush1.msra.mxu0 0.0
      %548 = vmatprep.subr.mxu0 0.0
      %549 = vmatpush1.msra.mxu0 0.0
      %550 = vmatprep.subr.mxu0 0.0
      %551 = vmatpush1.msra.mxu0 0.0
      %552 = vmatprep.subr.mxu0 0.0
      %553 = vmatpush1.msra.mxu0 0.0
      %554 = vmatprep.subr.mxu0 0.0
      %555 = vmatpush1.msra.mxu0 0.0
      %556 = vmatprep.subr.mxu0 0.0
      %557 = vmatpush1.msra.mxu0 0.0
      %558 = vmatprep.subr.mxu0 0.0
      %559 = vmatpush1.msra.mxu0 0.0
      %560 = vmatprep.subr.mxu0 0.0
      %561 = vmatpush1.msra.mxu0 0.0
      %562 = vmatprep.subr.mxu0 0.0
      %563 = vmatpush1.msra.mxu0 0.0
      %564 = vmatprep.subr.mxu0 0.0
      %565 = vmatpush1.msra.mxu0 0.0
      %566 = vmatprep.subr.mxu0 0.0
      %567 = vmatpush1.msra.mxu0 0.0
      %568 = vmatprep.subr.mxu0 0.0
      %569 = vmatpush1.msra.mxu0 0.0
      %570 = vmatprep.mubr.f32.mxu0 0.0
      %571 = vmatmul.mubr.f32.gmra.mrb[0].mxu0 %v280
      %v572 = vpop.f32.mrb[0].mxu0
      %v573 = vadd.f32 0.0, %v572
      %v574 = vpop.f32.mrb[0].mxu0
      %575 = vmatprep.mubr.f32.mxu0 0.0
      %576 = vmatmul.mubr.f32.gmra.mrb[0].mxu0 %v283
      %v577 = vpop.f32.mrb[0].mxu0
      %v578 = vadd.f32 0.0, %v577
      %v579 = vpop.f32.mrb[0].mxu0
      %580 = vmatprep.mubr.f32.mxu0 0.0
      %581 = vmatmul.mubr.f32.gmra.mrb[0].mxu0 %v286
      %v582 = vpop.f32.mrb[0].mxu0
      %v583 = vadd.f32 0.0, %v582
      %v584 = vpop.f32.mrb[0].mxu0
      %585 = vmatprep.mubr.f32.mxu0 0.0
      %586 = vmatmul.mubr.f32.gmra.mrb[0].mxu0 %v289
      %v587 = vpop.f32.mrb[0].mxu0
      %v588 = vadd.f32 0.0, %v587
      %v589 = vpop.f32.mrb[0].mxu0
      %590 = vmatprep.mubr.f32.mxu0 0.0
      %591 = vmatmul.mubr.f32.gmra.mrb[0].mxu0 %v292
      %v592 = vpop.f32.mrb[0].mxu0
      %v593 = vadd.f32 0.0, %v592
      %v594 = vpop.f32.mrb[0].mxu0
      %595 = vmatprep.mubr.f32.mxu0 0.0
      %596 = vmatmul.mubr.f32.gmra.mrb[0].mxu0 %v295
      %v597 = vpop.f32.mrb[0].mxu0
      %v598 = vadd.f32 0.0, %v597
      %v599 = vpop.f32.mrb[0].mxu0
      %600 = vmatprep.mubr.f32.mxu0 0.0
      %601 = vmatmul.mubr.f32.gmra.mrb[0].mxu0 %v298
      %v602 = vpop.f32.mrb[0].mxu0
      %v603 = vadd.f32 0.0, %v602
      %v604 = vpop.f32.mrb[0].mxu0
      %605 = vmatprep.mubr.f32.mxu0 0.0
      %606 = vmatmul.mubr.f32.gmra.mrb[0].mxu0 %v301
      %v607 = vpop.f32.mrb[0].mxu0
      %v608 = vadd.f32 0.0, %v607
      %v609 = vpop.f32.mrb[0].mxu0
      %610 = vmatprep.mubr.f32.mxu0 0.0
      %611 = vmatmul.mubr.f32.gmra.mrb[0].mxu0 %v304
      %v612 = vpop.f32.mrb[0].mxu0
      %v613 = vadd.f32 0.0, %v612
      %v614 = vpop.f32.mrb[0].mxu0
      %615 = vmatprep.mubr.f32.mxu0 0.0
      %616 = vmatmul.mubr.f32.gmra.mrb[0].mxu0 %v307
      %v617 = vpop.f32.mrb[0].mxu0
      %v618 = vadd.f32 0.0, %v617
      %v619 = vpop.f32.mrb[0].mxu0
      %620 = vmatprep.mubr.f32.mxu0 0.0
      %621 = vmatmul.mubr.f32.gmra.mrb[0].mxu0 %v310
      %v622 = vpop.f32.mrb[0].mxu0
      %v623 = vadd.f32 0.0, %v622
      %v624 = vpop.f32.mrb[0].mxu0
      %625 = vmatprep.mubr.f32.mxu0 0.0
      %626 = vmatmul.mubr.f32.gmra.mrb[0].mxu0 %v313
      %v627 = vpop.f32.mrb[0].mxu0
      %v628 = vadd.f32 0.0, %v627
      %v629 = vpop.f32.mrb[0].mxu0
      %630 = vmatprep.mubr.f32.mxu0 0.0
      %631 = vmatmul.mubr.f32.gmra.mrb[0].mxu0 %v316
      %v632 = vpop.f32.mrb[0].mxu0
      %v633 = vadd.f32 0.0, %v632
      %v634 = vpop.f32.mrb[0].mxu0
      %635 = vmatprep.mubr.f32.mxu0 0.0
      %636 = vmatmul.mubr.f32.gmra.mrb[0].mxu0 %v319
      %v637 = vpop.f32.mrb[0].mxu0
      %v638 = vadd.f32 0.0, %v637
      %v639 = vpop.f32.mrb[0].mxu0
      %640 = vmatprep.mubr.f32.mxu0 0.0
      %641 = vmatmul.mubr.f32.gmra.mrb[0].mxu0 %v322
      %v642 = vpop.f32.mrb[0].mxu0
      %v643 = vadd.f32 0.0, %v642
      %v644 = vpop.f32.mrb[0].mxu0
      %645 = vmatprep.mubr.f32.mxu0 0.0
      %646 = vmatmul.mubr.f32.gmra.mrb[0].mxu0 %v325
      %v647 = vpop.f32.mrb[0].mxu0
      %v648 = vadd.f32 0.0, %v647
      %v649 = vpop.f32.mrb[0].mxu0
      %650 = vdwg.mxu0
      %v651 = vmax.f32 %v573, 0.0
      %v652 = vmax.f32 %v578, 0.0
      %v653 = vmax.f32 %v583, 0.0
      %v654 = vmax.f32 %v588, 0.0
      %v655 = vmax.f32 %v593, 0.0
      %v656 = vmax.f32 %v598, 0.0
      %v657 = vmax.f32 %v603, 0.0
      %v658 = vmax.f32 %v608, 0.0
      %v659 = vmax.f32 %v613, 0.0
      %v660 = vmax.f32 %v618, 0.0
      %v661 = vmax.f32 %v623, 0.0
      %v662 = vmax.f32 %v628, 0.0
      %v663 = vmax.f32 %v633, 0.0
      %v664 = vmax.f32 %v638, 0.0
      %v665 = vmax.f32 %v643, 0.0
      %v666 = vmax.f32 %v648, 0.0
      %667 = vst.msk [vmem:[%s259] sm:$0xff] %vm488, %v651
      %668 = vst.msk [vmem:[%s259 + $0x8] sm:$0xff] %vm488, %v652
      %669 = vst.msk [vmem:[%s259 + $0x10] sm:$0xff] %vm488, %v653
      %670 = vst.msk [vmem:[%s259 + $0x18] sm:$0xff] %vm488, %v654
      %671 = vst.msk [vmem:[%s259 + $0x20] sm:$0xff] %vm488, %v655
      %672 = vst.msk [vmem:[%s259 + $0x28] sm:$0xff] %vm488, %v656
      %673 = vst.msk [vmem:[%s259 + $0x30] sm:$0xff] %vm488, %v657
      %674 = vst.msk [vmem:[%s259 + $0x38] sm:$0xff] %vm488, %v658
      %675 = vst.msk [vmem:[%s259 + $0x40] sm:$0xff] %vm488, %v659
      %676 = vst.msk [vmem:[%s259 + $0x48] sm:$0xff] %vm488, %v660
      %677 = vst.msk [vmem:[%s259 + $0x50] sm:$0xff] %vm488, %v661
      %678 = vst.msk [vmem:[%s259 + $0x58] sm:$0xff] %vm488, %v662
      %679 = vst.msk [vmem:[%s259 + $0x60] sm:$0xff] %vm488, %v663
      %680 = vst.msk [vmem:[%s259 + $0x68] sm:$0xff] %vm488, %v664
      %681 = vst.msk [vmem:[%s259 + $0x70] sm:$0xff] %vm488, %v665
      %682 = vst.msk [vmem:[%s259 + $0x78] sm:$0xff] %vm488, %v666
      %s683 = smul.u32 16, %s21
      %p684 = scmp.lt.s32.totalorder %s20, 1
      %s685 = scalar_select %p684, %s20, 1
      %p686 = scmp.lt.s32.totalorder %s683, 31
      %s687 = scalar_select %p686, %s683, 31
      %s688 = smul.addr %s685, 32
      %s689 = sadd.s32 %s687, %s688
      %s690 = smul.addr %s689, 8
      %s691 = scalar_lea.vmem %s3, %s690
      %s692 = smul.u32 16, %s21
      %p693 = scmp.lt.s32.totalorder %s20, 1
      %s694 = scalar_select %p693, %s20, 1
      %p695 = scmp.lt.s32.totalorder %s692, 31
      %s696 = scalar_select %p695, %s692, 31
      %s697 = smul.addr %s694, 32
      %s698 = sadd.s32 %s696, %s697
      %s699 = smul.addr %s698, 8
      %s700 = scalar_lea.vmem %s4, %s699
      // Predicated region
      $region33: #{snl_stage_forward.12} parent=31 // pred_check
        %p701 = pneg %p118
      $region34: #{snl_stage_forward.12} parent=31 // pred_check_branch
        %703 = sbr.rel (%p701) target = $region36
      $region35: #{snl_stage_forward.12} parent=31 // pred_region
        %s704 = smul.u32 16, %s21
      $region36: #{snl_stage_forward.12} parent=31 // pred_fallthru
        _
      // Predicated region
      $region37: #{snl_stage_forward.12} parent=31 // pred_check
        %p705 = pneg %p146
      $region38: #{snl_stage_forward.12} parent=31 // pred_check_branch
        %707 = sbr.rel (%p705) target = $region40
      $region39: #{snl_stage_forward.12} parent=31 // pred_region
        %s708 = smul.u32 16, %s21
      $region40: #{snl_stage_forward.12} parent=31 // pred_fallthru
        _
    $region32: #{snl_stage_forward.12} parent=5 // pred_fallthru
      _
    %p709 = scmp.le.s32.totalorder 2, %s11
    // Predicated region
    $region41: #{snl_stage_forward.12} parent=5 // pred_check
      %p710 = pneg %p709
    $region42: #{snl_stage_forward.12} parent=5 // pred_check_branch
      %712 = sbr.rel (%p710) target = $region44
    $region43: #{snl_stage_forward.12} parent=5 // pred_region
      %s713 = ssub.s32 %s11, 2
      // Predicated region
      $region45: #{snl_stage_forward.12} parent=43 // pred_check
        %p714 = pneg %p124
      $region46: #{snl_stage_forward.12} parent=43 // pred_check_branch
        %716 = sbr.rel (%p714) target = $region48
      $region47: #{snl_stage_forward.12} parent=43 // pred_region
        %s717 = smul.u32 16, %s23
        %p718 = scmp.lt.s32.totalorder %s22, 1
        %s719 = scalar_select %p718, %s22, 1
        %p720 = scmp.lt.s32.totalorder %s717, 31
        %s721 = scalar_select %p720, %s717, 31
        %s722 = smul.addr %s719, 32
        %s723 = sadd.s32 %s721, %s722
        %s724 = smul.addr %s723, 8
        %s725 = scalar_lea.vmem %s3, %s724
      $region48: #{snl_stage_forward.12} parent=43 // pred_fallthru
        _
      // Predicated region
      $region49: #{snl_stage_forward.12} parent=43 // pred_check
        %p726 = pneg %p152
      $region50: #{snl_stage_forward.12} parent=43 // pred_check_branch
        %728 = sbr.rel (%p726) target = $region52
      $region51: #{snl_stage_forward.12} parent=43 // pred_region
        %s729 = smul.u32 16, %s23
        %p730 = scmp.lt.s32.totalorder %s22, 1
        %s731 = scalar_select %p730, %s22, 1
        %p732 = scmp.lt.s32.totalorder %s729, 31
        %s733 = scalar_select %p732, %s729, 31
        %s734 = smul.addr %s731, 32
        %s735 = sadd.s32 %s733, %s734
        %s736 = smul.addr %s735, 8
        %s737 = scalar_lea.vmem %s4, %s736
      $region52: #{snl_stage_forward.12} parent=43 // pred_fallthru
        _
    $region44: #{snl_stage_forward.12} parent=5 // pred_fallthru
      _
  $region6: #{snl_stage_forward.12} parent=0 // loop_footer
    %s15 = sadd.s32 1, %s11
  $region7: #{snl_stage_forward.12} parent=0 // loop_footer_branch
    %10 = sbr.rel target = $region3
  $region8: #{snl_stage_forward.12} parent=0 // loop_exit
    _

// kernel: snl_stage_forward.15
$region0: #{snl_stage_forward.15}
  #allocation0 [shape = 'u32[]', space=smem, size = 0x4, offset = 0x4, fixed_abs, tag = 'smem constant byte address 0x4 - core index']
  #allocation1 [shape = 'u32[144,128]{1,0:T(1,128)}', space=vmem, size = 0x12000, scoped, tag = 'internal scratch']
  %s0 = inlined_call_operand.vmem [shape: f32[2,256,8], index: 0, kind: input, shape index: {}]
  %s1 = inlined_call_operand.vmem [shape: f32[2,256,8], index: 1, kind: input, shape index: {}, may-alias: {1,4}]
  %s2 = inlined_call_operand.vmem [shape: f32[1,8], index: 2, kind: input, shape index: {}]
  %s3 = inlined_call_operand.vmem [shape: f32[1,8], index: 3, kind: input, shape index: {}]
  %s4 = inlined_call_operand.vmem [shape: f32[2,256,8], index: 4, kind: output, shape index: {}, may-alias: {1,4}]
  %s5 = sld [smem:[#allocation0]]
  $region49: #{snl_stage_forward.15} parent=0
    _
  %s7 = ssub.s32 1, %s5
  %s8 = scalar_select 0, %s7, %s5
  loop: start=0, step=1, limit=6
  $region2: #{snl_stage_forward.15} parent=0 // loop_pre_header
    _
  $region3: #{snl_stage_forward.15} parent=0 // loop_header
    %s10 = sphi 0, %s14
    %p11 = scmp.ge.s32.totalorder %s10, 6
    %s17 = sphi 0, %s29
    %s18 = sphi 0, %s25
    %s19 = sphi 0, %s17
    %s20 = sphi 0, %s18
    %s21 = sphi 0, %s19
    %s22 = sphi 0, %s20
    %s34 = sphi 0, %s36
    %s37 = sphi 0, %s34
    %s38 = sphi 0, %s37
    %s54 = sphi 0, %s38
    %s62 = sphi 0, %s64
    %s65 = sphi 0, %s62
    %s66 = sphi 0, %s65
    %s82 = sphi 0, %s66
    %s86 = sphi 0, %s86
    %s88 = sphi 0, %s86
    %s89 = sphi 0, %s88
    %s103 = sphi 0, %s89
    %s107 = sphi 0, %s107
    %s109 = sphi 0, %s107
    %s110 = sphi 0, %s109
    %s124 = sphi 0, %s110
    %s132 = sphi 0, %s134
    %s135 = sphi 0, %s132
    %s136 = sphi 0, %s135
    %s152 = sphi 0, %s136
  $region4: #{snl_stage_forward.15} parent=0 // loop_header_branch
    %13 = sbr.rel (%p11) target = $region8
  $region5: #{snl_stage_forward.15} parent=0 // loop_body
    %s15 = ssub.s32 %s10, 1
    %s16 = ssub.s32 %s10, 2
    %s23 = sadd.s32 1, %s18
    %p24 = scmp.ge.s32.totalorder %s23, 2
    %s25 = scalar_select %p24, 0, %s23
    %s26 = sadd.s32 1, %s17
    %s27 = scalar_select %p24, %s26, %s17
    %p28 = scmp.ge.s32.totalorder %s27, 2
    %s29 = scalar_select %p28, 0, %s27
    %s30 = ssub.s32 %s17, %s29
    %s31 = ssub.s32 %s18, %s25
    %s32 = sor.u32 %s30, %s31
    %p33 = scmp.eq.s32.totalorder %s32, 0
    %s35 = sadd.s32 %s34, 1
    %s36 = scalar_select %p33, %s34, %s35
    %p39 = pneg %p33
    %p40 = scmp.eq.s32.totalorder %s10, 3
    %p41 = por %p39, %p40
    %p42 = scmp.ne.s32.totalorder %s34, %s37
    %p43 = scmp.eq.s32.totalorder %s10, 0
    %p44 = por %p42, %p43
    %p45 = scmp.ne.s32.totalorder %s34, %s37
    %p46 = scmp.eq.s32.totalorder %s15, 3
    %p47 = por %p45, %p46
    %p48 = scmp.ne.s32.totalorder %s37, %s38
    %p49 = scmp.eq.s32.totalorder %s15, 0
    %p50 = por %p48, %p49
    %p51 = scmp.ne.s32.totalorder %s37, %s38
    %p52 = scmp.eq.s32.totalorder %s16, 3
    %p53 = por %p51, %p52
    %p55 = scmp.ne.s32.totalorder %s38, %s54
    %p56 = scmp.eq.s32.totalorder %s16, 0
    %p57 = por %p55, %p56
    %s58 = ssub.s32 %s17, %s29
    %s59 = ssub.s32 %s18, %s25
    %s60 = sor.u32 %s58, %s59
    %p61 = scmp.eq.s32.totalorder %s60, 0
    %s63 = sadd.s32 %s62, 1
    %s64 = scalar_select %p61, %s62, %s63
    %p67 = pneg %p61
    %p68 = scmp.eq.s32.totalorder %s10, 3
    %p69 = por %p67, %p68
    %p70 = scmp.ne.s32.totalorder %s62, %s65
    %p71 = scmp.eq.s32.totalorder %s10, 0
    %p72 = por %p70, %p71
    %p73 = scmp.ne.s32.totalorder %s62, %s65
    %p74 = scmp.eq.s32.totalorder %s15, 3
    %p75 = por %p73, %p74
    %p76 = scmp.ne.s32.totalorder %s65, %s66
    %p77 = scmp.eq.s32.totalorder %s15, 0
    %p78 = por %p76, %p77
    %p79 = scmp.ne.s32.totalorder %s65, %s66
    %p80 = scmp.eq.s32.totalorder %s16, 3
    %p81 = por %p79, %p80
    %p83 = scmp.ne.s32.totalorder %s66, %s82
    %p84 = scmp.eq.s32.totalorder %s16, 0
    %p85 = por %p83, %p84
    %s87 = sadd.s32 %s86, 1
    %p90 = scmp.eq.s32.totalorder %s10, 3
    %p91 = scmp.ne.s32.totalorder %s86, %s88
    %p92 = scmp.eq.s32.totalorder %s10, 0
    %p93 = por %p91, %p92
    %p94 = scmp.ne.s32.totalorder %s86, %s88
    %p95 = scmp.eq.s32.totalorder %s15, 3
    %p96 = por %p94, %p95
    %p97 = scmp.ne.s32.totalorder %s88, %s89
    %p98 = scmp.eq.s32.totalorder %s15, 0
    %p99 = por %p97, %p98
    %p100 = scmp.ne.s32.totalorder %s88, %s89
    %p101 = scmp.eq.s32.totalorder %s16, 3
    %p102 = por %p100, %p101
    %p104 = scmp.ne.s32.totalorder %s89, %s103
    %p105 = scmp.eq.s32.totalorder %s16, 0
    %p106 = por %p104, %p105
    %s108 = sadd.s32 %s107, 1
    %p111 = scmp.eq.s32.totalorder %s10, 3
    %p112 = scmp.ne.s32.totalorder %s107, %s109
    %p113 = scmp.eq.s32.totalorder %s10, 0
    %p114 = por %p112, %p113
    %p115 = scmp.ne.s32.totalorder %s107, %s109
    %p116 = scmp.eq.s32.totalorder %s15, 3
    %p117 = por %p115, %p116
    %p118 = scmp.ne.s32.totalorder %s109, %s110
    %p119 = scmp.eq.s32.totalorder %s15, 0
    %p120 = por %p118, %p119
    %p121 = scmp.ne.s32.totalorder %s109, %s110
    %p122 = scmp.eq.s32.totalorder %s16, 3
    %p123 = por %p121, %p122
    %p125 = scmp.ne.s32.totalorder %s110, %s124
    %p126 = scmp.eq.s32.totalorder %s16, 0
    %p127 = por %p125, %p126
    %s128 = ssub.s32 %s17, %s29
    %s129 = ssub.s32 %s18, %s25
    %s130 = sor.u32 %s128, %s129
    %p131 = scmp.eq.s32.totalorder %s130, 0
    %s133 = sadd.s32 %s132, 1
    %s134 = scalar_select %p131, %s132, %s133
    %p137 = pneg %p131
    %p138 = scmp.eq.s32.totalorder %s10, 3
    %p139 = por %p137, %p138
    %p140 = scmp.ne.s32.totalorder %s132, %s135
    %p141 = scmp.eq.s32.totalorder %s10, 0
    %p142 = por %p140, %p141
    %p143 = scmp.ne.s32.totalorder %s132, %s135
    %p144 = scmp.eq.s32.totalorder %s15, 3
    %p145 = por %p143, %p144
    %p146 = scmp.ne.s32.totalorder %s135, %s136
    %p147 = scmp.eq.s32.totalorder %s15, 0
    %p148 = por %p146, %p147
    %p149 = scmp.ne.s32.totalorder %s135, %s136
    %p150 = scmp.eq.s32.totalorder %s16, 3
    %p151 = por %p149, %p150
    %p153 = scmp.ne.s32.totalorder %s136, %s152
    %p154 = scmp.eq.s32.totalorder %s16, 0
    %p155 = por %p153, %p154
    %p156 = scmp.le.s32.totalorder 1, %s10
    %p157 = scmp.lt.s32.totalorder %s10, 5
    %p158 = pnand %p156, %p157
    %p159 = pneg %p158
    // Predicated region
    $region9: #{snl_stage_forward.15} parent=5 // pred_check
      _
    $region10: #{snl_stage_forward.15} parent=5 // pred_check_branch
      %161 = sbr.rel (%p158) target = $region12
    $region11: #{snl_stage_forward.15} parent=5 // pred_region
      %s162 = ssub.s32 %s10, 1
      // Predicated region
      $region13: #{snl_stage_forward.15} parent=11 // pred_check
        %p163 = pneg %p99
      $region14: #{snl_stage_forward.15} parent=11 // pred_check_branch
        %165 = sbr.rel (%p163) target = $region16
      $region15: #{snl_stage_forward.15} parent=11 // pred_region
        _
      $region16: #{snl_stage_forward.15} parent=11 // pred_fallthru
        _
      // Predicated region
      $region17: #{snl_stage_forward.15} parent=11 // pred_check
        %p166 = pneg %p120
      $region18: #{snl_stage_forward.15} parent=11 // pred_check_branch
        %168 = sbr.rel (%p166) target = $region20
      $region19: #{snl_stage_forward.15} parent=11 // pred_region
        _
      $region20: #{snl_stage_forward.15} parent=11 // pred_fallthru
        _
    $region12: #{snl_stage_forward.15} parent=5 // pred_fallthru
      _
    %p169 = scmp.lt.s32.totalorder %s10, 4
    // Predicated region
    $region21: #{snl_stage_forward.15} parent=5 // pred_check
      %p170 = pneg %p169
    $region22: #{snl_stage_forward.15} parent=5 // pred_check_branch
      %172 = sbr.rel (%p170) target = $region24
    $region23: #{snl_stage_forward.15} parent=5 // pred_region
      // Predicated region
      $region25: #{snl_stage_forward.15} parent=23 // pred_check
        %p173 = pneg %p44
      $region26: #{snl_stage_forward.15} parent=23 // pred_check_branch
        %175 = sbr.rel (%p173) target = $region28
      $region27: #{snl_stage_forward.15} parent=23 // pred_region
        %s176 = smul.u32 16, %s18
        %p177 = scmp.lt.s32.totalorder %s17, 1
        %s178 = scalar_select %p177, %s17, 1
        %p179 = scmp.lt.s32.totalorder %s176, 31
        %s180 = scalar_select %p179, %s176, 31
        %s181 = smul.addr %s178, 32
        %s182 = sadd.s32 %s180, %s181
        %s183 = smul.addr %s182, 8
        %s184 = scalar_lea.vmem %s0, %s183
        %s185 = smul.u32 16, %s18
      $region28: #{snl_stage_forward.15} parent=23 // pred_fallthru
        _
      // Predicated region
      $region29: #{snl_stage_forward.15} parent=23 // pred_check
        %p186 = pneg %p72
      $region30: #{snl_stage_forward.15} parent=23 // pred_check_branch
        %188 = sbr.rel (%p186) target = $region32
      $region31: #{snl_stage_forward.15} parent=23 // pred_region
        %s189 = smul.u32 16, %s18
        %p190 = scmp.lt.s32.totalorder %s17, 1
        %s191 = scalar_select %p190, %s17, 1
        %p192 = scmp.lt.s32.totalorder %s189, 31
        %s193 = scalar_select %p192, %s189, 31
        %s194 = smul.addr %s191, 32
        %s195 = sadd.s32 %s193, %s194
        %s196 = smul.addr %s195, 8
        %s197 = scalar_lea.vmem %s1, %s196
        %s198 = smul.u32 16, %s18
      $region32: #{snl_stage_forward.15} parent=23 // pred_fallthru
        _
    $region24: #{snl_stage_forward.15} parent=5 // pred_fallthru
      _
    %p199 = scmp.le.s32.totalorder 1, %s10
    %p200 = scmp.lt.s32.totalorder %s10, 5
    %p201 = pnand %p199, %p200
    %p202 = pneg %p201
    // Predicated region
    $region33: #{snl_stage_forward.15} parent=5 // pred_check
      _
    $region34: #{snl_stage_forward.15} parent=5 // pred_check_branch
      %204 = sbr.rel (%p201) target = $region36
    $region35: #{snl_stage_forward.15} parent=5 // pred_region
      %s205 = ssub.s32 %s10, 1
      %s206 = smul.u32 16, %s20
      %p207 = scmp.lt.s32.totalorder %s19, 1
      %s208 = scalar_select %p207, %s19, 1
      %p209 = scmp.lt.s32.totalorder %s206, 31
      %s210 = scalar_select %p209, %s206, 31
      %s211 = smul.addr %s208, 32
      %s212 = sadd.s32 %s210, %s211
      %s213 = smul.addr %s212, 8
      %s214 = scalar_lea.vmem %s0, %s213
      %p215 = pneg %p50
      %p216 = pneg %p47
      %s217 = smul.u32 16, %s20
      %p218 = scmp.lt.s32.totalorder %s19, 1
      %s219 = scalar_select %p218, %s19, 1
      %p220 = scmp.lt.s32.totalorder %s217, 31
      %s221 = scalar_select %p220, %s217, 31
      %s222 = smul.addr %s219, 32
      %s223 = sadd.s32 %s221, %s222
      %s224 = smul.addr %s223, 8
      %s225 = scalar_lea.vmem %s1, %s224
      %p226 = pneg %p78
      %p227 = pneg %p75
      %p228 = pneg %p99
      %p229 = pneg %p96
      %p230 = pneg %p120
      %p231 = pneg %p117
      %p232 = pneg %p148
      %p233 = pneg %p145
      %s234 = smul.u32 16, %s20
      %p235 = scmp.lt.s32.totalorder %s19, 1
      %s236 = scalar_select %p235, %s19, 1
      %p237 = scmp.lt.s32.totalorder %s234, 31
      %s238 = scalar_select %p237, %s234, 31
      %s239 = smul.addr %s236, 32
      %s240 = sadd.s32 %s238, %s239
      %s241 = smul.addr %s240, 8
      %s242 = scalar_lea.vmem %s4, %s241
      %s243 = smul.u32 16, %s20
      %p244 = scmp.lt.s32.totalorder %s19, 1
      %s245 = scalar_select %p244, %s19, 1
      %p246 = scmp.lt.s32.totalorder %s243, 31
      %s247 = scalar_select %p246, %s243, 31
      %s248 = smul.addr %s245, 32
      %s249 = sadd.s32 %s247, %s248
      %s250 = smul.addr %s249, 8
      %s251 = scalar_lea.vmem %s0, %s250
      %s252 = smul.u32 16, %s20
      %s253 = smul.u32 16, %s20
      %p254 = scmp.lt.s32.totalorder %s19, 1
      %s255 = scalar_select %p254, %s19, 1
      %p256 = scmp.lt.s32.totalorder %s253, 31
      %s257 = scalar_select %p256, %s253, 31
      %s258 = smul.addr %s255, 32
      %s259 = sadd.s32 %s257, %s258
      %s260 = smul.addr %s259, 8
      %s261 = scalar_lea.vmem %s1, %s260
      %s262 = smul.u32 16, %s20
      %s263 = smul.u32 16, %s20
      %p264 = scmp.lt.s32.totalorder %s19, 1
      %s265 = scalar_select %p264, %s19, 1
      %p266 = scmp.lt.s32.totalorder %s263, 31
      %s267 = scalar_select %p266, %s263, 31
      %s268 = smul.addr %s265, 32
      %s269 = sadd.s32 %s267, %s268
      %s270 = smul.addr %s269, 8
      %s271 = scalar_lea.vmem %s4, %s270
      %s272 = smul.u32 16, %s20
      %v273 = vld [vmem:[%s251] sm:$0xff]
      %v274 = vld [vmem:[%s251 + $0x8] sm:$0xff]
      %v275 = vld [vmem:[%s251 + $0x10] sm:$0xff]
      %v276 = vld [vmem:[%s251 + $0x18] sm:$0xff]
      %v277 = vld [vmem:[%s251 + $0x20] sm:$0xff]
      %v278 = vld [vmem:[%s251 + $0x28] sm:$0xff]
      %v279 = vld [vmem:[%s251 + $0x30] sm:$0xff]
      %v280 = vld [vmem:[%s251 + $0x38] sm:$0xff]
      %v281 = vld [vmem:[%s251 + $0x40] sm:$0xff]
      %v282 = vld [vmem:[%s251 + $0x48] sm:$0xff]
      %v283 = vld [vmem:[%s251 + $0x50] sm:$0xff]
      %v284 = vld [vmem:[%s251 + $0x58] sm:$0xff]
      %v285 = vld [vmem:[%s251 + $0x60] sm:$0xff]
      %v286 = vld [vmem:[%s251 + $0x68] sm:$0xff]
      %v287 = vld [vmem:[%s251 + $0x70] sm:$0xff]
      %v288 = vld [vmem:[%s251 + $0x78] sm:$0xff]
      %v289 = vld [vmem:[%s2] sm:$0x1]
      %v291 = vlaneseq
      %v292 = vshrl.u32 %v291, 7
      %v293 = vsub.s32 0, %v292
      %v294 = vrot.slane %v289, %v293
      %v296 = vmul.f32 %v273, %v294
      %v297 = vmul.f32 %v274, %v294
      %v298 = vmul.f32 %v275, %v294
      %v299 = vmul.f32 %v276, %v294
      %v300 = vmul.f32 %v277, %v294
      %v301 = vmul.f32 %v278, %v294
      %v302 = vmul.f32 %v279, %v294
      %v303 = vmul.f32 %v280, %v294
      %v304 = vmul.f32 %v281, %v294
      %v305 = vmul.f32 %v282, %v294
      %v306 = vmul.f32 %v283, %v294
      %v307 = vmul.f32 %v284, %v294
      %v308 = vmul.f32 %v285, %v294
      %v309 = vmul.f32 %v286, %v294
      %v310 = vmul.f32 %v287, %v294
      %v311 = vmul.f32 %v288, %v294
      %v312 = vld [vmem:[%s3] sm:$0x1]
      %v314 = vlaneseq
      %v315 = vshrl.u32 %v314, 7
      %v316 = vsub.s32 0, %v315
      %v317 = vrot.slane %v312, %v316
      %v319 = vadd.f32 %v296, %v317
      %v320 = vadd.f32 %v297, %v317
      %v321 = vadd.f32 %v298, %v317
      %v322 = vadd.f32 %v299, %v317
      %v323 = vadd.f32 %v300, %v317
      %v324 = vadd.f32 %v301, %v317
      %v325 = vadd.f32 %v302, %v317
      %v326 = vadd.f32 %v303, %v317
      %v327 = vadd.f32 %v304, %v317
      %v328 = vadd.f32 %v305, %v317
      %v329 = vadd.f32 %v306, %v317
      %v330 = vadd.f32 %v307, %v317
      %v331 = vadd.f32 %v308, %v317
      %v332 = vadd.f32 %v309, %v317
      %v333 = vadd.f32 %v310, %v317
      %v334 = vadd.f32 %v311, %v317
      %v335 = vld [vmem:[%s261] sm:$0xff]
      %v336 = vld [vmem:[%s261 + $0x8] sm:$0xff]
      %v337 = vld [vmem:[%s261 + $0x10] sm:$0xff]
      %v338 = vld [vmem:[%s261 + $0x18] sm:$0xff]
      %v339 = vld [vmem:[%s261 + $0x20] sm:$0xff]
      %v340 = vld [vmem:[%s261 + $0x28] sm:$0xff]
      %v341 = vld [vmem:[%s261 + $0x30] sm:$0xff]
      %v342 = vld [vmem:[%s261 + $0x38] sm:$0xff]
      %v343 = vld [vmem:[%s261 + $0x40] sm:$0xff]
      %v344 = vld [vmem:[%s261 + $0x48] sm:$0xff]
      %v345 = vld [vmem:[%s261 + $0x50] sm:$0xff]
      %v346 = vld [vmem:[%s261 + $0x58] sm:$0xff]
      %v347 = vld [vmem:[%s261 + $0x60] sm:$0xff]
      %v348 = vld [vmem:[%s261 + $0x68] sm:$0xff]
      %v349 = vld [vmem:[%s261 + $0x70] sm:$0xff]
      %v350 = vld [vmem:[%s261 + $0x78] sm:$0xff]
      %v351 = vadd.f32 %v319, %v335
      %v352 = vadd.f32 %v320, %v336
      %v353 = vadd.f32 %v321, %v337
      %v354 = vadd.f32 %v322, %v338
      %v355 = vadd.f32 %v323, %v339
      %v356 = vadd.f32 %v324, %v340
      %v357 = vadd.f32 %v325, %v341
      %v358 = vadd.f32 %v326, %v342
      %v359 = vadd.f32 %v327, %v343
      %v360 = vadd.f32 %v328, %v344
      %v361 = vadd.f32 %v329, %v345
      %v362 = vadd.f32 %v330, %v346
      %v363 = vadd.f32 %v331, %v347
      %v364 = vadd.f32 %v332, %v348
      %v365 = vadd.f32 %v333, %v349
      %v366 = vadd.f32 %v334, %v350
      %vm367 = vcmask 64512
      %368 = vst.msk [vmem:[%s271] sm:$0xff] %vm367, %v351
      %369 = vst.msk [vmem:[%s271 + $0x8] sm:$0xff] %vm367, %v352
      %370 = vst.msk [vmem:[%s271 + $0x10] sm:$0xff] %vm367, %v353
      %371 = vst.msk [vmem:[%s271 + $0x18] sm:$0xff] %vm367, %v354
      %372 = vst.msk [vmem:[%s271 + $0x20] sm:$0xff] %vm367, %v355
      %373 = vst.msk [vmem:[%s271 + $0x28] sm:$0xff] %vm367, %v356
      %374 = vst.msk [vmem:[%s271 + $0x30] sm:$0xff] %vm367, %v357
      %375 = vst.msk [vmem:[%s271 + $0x38] sm:$0xff] %vm367, %v358
      %376 = vst.msk [vmem:[%s271 + $0x40] sm:$0xff] %vm367, %v359
      %377 = vst.msk [vmem:[%s271 + $0x48] sm:$0xff] %vm367, %v360
      %378 = vst.msk [vmem:[%s271 + $0x50] sm:$0xff] %vm367, %v361
      %379 = vst.msk [vmem:[%s271 + $0x58] sm:$0xff] %vm367, %v362
      %380 = vst.msk [vmem:[%s271 + $0x60] sm:$0xff] %vm367, %v363
      %381 = vst.msk [vmem:[%s271 + $0x68] sm:$0xff] %vm367, %v364
      %382 = vst.msk [vmem:[%s271 + $0x70] sm:$0xff] %vm367, %v365
      %383 = vst.msk [vmem:[%s271 + $0x78] sm:$0xff] %vm367, %v366
      %s384 = smul.u32 16, %s20
      %p385 = scmp.lt.s32.totalorder %s19, 1
      %s386 = scalar_select %p385, %s19, 1
      %p387 = scmp.lt.s32.totalorder %s384, 31
      %s388 = scalar_select %p387, %s384, 31
      %s389 = smul.addr %s386, 32
      %s390 = sadd.s32 %s388, %s389
      %s391 = smul.addr %s390, 8
      %s392 = scalar_lea.vmem %s4, %s391
      // Predicated region
      $region37: #{snl_stage_forward.15} parent=35 // pred_check
        %p393 = pneg %p145
      $region38: #{snl_stage_forward.15} parent=35 // pred_check_branch
        %395 = sbr.rel (%p393) target = $region40
      $region39: #{snl_stage_forward.15} parent=35 // pred_region
        %s396 = smul.u32 16, %s20
      $region40: #{snl_stage_forward.15} parent=35 // pred_fallthru
        _
    $region36: #{snl_stage_forward.15} parent=5 // pred_fallthru
      _
    %p397 = scmp.le.s32.totalorder 2, %s10
    // Predicated region
    $region41: #{snl_stage_forward.15} parent=5 // pred_check
      %p398 = pneg %p397
    $region42: #{snl_stage_forward.15} parent=5 // pred_check_branch
      %400 = sbr.rel (%p398) target = $region44
    $region43: #{snl_stage_forward.15} parent=5 // pred_region
      %s401 = ssub.s32 %s10, 2
      // Predicated region
      $region45: #{snl_stage_forward.15} parent=43 // pred_check
        %p402 = pneg %p151
      $region46: #{snl_stage_forward.15} parent=43 // pred_check_branch
        %404 = sbr.rel (%p402) target = $region48
      $region47: #{snl_stage_forward.15} parent=43 // pred_region
        %s405 = smul.u32 16, %s22
        %p406 = scmp.lt.s32.totalorder %s21, 1
        %s407 = scalar_select %p406, %s21, 1
        %p408 = scmp.lt.s32.totalorder %s405, 31
        %s409 = scalar_select %p408, %s405, 31
        %s410 = smul.addr %s407, 32
        %s411 = sadd.s32 %s409, %s410
        %s412 = smul.addr %s411, 8
        %s413 = scalar_lea.vmem %s4, %s412
      $region48: #{snl_stage_forward.15} parent=43 // pred_fallthru
        _
    $region44: #{snl_stage_forward.15} parent=5 // pred_fallthru
      _
  $region6: #{snl_stage_forward.15} parent=0 // loop_footer
    %s14 = sadd.s32 1, %s10
  $region7: #{snl_stage_forward.15} parent=0 // loop_footer_branch
    %9 = sbr.rel target = $region3
  $region8: #{snl_stage_forward.15} parent=0 // loop_exit
    _

// kernel: snl_stage_forward.14
$region0: #{snl_stage_forward.14}
  #allocation0 [shape = 'u32[]', space=smem, size = 0x4, offset = 0x4, fixed_abs, tag = 'smem constant byte address 0x4 - core index']
  #allocation1 [shape = 'u32[144,128]{1,0:T(1,128)}', space=vmem, size = 0x12000, scoped, tag = 'internal scratch']
  #allocation2 [shape = 'f32[256,8]{1,0:T(8,128)}', space=vmem, size = 0x20000, scoped, tag = 'scratch operand']
  %s0 = inlined_call_operand.vmem [shape: f32[2,256,8], index: 0, kind: input, shape index: {}]
  %s1 = inlined_call_operand.vmem [shape: f32[2,256,1], index: 1, kind: input, shape index: {}]
  %s2 = inlined_call_operand.vmem [shape: f32[2,256,256], index: 2, kind: input, shape index: {}]
  %s3 = inlined_call_operand.vmem [shape: f32[8,4], index: 3, kind: input, shape index: {}]
  %s4 = inlined_call_operand.vmem [shape: f32[4,8], index: 4, kind: input, shape index: {}]
  %s5 = inlined_call_operand.vmem [shape: f32[4,8], index: 5, kind: input, shape index: {}]
  %s6 = inlined_call_operand.vmem [shape: f32[2,256,8], index: 6, kind: output, shape index: {0}]
  %s7 = inlined_call_operand.vmem [shape: f32[2,2,1,8], index: 7, kind: output, shape index: {1}]
  %s8 = inlined_call_operand.vmem [shape: f32[2,2,1,8], index: 8, kind: output, shape index: {2}]
  %9 = xla_tuple %s6, %s7, %s8
  %s10 = sld [smem:[#allocation0]]
  $region77: #{snl_stage_forward.14} parent=0
    _
  %s12 = ssub.s32 1, %s10
  %s13 = scalar_select 0, %s12, %s10
  loop: start=0, step=1, limit=6
  $region2: #{snl_stage_forward.14} parent=0 // loop_pre_header
    _
  $region3: #{snl_stage_forward.14} parent=0 // loop_header
    %s15 = sphi 0, %s19
    %p16 = scmp.ge.s32.totalorder %s15, 6
    %s22 = sphi 0, %s34
    %s23 = sphi 0, %s30
    %s24 = sphi 0, %s22
    %s25 = sphi 0, %s23
    %s26 = sphi 0, %s24
    %s27 = sphi 0, %s25
    %s37 = sphi 0, %s39
    %s40 = sphi 0, %s37
    %s41 = sphi 0, %s40
    %s57 = sphi 0, %s41
    %s63 = sphi 0, %s65
    %s66 = sphi 0, %s63
    %s67 = sphi 0, %s66
    %s83 = sphi 0, %s67
    %s91 = sphi 0, %s93
    %s94 = sphi 0, %s91
    %s95 = sphi 0, %s94
    %s111 = sphi 0, %s95
    %s115 = sphi 0, %s115
    %s117 = sphi 0, %s115
    %s118 = sphi 0, %s117
    %s132 = sphi 0, %s118
    %s136 = sphi 0, %s136
    %s138 = sphi 0, %s136
    %s139 = sphi 0, %s138
    %s153 = sphi 0, %s139
    %s157 = sphi 0, %s157
    %s159 = sphi 0, %s157
    %s160 = sphi 0, %s159
    %s174 = sphi 0, %s160
    %s182 = sphi 0, %s184
    %s185 = sphi 0, %s182
    %s186 = sphi 0, %s185
    %s202 = sphi 0, %s186
    %s210 = sphi 0, %s212
    %s213 = sphi 0, %s210
    %s214 = sphi 0, %s213
    %s230 = sphi 0, %s214
    %s238 = sphi 0, %s240
    %s241 = sphi 0, %s238
    %s242 = sphi 0, %s241
    %s258 = sphi 0, %s242
  $region4: #{snl_stage_forward.14} parent=0 // loop_header_branch
    %18 = sbr.rel (%p16) target = $region8
  $region5: #{snl_stage_forward.14} parent=0 // loop_body
    %s20 = ssub.s32 %s15, 1
    %s21 = ssub.s32 %s15, 2
    %s28 = sadd.s32 1, %s23
    %p29 = scmp.ge.s32.totalorder %s28, 2
    %s30 = scalar_select %p29, 0, %s28
    %s31 = sadd.s32 1, %s22
    %s32 = scalar_select %p29, %s31, %s22
    %p33 = scmp.ge.s32.totalorder %s32, 2
    %s34 = scalar_select %p33, 0, %s32
    %s35 = ssub.s32 %s22, %s34
    %p36 = scmp.eq.s32.totalorder %s35, 0
    %s38 = sadd.s32 %s37, 1
    %s39 = scalar_select %p36, %s37, %s38
    %p42 = pneg %p36
    %p43 = scmp.eq.s32.totalorder %s15, 3
    %p44 = por %p42, %p43
    %p45 = scmp.ne.s32.totalorder %s37, %s40
    %p46 = scmp.eq.s32.totalorder %s15, 0
    %p47 = por %p45, %p46
    %p48 = scmp.ne.s32.totalorder %s37, %s40
    %p49 = scmp.eq.s32.totalorder %s20, 3
    %p50 = por %p48, %p49
    %p51 = scmp.ne.s32.totalorder %s40, %s41
    %p52 = scmp.eq.s32.totalorder %s20, 0
    %p53 = por %p51, %p52
    %p54 = scmp.ne.s32.totalorder %s40, %s41
    %p55 = scmp.eq.s32.totalorder %s21, 3
    %p56 = por %p54, %p55
    %p58 = scmp.ne.s32.totalorder %s41, %s57
    %p59 = scmp.eq.s32.totalorder %s21, 0
    %p60 = por %p58, %p59
    %s61 = ssub.s32 %s22, %s34
    %p62 = scmp.eq.s32.totalorder %s61, 0
    %s64 = sadd.s32 %s63, 1
    %s65 = scalar_select %p62, %s63, %s64
    %p68 = pneg %p62
    %p69 = scmp.eq.s32.totalorder %s15, 3
    %p70 = por %p68, %p69
    %p71 = scmp.ne.s32.totalorder %s63, %s66
    %p72 = scmp.eq.s32.totalorder %s15, 0
    %p73 = por %p71, %p72
    %p74 = scmp.ne.s32.totalorder %s63, %s66
    %p75 = scmp.eq.s32.totalorder %s20, 3
    %p76 = por %p74, %p75
    %p77 = scmp.ne.s32.totalorder %s66, %s67
    %p78 = scmp.eq.s32.totalorder %s20, 0
    %p79 = por %p77, %p78
    %p80 = scmp.ne.s32.totalorder %s66, %s67
    %p81 = scmp.eq.s32.totalorder %s21, 3
    %p82 = por %p80, %p81
    %p84 = scmp.ne.s32.totalorder %s67, %s83
    %p85 = scmp.eq.s32.totalorder %s21, 0
    %p86 = por %p84, %p85
    %s87 = ssub.s32 %s22, %s34
    %s88 = ssub.s32 %s23, %s30
    %s89 = sor.u32 %s87, %s88
    %p90 = scmp.eq.s32.totalorder %s89, 0
    %s92 = sadd.s32 %s91, 1
    %s93 = scalar_select %p90, %s91, %s92
    %p96 = pneg %p90
    %p97 = scmp.eq.s32.totalorder %s15, 3
    %p98 = por %p96, %p97
    %p99 = scmp.ne.s32.totalorder %s91, %s94
    %p100 = scmp.eq.s32.totalorder %s15, 0
    %p101 = por %p99, %p100
    %p102 = scmp.ne.s32.totalorder %s91, %s94
    %p103 = scmp.eq.s32.totalorder %s20, 3
    %p104 = por %p102, %p103
    %p105 = scmp.ne.s32.totalorder %s94, %s95
    %p106 = scmp.eq.s32.totalorder %s20, 0
    %p107 = por %p105, %p106
    %p108 = scmp.ne.s32.totalorder %s94, %s95
    %p109 = scmp.eq.s32.totalorder %s21, 3
    %p110 = por %p108, %p109
    %p112 = scmp.ne.s32.totalorder %s95, %s111
    %p113 = scmp.eq.s32.totalorder %s21, 0
    %p114 = por %p112, %p113
    %s116 = sadd.s32 %s115, 1
    %p119 = scmp.eq.s32.totalorder %s15, 3
    %p120 = scmp.ne.s32.totalorder %s115, %s117
    %p121 = scmp.eq.s32.totalorder %s15, 0
    %p122 = por %p120, %p121
    %p123 = scmp.ne.s32.totalorder %s115, %s117
    %p124 = scmp.eq.s32.totalorder %s20, 3
    %p125 = por %p123, %p124
    %p126 = scmp.ne.s32.totalorder %s117, %s118
    %p127 = scmp.eq.s32.totalorder %s20, 0
    %p128 = por %p126, %p127
    %p129 = scmp.ne.s32.totalorder %s117, %s118
    %p130 = scmp.eq.s32.totalorder %s21, 3
    %p131 = por %p129, %p130
    %p133 = scmp.ne.s32.totalorder %s118, %s132
    %p134 = scmp.eq.s32.totalorder %s21, 0
    %p135 = por %p133, %p134
    %s137 = sadd.s32 %s136, 1
    %p140 = scmp.eq.s32.totalorder %s15, 3
    %p141 = scmp.ne.s32.totalorder %s136, %s138
    %p142 = scmp.eq.s32.totalorder %s15, 0
    %p143 = por %p141, %p142
    %p144 = scmp.ne.s32.totalorder %s136, %s138
    %p145 = scmp.eq.s32.totalorder %s20, 3
    %p146 = por %p144, %p145
    %p147 = scmp.ne.s32.totalorder %s138, %s139
    %p148 = scmp.eq.s32.totalorder %s20, 0
    %p149 = por %p147, %p148
    %p150 = scmp.ne.s32.totalorder %s138, %s139
    %p151 = scmp.eq.s32.totalorder %s21, 3
    %p152 = por %p150, %p151
    %p154 = scmp.ne.s32.totalorder %s139, %s153
    %p155 = scmp.eq.s32.totalorder %s21, 0
    %p156 = por %p154, %p155
    %s158 = sadd.s32 %s157, 1
    %p161 = scmp.eq.s32.totalorder %s15, 3
    %p162 = scmp.ne.s32.totalorder %s157, %s159
    %p163 = scmp.eq.s32.totalorder %s15, 0
    %p164 = por %p162, %p163
    %p165 = scmp.ne.s32.totalorder %s157, %s159
    %p166 = scmp.eq.s32.totalorder %s20, 3
    %p167 = por %p165, %p166
    %p168 = scmp.ne.s32.totalorder %s159, %s160
    %p169 = scmp.eq.s32.totalorder %s20, 0
    %p170 = por %p168, %p169
    %p171 = scmp.ne.s32.totalorder %s159, %s160
    %p172 = scmp.eq.s32.totalorder %s21, 3
    %p173 = por %p171, %p172
    %p175 = scmp.ne.s32.totalorder %s160, %s174
    %p176 = scmp.eq.s32.totalorder %s21, 0
    %p177 = por %p175, %p176
    %s178 = ssub.s32 %s22, %s34
    %s179 = ssub.s32 %s23, %s30
    %s180 = sor.u32 %s178, %s179
    %p181 = scmp.eq.s32.totalorder %s180, 0
    %s183 = sadd.s32 %s182, 1
    %s184 = scalar_select %p181, %s182, %s183
    %p187 = pneg %p181
    %p188 = scmp.eq.s32.totalorder %s15, 3
    %p189 = por %p187, %p188
    %p190 = scmp.ne.s32.totalorder %s182, %s185
    %p191 = scmp.eq.s32.totalorder %s15, 0
    %p192 = por %p190, %p191
    %p193 = scmp.ne.s32.totalorder %s182, %s185
    %p194 = scmp.eq.s32.totalorder %s20, 3
    %p195 = por %p193, %p194
    %p196 = scmp.ne.s32.totalorder %s185, %s186
    %p197 = scmp.eq.s32.totalorder %s20, 0
    %p198 = por %p196, %p197
    %p199 = scmp.ne.s32.totalorder %s185, %s186
    %p200 = scmp.eq.s32.totalorder %s21, 3
    %p201 = por %p199, %p200
    %p203 = scmp.ne.s32.totalorder %s186, %s202
    %p204 = scmp.eq.s32.totalorder %s21, 0
    %p205 = por %p203, %p204
    %s206 = ssub.s32 %s22, %s34
    %s207 = ssub.s32 %s23, %s30
    %s208 = sor.u32 %s206, %s207
    %p209 = scmp.eq.s32.totalorder %s208, 0
    %s211 = sadd.s32 %s210, 1
    %s212 = scalar_select %p209, %s210, %s211
    %p215 = pneg %p209
    %p216 = scmp.eq.s32.totalorder %s15, 3
    %p217 = por %p215, %p216
    %p218 = scmp.ne.s32.totalorder %s210, %s213
    %p219 = scmp.eq.s32.totalorder %s15, 0
    %p220 = por %p218, %p219
    %p221 = scmp.ne.s32.totalorder %s210, %s213
    %p222 = scmp.eq.s32.totalorder %s20, 3
    %p223 = por %p221, %p222
    %p224 = scmp.ne.s32.totalorder %s213, %s214
    %p225 = scmp.eq.s32.totalorder %s20, 0
    %p226 = por %p224, %p225
    %p227 = scmp.ne.s32.totalorder %s213, %s214
    %p228 = scmp.eq.s32.totalorder %s21, 3
    %p229 = por %p227, %p228
    %p231 = scmp.ne.s32.totalorder %s214, %s230
    %p232 = scmp.eq.s32.totalorder %s21, 0
    %p233 = por %p231, %p232
    %s234 = ssub.s32 %s22, %s34
    %s235 = ssub.s32 %s23, %s30
    %s236 = sor.u32 %s234, %s235
    %p237 = scmp.eq.s32.totalorder %s236, 0
    %s239 = sadd.s32 %s238, 1
    %s240 = scalar_select %p237, %s238, %s239
    %p243 = pneg %p237
    %p244 = scmp.eq.s32.totalorder %s15, 3
    %p245 = por %p243, %p244
    %p246 = scmp.ne.s32.totalorder %s238, %s241
    %p247 = scmp.eq.s32.totalorder %s15, 0
    %p248 = por %p246, %p247
    %p249 = scmp.ne.s32.totalorder %s238, %s241
    %p250 = scmp.eq.s32.totalorder %s20, 3
    %p251 = por %p249, %p250
    %p252 = scmp.ne.s32.totalorder %s241, %s242
    %p253 = scmp.eq.s32.totalorder %s20, 0
    %p254 = por %p252, %p253
    %p255 = scmp.ne.s32.totalorder %s241, %s242
    %p256 = scmp.eq.s32.totalorder %s21, 3
    %p257 = por %p255, %p256
    %p259 = scmp.ne.s32.totalorder %s242, %s258
    %p260 = scmp.eq.s32.totalorder %s21, 0
    %p261 = por %p259, %p260
    %p262 = scmp.le.s32.totalorder 1, %s15
    %p263 = scmp.lt.s32.totalorder %s15, 5
    %p264 = pnand %p262, %p263
    %p265 = pneg %p264
    // Predicated region
    $region9: #{snl_stage_forward.14} parent=5 // pred_check
      _
    $region10: #{snl_stage_forward.14} parent=5 // pred_check_branch
      %267 = sbr.rel (%p264) target = $region12
    $region11: #{snl_stage_forward.14} parent=5 // pred_region
      %s268 = ssub.s32 %s15, 1
      // Predicated region
      $region13: #{snl_stage_forward.14} parent=11 // pred_check
        %p269 = pneg %p128
      $region14: #{snl_stage_forward.14} parent=11 // pred_check_branch
        %271 = sbr.rel (%p269) target = $region16
      $region15: #{snl_stage_forward.14} parent=11 // pred_region
        _
      $region16: #{snl_stage_forward.14} parent=11 // pred_fallthru
        _
      // Predicated region
      $region17: #{snl_stage_forward.14} parent=11 // pred_check
        %p272 = pneg %p149
      $region18: #{snl_stage_forward.14} parent=11 // pred_check_branch
        %274 = sbr.rel (%p272) target = $region20
      $region19: #{snl_stage_forward.14} parent=11 // pred_region
        _
      $region20: #{snl_stage_forward.14} parent=11 // pred_fallthru
        _
      // Predicated region
      $region21: #{snl_stage_forward.14} parent=11 // pred_check
        %p275 = pneg %p170
      $region22: #{snl_stage_forward.14} parent=11 // pred_check_branch
        %277 = sbr.rel (%p275) target = $region24
      $region23: #{snl_stage_forward.14} parent=11 // pred_region
        _
      $region24: #{snl_stage_forward.14} parent=11 // pred_fallthru
        _
    $region12: #{snl_stage_forward.14} parent=5 // pred_fallthru
      _
    %p278 = scmp.lt.s32.totalorder %s15, 4
    // Predicated region
    $region25: #{snl_stage_forward.14} parent=5 // pred_check
      %p279 = pneg %p278
    $region26: #{snl_stage_forward.14} parent=5 // pred_check_branch
      %281 = sbr.rel (%p279) target = $region28
    $region27: #{snl_stage_forward.14} parent=5 // pred_region
      // Predicated region
      $region29: #{snl_stage_forward.14} parent=27 // pred_check
        %p282 = pneg %p47
      $region30: #{snl_stage_forward.14} parent=27 // pred_check_branch
        %284 = sbr.rel (%p282) target = $region32
      $region31: #{snl_stage_forward.14} parent=27 // pred_region
        %p285 = scmp.lt.s32.totalorder %s22, 1
        %s286 = scalar_select %p285, %s22, 1
        %s287 = smul.addr %s286, 32
        %s288 = smul.addr %s287, 8
        %s289 = scalar_lea.vmem %s0, %s288
      $region32: #{snl_stage_forward.14} parent=27 // pred_fallthru
        _
      // Predicated region
      $region33: #{snl_stage_forward.14} parent=27 // pred_check
        %p290 = pneg %p73
      $region34: #{snl_stage_forward.14} parent=27 // pred_check_branch
        %292 = sbr.rel (%p290) target = $region36
      $region35: #{snl_stage_forward.14} parent=27 // pred_region
        %p293 = scmp.lt.s32.totalorder %s22, 1
        %s294 = scalar_select %p293, %s22, 1
        %s295 = smul.addr %s294, 32
        %s296 = smul.addr %s295, 8
        %s297 = scalar_lea.vmem %s1, %s296
      $region36: #{snl_stage_forward.14} parent=27 // pred_fallthru
        _
      // Predicated region
      $region37: #{snl_stage_forward.14} parent=27 // pred_check
        %p298 = pneg %p101
      $region38: #{snl_stage_forward.14} parent=27 // pred_check_branch
        %300 = sbr.rel (%p298) target = $region40
      $region39: #{snl_stage_forward.14} parent=27 // pred_region
        %s301 = smul.u32 16, %s23
        %p302 = scmp.lt.s32.totalorder %s22, 1
        %s303 = scalar_select %p302, %s22, 1
        %p304 = scmp.lt.s32.totalorder %s301, 31
        %s305 = scalar_select %p304, %s301, 31
        %s306 = smul.addr %s305, 2
        %s307 = smul.addr %s303, 64
        %s308 = sadd.s32 %s306, %s307
        %s309 = smul.addr %s308, 8
        %s310 = scalar_lea.vmem %s2, %s309
        %s311 = smul.u32 16, %s23
      $region40: #{snl_stage_forward.14} parent=27 // pred_fallthru
        _
    $region28: #{snl_stage_forward.14} parent=5 // pred_fallthru
      _
    %p312 = scmp.le.s32.totalorder 1, %s15
    %p313 = scmp.lt.s32.totalorder %s15, 5
    %p314 = pnand %p312, %p313
    %p315 = pneg %p314
    // Predicated region
    $region41: #{snl_stage_forward.14} parent=5 // pred_check
      _
    $region42: #{snl_stage_forward.14} parent=5 // pred_check_branch
      %317 = sbr.rel (%p314) target = $region44
    $region43: #{snl_stage_forward.14} parent=5 // pred_region
      %s318 = ssub.s32 %s15, 1
      %p319 = scmp.lt.s32.totalorder %s24, 1
      %s320 = scalar_select %p319, %s24, 1
      %s321 = smul.addr %s320, 32
      %s322 = smul.addr %s321, 8
      %s323 = scalar_lea.vmem %s0, %s322
      %p324 = pneg %p53
      %p325 = pneg %p50
      %p326 = scmp.lt.s32.totalorder %s24, 1
      %s327 = scalar_select %p326, %s24, 1
      %s328 = smul.addr %s327, 32
      %s329 = smul.addr %s328, 8
      %s330 = scalar_lea.vmem %s1, %s329
      %p331 = pneg %p79
      %p332 = pneg %p76
      %s333 = smul.u32 16, %s25
      %p334 = scmp.lt.s32.totalorder %s24, 1
      %s335 = scalar_select %p334, %s24, 1
      %p336 = scmp.lt.s32.totalorder %s333, 31
      %s337 = scalar_select %p336, %s333, 31
      %s338 = smul.addr %s337, 2
      %s339 = smul.addr %s335, 64
      %s340 = sadd.s32 %s338, %s339
      %s341 = smul.addr %s340, 8
      %s342 = scalar_lea.vmem %s2, %s341
      %p343 = pneg %p107
      %p344 = pneg %p104
      %p345 = pneg %p128
      %p346 = pneg %p125
      %p347 = pneg %p149
      %p348 = pneg %p146
      %p349 = pneg %p170
      %p350 = pneg %p167
      %p351 = pneg %p198
      %p352 = pneg %p195
      %s353 = smul.u32 16, %s25
      %p354 = scmp.lt.s32.totalorder %s24, 1
      %s355 = scalar_select %p354, %s24, 1
      %p356 = scmp.lt.s32.totalorder %s353, 31
      %s357 = scalar_select %p356, %s353, 31
      %s358 = smul.addr %s355, 32
      %s359 = sadd.s32 %s357, %s358
      %s360 = smul.addr %s359, 8
      %s361 = scalar_lea.vmem %s6, %s360
      %p362 = pneg %p226
      %p363 = pneg %p223
      %p364 = scmp.lt.s32.totalorder %s24, 1
      %s365 = scalar_select %p364, %s24, 1
      %p366 = scmp.lt.s32.totalorder %s25, 1
      %s367 = scalar_select %p366, %s25, 1
      %s368 = smul.addr %s365, 2
      %s369 = sadd.s32 %s367, %s368
      %s370 = scalar_lea.vmem %s7, %s369
      %p371 = pneg %p254
      %p372 = pneg %p251
      %p373 = scmp.lt.s32.totalorder %s24, 1
      %s374 = scalar_select %p373, %s24, 1
      %p375 = scmp.lt.s32.totalorder %s25, 1
      %s376 = scalar_select %p375, %s25, 1
      %s377 = smul.addr %s374, 2
      %s378 = sadd.s32 %s376, %s377
      %s379 = scalar_lea.vmem %s8, %s378
      %p380 = scmp.lt.s32.totalorder %s24, 1
      %s381 = scalar_select %p380, %s24, 1
      %s382 = smul.addr %s381, 32
      %s383 = smul.addr %s382, 8
      %s384 = scalar_lea.vmem %s0, %s383
      %p385 = scmp.lt.s32.totalorder %s24, 1
      %s386 = scalar_select %p385, %s24, 1
      %s387 = smul.addr %s386, 32
      %s388 = smul.addr %s387, 8
      %s389 = scalar_lea.vmem %s1, %s388
      %s390 = smul.u32 16, %s25
      %p391 = scmp.lt.s32.totalorder %s24, 1
      %s392 = scalar_select %p391, %s24, 1
      %p393 = scmp.lt.s32.totalorder %s390, 31
      %s394 = scalar_select %p393, %s390, 31
      %s395 = smul.addr %s394, 2
      %s396 = smul.addr %s392, 64
      %s397 = sadd.s32 %s395, %s396
      %s398 = smul.addr %s397, 8
      %s399 = scalar_lea.vmem %s2, %s398
      %s400 = smul.u32 16, %s25
      %s401 = smul.u32 16, %s25
      %p402 = scmp.lt.s32.totalorder %s24, 1
      %s403 = scalar_select %p402, %s24, 1
      %p404 = scmp.lt.s32.totalorder %s401, 31
      %s405 = scalar_select %p404, %s401, 31
      %s406 = smul.addr %s403, 32
      %s407 = sadd.s32 %s405, %s406
      %s408 = smul.addr %s407, 8
      %s409 = scalar_lea.vmem %s6, %s408
      %s410 = smul.u32 16, %s25
      %p411 = scmp.lt.s32.totalorder %s24, 1
      %s412 = scalar_select %p411, %s24, 1
      %p413 = scmp.lt.s32.totalorder %s25, 1
      %s414 = scalar_select %p413, %s25, 1
      %s415 = smul.addr %s412, 2
      %s416 = sadd.s32 %s414, %s415
      %s417 = scalar_lea.vmem %s7, %s416
      %p418 = scmp.lt.s32.totalorder %s24, 1
      %s419 = scalar_select %p418, %s24, 1
      %p420 = scmp.lt.s32.totalorder %s25, 1
      %s421 = scalar_select %p420, %s25, 1
      %s422 = smul.addr %s419, 2
      %s423 = sadd.s32 %s421, %s422
      %s424 = scalar_lea.vmem %s8, %s423
      %p425 = scmp.eq.s32.totalorder %s25, 0
      // Predicated region
      $region45: #{snl_stage_forward.14} parent=43 // pred_check
        %p426 = pneg %p425
      $region46: #{snl_stage_forward.14} parent=43 // pred_check_branch
        %428 = sbr.rel (%p426) target = $region48
      $region47: #{snl_stage_forward.14} parent=43 // pred_region
        %v429 = vld [vmem:[%s384] sm:$0xff]
        %v430 = vld [vmem:[%s384 + $0x8] sm:$0xff]
        %v431 = vld [vmem:[%s384 + $0x10] sm:$0xff]
        %v432 = vld [vmem:[%s384 + $0x18] sm:$0xff]
        %v433 = vld [vmem:[%s384 + $0x20] sm:$0xff]
        %v434 = vld [vmem:[%s384 + $0x28] sm:$0xff]
        %v435 = vld [vmem:[%s384 + $0x30] sm:$0xff]
        %v436 = vld [vmem:[%s384 + $0x38] sm:$0xff]
        %v437 = vld [vmem:[%s384 + $0x40] sm:$0xff]
        %v438 = vld [vmem:[%s384 + $0x48] sm:$0xff]
        %v439 = vld [vmem:[%s384 + $0x50] sm:$0xff]
        %v440 = vld [vmem:[%s384 + $0x58] sm:$0xff]
        %v441 = vld [vmem:[%s384 + $0x60] sm:$0xff]
        %v442 = vld [vmem:[%s384 + $0x68] sm:$0xff]
        %v443 = vld [vmem:[%s384 + $0x70] sm:$0xff]
        %v444 = vld [vmem:[%s384 + $0x78] sm:$0xff]
        %v445 = vld [vmem:[%s384 + $0x80] sm:$0xff]
        %v446 = vld [vmem:[%s384 + $0x88] sm:$0xff]
        %v447 = vld [vmem:[%s384 + $0x90] sm:$0xff]
        %v448 = vld [vmem:[%s384 + $0x98] sm:$0xff]
        %v449 = vld [vmem:[%s384 + $0xa0] sm:$0xff]
        %v450 = vld [vmem:[%s384 + $0xa8] sm:$0xff]
        %v451 = vld [vmem:[%s384 + $0xb0] sm:$0xff]
        %v452 = vld [vmem:[%s384 + $0xb8] sm:$0xff]
        %v453 = vld [vmem:[%s384 + $0xc0] sm:$0xff]
        %v454 = vld [vmem:[%s384 + $0xc8] sm:$0xff]
        %v455 = vld [vmem:[%s384 + $0xd0] sm:$0xff]
        %v456 = vld [vmem:[%s384 + $0xd8] sm:$0xff]
        %v457 = vld [vmem:[%s384 + $0xe0] sm:$0xff]
        %v458 = vld [vmem:[%s384 + $0xe8] sm:$0xff]
        %v459 = vld [vmem:[%s384 + $0xf0] sm:$0xff]
        %v460 = vld [vmem:[%s384 + $0xf8] sm:$0xff]
        %v461 = vld [vmem:[%s3] sm:$0xff]
        %vm462 = vcmask 64512
        %v464 = vsel %vm462, %v429, 0
        %v467 = vsel %vm462, %v430, 0
        %v470 = vsel %vm462, %v431, 0
        %v473 = vsel %vm462, %v432, 0
        %v476 = vsel %vm462, %v433, 0
        %v479 = vsel %vm462, %v434, 0
        %v482 = vsel %vm462, %v435, 0
        %v485 = vsel %vm462, %v436, 0
        %v488 = vsel %vm462, %v437, 0
        %v491 = vsel %vm462, %v438, 0
        %v494 = vsel %vm462, %v439, 0
        %v497 = vsel %vm462, %v440, 0
        %v500 = vsel %vm462, %v441, 0
        %v503 = vsel %vm462, %v442, 0
        %v506 = vsel %vm462, %v443, 0
        %v509 = vsel %vm462, %v444, 0
        %v512 = vsel %vm462, %v445, 0
        %v515 = vsel %vm462, %v446, 0
        %v518 = vsel %vm462, %v447, 0
        %v521 = vsel %vm462, %v448, 0
        %v524 = vsel %vm462, %v449, 0
        %v527 = vsel %vm462, %v450, 0
        %v530 = vsel %vm462, %v451, 0
        %v533 = vsel %vm462, %v452, 0
        %v536 = vsel %vm462, %v453, 0
        %v539 = vsel %vm462, %v454, 0
        %v542 = vsel %vm462, %v455, 0
        %v545 = vsel %vm462, %v456, 0
        %v548 = vsel %vm462, %v457, 0
        %v551 = vsel %vm462, %v458, 0
        %v554 = vsel %vm462, %v459, 0
        %v557 = vsel %vm462, %v460, 0
        %559 = vmatprep.subr.mxu0 0.0
        %560 = vmatpush1.msra.mxu0 %v461
        %561 = vmatprep.subr.mxu0 0.0
        %562 = vmatpush1.msra.mxu0 0.0
        %563 = vmatprep.subr.mxu0 0.0
        %564 = vmatpush1.msra.mxu0 0.0
        %565 = vmatprep.subr.mxu0 0.0
        %566 = vmatpush1.msra.mxu0 0.0
        %567 = vmatprep.subr.mxu0 0.0
        %568 = vmatpush1.msra.mxu0 0.0
        %569 = vmatprep.subr.mxu0 0.0
        %570 = vmatpush1.msra.mxu0 0.0
        %571 = vmatprep.subr.mxu0 0.0
        %572 = vmatpush1.msra.mxu0 0.0
        %573 = vmatprep.subr.mxu0 0.0
        %574 = vmatpush1.msra.mxu0 0.0
        %575 = vmatprep.subr.mxu0 0.0
        %576 = vmatpush1.msra.mxu0 0.0
        %577 = vmatprep.subr.mxu0 0.0
        %578 = vmatpush1.msra.mxu0 0.0
        %579 = vmatprep.subr.mxu0 0.0
        %580 = vmatpush1.msra.mxu0 0.0
        %581 = vmatprep.subr.mxu0 0.0
        %582 = vmatpush1.msra.mxu0 0.0
        %583 = vmatprep.subr.mxu0 0.0
        %584 = vmatpush1.msra.mxu0 0.0
        %585 = vmatprep.subr.mxu0 0.0
        %586 = vmatpush1.msra.mxu0 0.0
        %587 = vmatprep.subr.mxu0 0.0
        %588 = vmatpush1.msra.mxu0 0.0
        %589 = vmatprep.subr.mxu0 0.0
        %590 = vmatpush1.msra.mxu0 0.0
        %591 = vmatprep.subr.mxu0 0.0
        %592 = vmatpush1.msra.mxu0 0.0
        %593 = vmatprep.subr.mxu0 0.0
        %594 = vmatpush1.msra.mxu0 0.0
        %595 = vmatprep.subr.mxu0 0.0
        %596 = vmatpush1.msra.mxu0 0.0
        %597 = vmatprep.subr.mxu0 0.0
        %598 = vmatpush1.msra.mxu0 0.0
        %599 = vmatprep.subr.mxu0 0.0
        %600 = vmatpush1.msra.mxu0 0.0
        %601 = vmatprep.subr.mxu0 0.0
        %602 = vmatpush1.msra.mxu0 0.0
        %603 = vmatprep.subr.mxu0 0.0
        %604 = vmatpush1.msra.mxu0 0.0
        %605 = vmatprep.subr.mxu0 0.0
        %606 = vmatpush1.msra.mxu0 0.0
        %607 = vmatprep.subr.mxu0 0.0
        %608 = vmatpush1.msra.mxu0 0.0
        %609 = vmatprep.subr.mxu0 0.0
        %610 = vmatpush1.msra.mxu0 0.0
        %611 = vmatprep.subr.mxu0 0.0
        %612 = vmatpush1.msra.mxu0 0.0
        %613 = vmatprep.subr.mxu0 0.0
        %614 = vmatpush1.msra.mxu0 0.0
        %615 = vmatprep.subr.mxu0 0.0
        %616 = vmatpush1.msra.mxu0 0.0
        %617 = vmatprep.subr.mxu0 0.0
        %618 = vmatpush1.msra.mxu0 0.0
        %619 = vmatprep.subr.mxu0 0.0
        %620 = vmatpush1.msra.mxu0 0.0
        %621 = vmatprep.subr.mxu0 0.0
        %622 = vmatpush1.msra.mxu0 0.0
        %623 = vmatprep.mubr.f32.mxu0 0.0
        %624 = vmatmul.mubr.f32.gmra.mrb[0].mxu0 %v464
        %v625 = vpop.f32.mrb[0].mxu0
        %v626 = vadd.f32 0.0, %v625
        %v627 = vpop.f32.mrb[0].mxu0
        %628 = vmatprep.mubr.f32.mxu0 0.0
        %629 = vmatmul.mubr.f32.gmra.mrb[0].mxu0 %v467
        %v630 = vpop.f32.mrb[0].mxu0
        %v631 = vadd.f32 0.0, %v630
        %v632 = vpop.f32.mrb[0].mxu0
        %633 = vmatprep.mubr.f32.mxu0 0.0
        %634 = vmatmul.mubr.f32.gmra.mrb[0].mxu0 %v470
        %v635 = vpop.f32.mrb[0].mxu0
        %v636 = vadd.f32 0.0, %v635
        %v637 = vpop.f32.mrb[0].mxu0
        %638 = vmatprep.mubr.f32.mxu0 0.0
        %639 = vmatmul.mubr.f32.gmra.mrb[0].mxu0 %v473
        %v640 = vpop.f32.mrb[0].mxu0
        %v641 = vadd.f32 0.0, %v640
        %v642 = vpop.f32.mrb[0].mxu0
        %643 = vmatprep.mubr.f32.mxu0 0.0
        %644 = vmatmul.mubr.f32.gmra.mrb[0].mxu0 %v476
        %v645 = vpop.f32.mrb[0].mxu0
        %v646 = vadd.f32 0.0, %v645
        %v647 = vpop.f32.mrb[0].mxu0
        %648 = vmatprep.mubr.f32.mxu0 0.0
        %649 = vmatmul.mubr.f32.gmra.mrb[0].mxu0 %v479
        %v650 = vpop.f32.mrb[0].mxu0
        %v651 = vadd.f32 0.0, %v650
        %v652 = vpop.f32.mrb[0].mxu0
        %653 = vmatprep.mubr.f32.mxu0 0.0
        %654 = vmatmul.mubr.f32.gmra.mrb[0].mxu0 %v482
        %v655 = vpop.f32.mrb[0].mxu0
        %v656 = vadd.f32 0.0, %v655
        %v657 = vpop.f32.mrb[0].mxu0
        %658 = vmatprep.mubr.f32.mxu0 0.0
        %659 = vmatmul.mubr.f32.gmra.mrb[0].mxu0 %v485
        %v660 = vpop.f32.mrb[0].mxu0
        %v661 = vadd.f32 0.0, %v660
        %v662 = vpop.f32.mrb[0].mxu0
        %663 = vmatprep.mubr.f32.mxu0 0.0
        %664 = vmatmul.mubr.f32.gmra.mrb[0].mxu0 %v488
        %v665 = vpop.f32.mrb[0].mxu0
        %v666 = vadd.f32 0.0, %v665
        %v667 = vpop.f32.mrb[0].mxu0
        %668 = vmatprep.mubr.f32.mxu0 0.0
        %669 = vmatmul.mubr.f32.gmra.mrb[0].mxu0 %v491
        %v670 = vpop.f32.mrb[0].mxu0
        %v671 = vadd.f32 0.0, %v670
        %v672 = vpop.f32.mrb[0].mxu0
        %673 = vmatprep.mubr.f32.mxu0 0.0
        %674 = vmatmul.mubr.f32.gmra.mrb[0].mxu0 %v494
        %v675 = vpop.f32.mrb[0].mxu0
        %v676 = vadd.f32 0.0, %v675
        %v677 = vpop.f32.mrb[0].mxu0
        %678 = vmatprep.mubr.f32.mxu0 0.0
        %679 = vmatmul.mubr.f32.gmra.mrb[0].mxu0 %v497
        %v680 = vpop.f32.mrb[0].mxu0
        %v681 = vadd.f32 0.0, %v680
        %v682 = vpop.f32.mrb[0].mxu0
        %683 = vmatprep.mubr.f32.mxu0 0.0
        %684 = vmatmul.mubr.f32.gmra.mrb[0].mxu0 %v500
        %v685 = vpop.f32.mrb[0].mxu0
        %v686 = vadd.f32 0.0, %v685
        %v687 = vpop.f32.mrb[0].mxu0
        %688 = vmatprep.mubr.f32.mxu0 0.0
        %689 = vmatmul.mubr.f32.gmra.mrb[0].mxu0 %v503
        %v690 = vpop.f32.mrb[0].mxu0
        %v691 = vadd.f32 0.0, %v690
        %v692 = vpop.f32.mrb[0].mxu0
        %693 = vmatprep.mubr.f32.mxu0 0.0
        %694 = vmatmul.mubr.f32.gmra.mrb[0].mxu0 %v506
        %v695 = vpop.f32.mrb[0].mxu0
        %v696 = vadd.f32 0.0, %v695
        %v697 = vpop.f32.mrb[0].mxu0
        %698 = vmatprep.mubr.f32.mxu0 0.0
        %699 = vmatmul.mubr.f32.gmra.mrb[0].mxu0 %v509
        %v700 = vpop.f32.mrb[0].mxu0
        %v701 = vadd.f32 0.0, %v700
        %v702 = vpop.f32.mrb[0].mxu0
        %703 = vmatprep.mubr.f32.mxu0 0.0
        %704 = vmatmul.mubr.f32.gmra.mrb[0].mxu0 %v512
        %v705 = vpop.f32.mrb[0].mxu0
        %v706 = vadd.f32 0.0, %v705
        %v707 = vpop.f32.mrb[0].mxu0
        %708 = vmatprep.mubr.f32.mxu0 0.0
        %709 = vmatmul.mubr.f32.gmra.mrb[0].mxu0 %v515
        %v710 = vpop.f32.mrb[0].mxu0
        %v711 = vadd.f32 0.0, %v710
        %v712 = vpop.f32.mrb[0].mxu0
        %713 = vmatprep.mubr.f32.mxu0 0.0
        %714 = vmatmul.mubr.f32.gmra.mrb[0].mxu0 %v518
        %v715 = vpop.f32.mrb[0].mxu0
        %v716 = vadd.f32 0.0, %v715
        %v717 = vpop.f32.mrb[0].mxu0
        %718 = vmatprep.mubr.f32.mxu0 0.0
        %719 = vmatmul.mubr.f32.gmra.mrb[0].mxu0 %v521
        %v720 = vpop.f32.mrb[0].mxu0
        %v721 = vadd.f32 0.0, %v720
        %v722 = vpop.f32.mrb[0].mxu0
        %723 = vmatprep.mubr.f32.mxu0 0.0
        %724 = vmatmul.mubr.f32.gmra.mrb[0].mxu0 %v524
        %v725 = vpop.f32.mrb[0].mxu0
        %v726 = vadd.f32 0.0, %v725
        %v727 = vpop.f32.mrb[0].mxu0
        %728 = vmatprep.mubr.f32.mxu0 0.0
        %729 = vmatmul.mubr.f32.gmra.mrb[0].mxu0 %v527
        %v730 = vpop.f32.mrb[0].mxu0
        %v731 = vadd.f32 0.0, %v730
        %v732 = vpop.f32.mrb[0].mxu0
        %733 = vmatprep.mubr.f32.mxu0 0.0
        %734 = vmatmul.mubr.f32.gmra.mrb[0].mxu0 %v530
        %v735 = vpop.f32.mrb[0].mxu0
        %v736 = vadd.f32 0.0, %v735
        %v737 = vpop.f32.mrb[0].mxu0
        %738 = vmatprep.mubr.f32.mxu0 0.0
        %739 = vmatmul.mubr.f32.gmra.mrb[0].mxu0 %v533
        %v740 = vpop.f32.mrb[0].mxu0
        %v741 = vadd.f32 0.0, %v740
        %v742 = vpop.f32.mrb[0].mxu0
        %743 = vmatprep.mubr.f32.mxu0 0.0
        %744 = vmatmul.mubr.f32.gmra.mrb[0].mxu0 %v536
        %v745 = vpop.f32.mrb[0].mxu0
        %v746 = vadd.f32 0.0, %v745
        %v747 = vpop.f32.mrb[0].mxu0
        %748 = vmatprep.mubr.f32.mxu0 0.0
        %749 = vmatmul.mubr.f32.gmra.mrb[0].mxu0 %v539
        %v750 = vpop.f32.mrb[0].mxu0
        %v751 = vadd.f32 0.0, %v750
        %v752 = vpop.f32.mrb[0].mxu0
        %753 = vmatprep.mubr.f32.mxu0 0.0
        %754 = vmatmul.mubr.f32.gmra.mrb[0].mxu0 %v542
        %v755 = vpop.f32.mrb[0].mxu0
        %v756 = vadd.f32 0.0, %v755
        %v757 = vpop.f32.mrb[0].mxu0
        %758 = vmatprep.mubr.f32.mxu0 0.0
        %759 = vmatmul.mubr.f32.gmra.mrb[0].mxu0 %v545
        %v760 = vpop.f32.mrb[0].mxu0
        %v761 = vadd.f32 0.0, %v760
        %v762 = vpop.f32.mrb[0].mxu0
        %763 = vmatprep.mubr.f32.mxu0 0.0
        %764 = vmatmul.mubr.f32.gmra.mrb[0].mxu0 %v548
        %v765 = vpop.f32.mrb[0].mxu0
        %v766 = vadd.f32 0.0, %v765
        %v767 = vpop.f32.mrb[0].mxu0
        %768 = vmatprep.mubr.f32.mxu0 0.0
        %769 = vmatmul.mubr.f32.gmra.mrb[0].mxu0 %v551
        %v770 = vpop.f32.mrb[0].mxu0
        %v771 = vadd.f32 0.0, %v770
        %v772 = vpop.f32.mrb[0].mxu0
        %773 = vmatprep.mubr.f32.mxu0 0.0
        %774 = vmatmul.mubr.f32.gmra.mrb[0].mxu0 %v554
        %v775 = vpop.f32.mrb[0].mxu0
        %v776 = vadd.f32 0.0, %v775
        %v777 = vpop.f32.mrb[0].mxu0
        %778 = vmatprep.mubr.f32.mxu0 0.0
        %779 = vmatmul.mubr.f32.gmra.mrb[0].mxu0 %v557
        %v780 = vpop.f32.mrb[0].mxu0
        %v781 = vadd.f32 0.0, %v780
        %v782 = vpop.f32.mrb[0].mxu0
        %783 = vdwg.mxu0
        %v784 = vld [vmem:[%s5] sm:$0xf]
        %vm785 = vcmask 31744
        %v787 = vsel %vm785, %v626, 0
        %v790 = vsel %vm785, %v631, 0
        %v793 = vsel %vm785, %v636, 0
        %v796 = vsel %vm785, %v641, 0
        %v799 = vsel %vm785, %v646, 0
        %v802 = vsel %vm785, %v651, 0
        %v805 = vsel %vm785, %v656, 0
        %v808 = vsel %vm785, %v661, 0
        %v811 = vsel %vm785, %v666, 0
        %v814 = vsel %vm785, %v671, 0
        %v817 = vsel %vm785, %v676, 0
        %v820 = vsel %vm785, %v681, 0
        %v823 = vsel %vm785, %v686, 0
        %v826 = vsel %vm785, %v691, 0
        %v829 = vsel %vm785, %v696, 0
        %v832 = vsel %vm785, %v701, 0
        %v835 = vsel %vm785, %v706, 0
        %v838 = vsel %vm785, %v711, 0
        %v841 = vsel %vm785, %v716, 0
        %v844 = vsel %vm785, %v721, 0
        %v847 = vsel %vm785, %v726, 0
        %v850 = vsel %vm785, %v731, 0
        %v853 = vsel %vm785, %v736, 0
        %v856 = vsel %vm785, %v741, 0
        %v859 = vsel %vm785, %v746, 0
        %v862 = vsel %vm785, %v751, 0
        %v865 = vsel %vm785, %v756, 0
        %v868 = vsel %vm785, %v761, 0
        %v871 = vsel %vm785, %v766, 0
        %v874 = vsel %vm785, %v771, 0
        %v877 = vsel %vm785, %v776, 0
        %v880 = vsel %vm785, %v781, 0
        %vm882 = vcmask 1043456
        %v884 = vsel %vm882, %v784, 0
        %886 = vmatprep.subr.mxu0 0.0
        %887 = vmatpush1.msra.mxu0 %v884
        %888 = vmatprep.subr.mxu0 0.0
        %889 = vmatpush1.msra.mxu0 0.0
        %890 = vmatprep.subr.mxu0 0.0
        %891 = vmatpush1.msra.mxu0 0.0
        %892 = vmatprep.subr.mxu0 0.0
        %893 = vmatpush1.msra.mxu0 0.0
        %894 = vmatprep.subr.mxu0 0.0
        %895 = vmatpush1.msra.mxu0 0.0
        %896 = vmatprep.subr.mxu0 0.0
        %897 = vmatpush1.msra.mxu0 0.0
        %898 = vmatprep.subr.mxu0 0.0
        %899 = vmatpush1.msra.mxu0 0.0
        %900 = vmatprep.subr.mxu0 0.0
        %901 = vmatpush1.msra.mxu0 0.0
        %902 = vmatprep.subr.mxu0 0.0
        %903 = vmatpush1.msra.mxu0 0.0
        %904 = vmatprep.subr.mxu0 0.0
        %905 = vmatpush1.msra.mxu0 0.0
        %906 = vmatprep.subr.mxu0 0.0
        %907 = vmatpush1.msra.mxu0 0.0
        %908 = vmatprep.subr.mxu0 0.0
        %909 = vmatpush1.msra.mxu0 0.0
        %910 = vmatprep.subr.mxu0 0.0
        %911 = vmatpush1.msra.mxu0 0.0
        %912 = vmatprep.subr.mxu0 0.0
        %913 = vmatpush1.msra.mxu0 0.0
        %914 = vmatprep.subr.mxu0 0.0
        %915 = vmatpush1.msra.mxu0 0.0
        %916 = vmatprep.subr.mxu0 0.0
        %917 = vmatpush1.msra.mxu0 0.0
        %918 = vmatprep.subr.mxu0 0.0
        %919 = vmatpush1.msra.mxu0 0.0
        %920 = vmatprep.subr.mxu0 0.0
        %921 = vmatpush1.msra.mxu0 0.0
        %922 = vmatprep.subr.mxu0 0.0
        %923 = vmatpush1.msra.mxu0 0.0
        %924 = vmatprep.subr.mxu0 0.0
        %925 = vmatpush1.msra.mxu0 0.0
        %926 = vmatprep.subr.mxu0 0.0
        %927 = vmatpush1.msra.mxu0 0.0
        %928 = vmatprep.subr.mxu0 0.0
        %929 = vmatpush1.msra.mxu0 0.0
        %930 = vmatprep.subr.mxu0 0.0
        %931 = vmatpush1.msra.mxu0 0.0
        %932 = vmatprep.subr.mxu0 0.0
        %933 = vmatpush1.msra.mxu0 0.0
        %934 = vmatprep.subr.mxu0 0.0
        %935 = vmatpush1.msra.mxu0 0.0
        %936 = vmatprep.subr.mxu0 0.0
        %937 = vmatpush1.msra.mxu0 0.0
        %938 = vmatprep.subr.mxu0 0.0
        %939 = vmatpush1.msra.mxu0 0.0
        %940 = vmatprep.subr.mxu0 0.0
        %941 = vmatpush1.msra.mxu0 0.0
        %942 = vmatprep.subr.mxu0 0.0
        %943 = vmatpush1.msra.mxu0 0.0
        %944 = vmatprep.subr.mxu0 0.0
        %945 = vmatpush1.msra.mxu0 0.0
        %946 = vmatprep.subr.mxu0 0.0
        %947 = vmatpush1.msra.mxu0 0.0
        %948 = vmatprep.subr.mxu0 0.0
        %949 = vmatpush1.msra.mxu0 0.0
        %950 = vmatprep.mubr.f32.mxu0 0.0
        %951 = vmatmul.mubr.f32.gmra.mrb[0].mxu0 %v787
        %v952 = vpop.f32.mrb[0].mxu0
        %v953 = vadd.f32 0.0, %v952
        %v954 = vpop.f32.mrb[0].mxu0
        %955 = vmatprep.mubr.f32.mxu0 0.0
        %956 = vmatmul.mubr.f32.gmra.mrb[0].mxu0 %v790
        %v957 = vpop.f32.mrb[0].mxu0
        %v958 = vadd.f32 0.0, %v957
        %v959 = vpop.f32.mrb[0].mxu0
        %960 = vmatprep.mubr.f32.mxu0 0.0
        %961 = vmatmul.mubr.f32.gmra.mrb[0].mxu0 %v793
        %v962 = vpop.f32.mrb[0].mxu0
        %v963 = vadd.f32 0.0, %v962
        %v964 = vpop.f32.mrb[0].mxu0
        %965 = vmatprep.mubr.f32.mxu0 0.0
        %966 = vmatmul.mubr.f32.gmra.mrb[0].mxu0 %v796
        %v967 = vpop.f32.mrb[0].mxu0
        %v968 = vadd.f32 0.0, %v967
        %v969 = vpop.f32.mrb[0].mxu0
        %970 = vmatprep.mubr.f32.mxu0 0.0
        %971 = vmatmul.mubr.f32.gmra.mrb[0].mxu0 %v799
        %v972 = vpop.f32.mrb[0].mxu0
        %v973 = vadd.f32 0.0, %v972
        %v974 = vpop.f32.mrb[0].mxu0
        %975 = vmatprep.mubr.f32.mxu0 0.0
        %976 = vmatmul.mubr.f32.gmra.mrb[0].mxu0 %v802
        %v977 = vpop.f32.mrb[0].mxu0
        %v978 = vadd.f32 0.0, %v977
        %v979 = vpop.f32.mrb[0].mxu0
        %980 = vmatprep.mubr.f32.mxu0 0.0
        %981 = vmatmul.mubr.f32.gmra.mrb[0].mxu0 %v805
        %v982 = vpop.f32.mrb[0].mxu0
        %v983 = vadd.f32 0.0, %v982
        %v984 = vpop.f32.mrb[0].mxu0
        %985 = vmatprep.mubr.f32.mxu0 0.0
        %986 = vmatmul.mubr.f32.gmra.mrb[0].mxu0 %v808
        %v987 = vpop.f32.mrb[0].mxu0
        %v988 = vadd.f32 0.0, %v987
        %v989 = vpop.f32.mrb[0].mxu0
        %990 = vmatprep.mubr.f32.mxu0 0.0
        %991 = vmatmul.mubr.f32.gmra.mrb[0].mxu0 %v811
        %v992 = vpop.f32.mrb[0].mxu0
        %v993 = vadd.f32 0.0, %v992
        %v994 = vpop.f32.mrb[0].mxu0
        %995 = vmatprep.mubr.f32.mxu0 0.0
        %996 = vmatmul.mubr.f32.gmra.mrb[0].mxu0 %v814
        %v997 = vpop.f32.mrb[0].mxu0
        %v998 = vadd.f32 0.0, %v997
        %v999 = vpop.f32.mrb[0].mxu0
        %1000 = vmatprep.mubr.f32.mxu0 0.0
        %1001 = vmatmul.mubr.f32.gmra.mrb[0].mxu0 %v817
        %v1002 = vpop.f32.mrb[0].mxu0
        %v1003 = vadd.f32 0.0, %v1002
        %v1004 = vpop.f32.mrb[0].mxu0
        %1005 = vmatprep.mubr.f32.mxu0 0.0
        %1006 = vmatmul.mubr.f32.gmra.mrb[0].mxu0 %v820
        %v1007 = vpop.f32.mrb[0].mxu0
        %v1008 = vadd.f32 0.0, %v1007
        %v1009 = vpop.f32.mrb[0].mxu0
        %1010 = vmatprep.mubr.f32.mxu0 0.0
        %1011 = vmatmul.mubr.f32.gmra.mrb[0].mxu0 %v823
        %v1012 = vpop.f32.mrb[0].mxu0
        %v1013 = vadd.f32 0.0, %v1012
        %v1014 = vpop.f32.mrb[0].mxu0
        %1015 = vmatprep.mubr.f32.mxu0 0.0
        %1016 = vmatmul.mubr.f32.gmra.mrb[0].mxu0 %v826
        %v1017 = vpop.f32.mrb[0].mxu0
        %v1018 = vadd.f32 0.0, %v1017
        %v1019 = vpop.f32.mrb[0].mxu0
        %1020 = vmatprep.mubr.f32.mxu0 0.0
        %1021 = vmatmul.mubr.f32.gmra.mrb[0].mxu0 %v829
        %v1022 = vpop.f32.mrb[0].mxu0
        %v1023 = vadd.f32 0.0, %v1022
        %v1024 = vpop.f32.mrb[0].mxu0
        %1025 = vmatprep.mubr.f32.mxu0 0.0
        %1026 = vmatmul.mubr.f32.gmra.mrb[0].mxu0 %v832
        %v1027 = vpop.f32.mrb[0].mxu0
        %v1028 = vadd.f32 0.0, %v1027
        %v1029 = vpop.f32.mrb[0].mxu0
        %1030 = vmatprep.mubr.f32.mxu0 0.0
        %1031 = vmatmul.mubr.f32.gmra.mrb[0].mxu0 %v835
        %v1032 = vpop.f32.mrb[0].mxu0
        %v1033 = vadd.f32 0.0, %v1032
        %v1034 = vpop.f32.mrb[0].mxu0
        %1035 = vmatprep.mubr.f32.mxu0 0.0
        %1036 = vmatmul.mubr.f32.gmra.mrb[0].mxu0 %v838
        %v1037 = vpop.f32.mrb[0].mxu0
        %v1038 = vadd.f32 0.0, %v1037
        %v1039 = vpop.f32.mrb[0].mxu0
        %1040 = vmatprep.mubr.f32.mxu0 0.0
        %1041 = vmatmul.mubr.f32.gmra.mrb[0].mxu0 %v841
        %v1042 = vpop.f32.mrb[0].mxu0
        %v1043 = vadd.f32 0.0, %v1042
        %v1044 = vpop.f32.mrb[0].mxu0
        %1045 = vmatprep.mubr.f32.mxu0 0.0
        %1046 = vmatmul.mubr.f32.gmra.mrb[0].mxu0 %v844
        %v1047 = vpop.f32.mrb[0].mxu0
        %v1048 = vadd.f32 0.0, %v1047
        %v1049 = vpop.f32.mrb[0].mxu0
        %1050 = vmatprep.mubr.f32.mxu0 0.0
        %1051 = vmatmul.mubr.f32.gmra.mrb[0].mxu0 %v847
        %v1052 = vpop.f32.mrb[0].mxu0
        %v1053 = vadd.f32 0.0, %v1052
        %v1054 = vpop.f32.mrb[0].mxu0
        %1055 = vmatprep.mubr.f32.mxu0 0.0
        %1056 = vmatmul.mubr.f32.gmra.mrb[0].mxu0 %v850
        %v1057 = vpop.f32.mrb[0].mxu0
        %v1058 = vadd.f32 0.0, %v1057
        %v1059 = vpop.f32.mrb[0].mxu0
        %1060 = vmatprep.mubr.f32.mxu0 0.0
        %1061 = vmatmul.mubr.f32.gmra.mrb[0].mxu0 %v853
        %v1062 = vpop.f32.mrb[0].mxu0
        %v1063 = vadd.f32 0.0, %v1062
        %v1064 = vpop.f32.mrb[0].mxu0
        %1065 = vmatprep.mubr.f32.mxu0 0.0
        %1066 = vmatmul.mubr.f32.gmra.mrb[0].mxu0 %v856
        %v1067 = vpop.f32.mrb[0].mxu0
        %v1068 = vadd.f32 0.0, %v1067
        %v1069 = vpop.f32.mrb[0].mxu0
        %1070 = vmatprep.mubr.f32.mxu0 0.0
        %1071 = vmatmul.mubr.f32.gmra.mrb[0].mxu0 %v859
        %v1072 = vpop.f32.mrb[0].mxu0
        %v1073 = vadd.f32 0.0, %v1072
        %v1074 = vpop.f32.mrb[0].mxu0
        %1075 = vmatprep.mubr.f32.mxu0 0.0
        %1076 = vmatmul.mubr.f32.gmra.mrb[0].mxu0 %v862
        %v1077 = vpop.f32.mrb[0].mxu0
        %v1078 = vadd.f32 0.0, %v1077
        %v1079 = vpop.f32.mrb[0].mxu0
        %1080 = vmatprep.mubr.f32.mxu0 0.0
        %1081 = vmatmul.mubr.f32.gmra.mrb[0].mxu0 %v865
        %v1082 = vpop.f32.mrb[0].mxu0
        %v1083 = vadd.f32 0.0, %v1082
        %v1084 = vpop.f32.mrb[0].mxu0
        %1085 = vmatprep.mubr.f32.mxu0 0.0
        %1086 = vmatmul.mubr.f32.gmra.mrb[0].mxu0 %v868
        %v1087 = vpop.f32.mrb[0].mxu0
        %v1088 = vadd.f32 0.0, %v1087
        %v1089 = vpop.f32.mrb[0].mxu0
        %1090 = vmatprep.mubr.f32.mxu0 0.0
        %1091 = vmatmul.mubr.f32.gmra.mrb[0].mxu0 %v871
        %v1092 = vpop.f32.mrb[0].mxu0
        %v1093 = vadd.f32 0.0, %v1092
        %v1094 = vpop.f32.mrb[0].mxu0
        %1095 = vmatprep.mubr.f32.mxu0 0.0
        %1096 = vmatmul.mubr.f32.gmra.mrb[0].mxu0 %v874
        %v1097 = vpop.f32.mrb[0].mxu0
        %v1098 = vadd.f32 0.0, %v1097
        %v1099 = vpop.f32.mrb[0].mxu0
        %1100 = vmatprep.mubr.f32.mxu0 0.0
        %1101 = vmatmul.mubr.f32.gmra.mrb[0].mxu0 %v877
        %v1102 = vpop.f32.mrb[0].mxu0
        %v1103 = vadd.f32 0.0, %v1102
        %v1104 = vpop.f32.mrb[0].mxu0
        %1105 = vmatprep.mubr.f32.mxu0 0.0
        %1106 = vmatmul.mubr.f32.gmra.mrb[0].mxu0 %v880
        %v1107 = vpop.f32.mrb[0].mxu0
        %v1108 = vadd.f32 0.0, %v1107
        %v1109 = vpop.f32.mrb[0].mxu0
        %1110 = vdwg.mxu0
        %v1111 = vld [vmem:[%s389] sm:$0xff]
        %v1112 = vld [vmem:[%s389 + $0x8] sm:$0xff]
        %v1113 = vld [vmem:[%s389 + $0x10] sm:$0xff]
        %v1114 = vld [vmem:[%s389 + $0x18] sm:$0xff]
        %v1115 = vld [vmem:[%s389 + $0x20] sm:$0xff]
        %v1116 = vld [vmem:[%s389 + $0x28] sm:$0xff]
        %v1117 = vld [vmem:[%s389 + $0x30] sm:$0xff]
        %v1118 = vld [vmem:[%s389 + $0x38] sm:$0xff]
        %v1119 = vld [vmem:[%s389 + $0x40] sm:$0xff]
        %v1120 = vld [vmem:[%s389 + $0x48] sm:$0xff]
        %v1121 = vld [vmem:[%s389 + $0x50] sm:$0xff]
        %v1122 = vld [vmem:[%s389 + $0x58] sm:$0xff]
        %v1123 = vld [vmem:[%s389 + $0x60] sm:$0xff]
        %v1124 = vld [vmem:[%s389 + $0x68] sm:$0xff]
        %v1125 = vld [vmem:[%s389 + $0x70] sm:$0xff]
        %v1126 = vld [vmem:[%s389 + $0x78] sm:$0xff]
        %v1127 = vld [vmem:[%s389 + $0x80] sm:$0xff]
        %v1128 = vld [vmem:[%s389 + $0x88] sm:$0xff]
        %v1129 = vld [vmem:[%s389 + $0x90] sm:$0xff]
        %v1130 = vld [vmem:[%s389 + $0x98] sm:$0xff]
        %v1131 = vld [vmem:[%s389 + $0xa0] sm:$0xff]
        %v1132 = vld [vmem:[%s389 + $0xa8] sm:$0xff]
        %v1133 = vld [vmem:[%s389 + $0xb0] sm:$0xff]
        %v1134 = vld [vmem:[%s389 + $0xb8] sm:$0xff]
        %v1135 = vld [vmem:[%s389 + $0xc0] sm:$0xff]
        %v1136 = vld [vmem:[%s389 + $0xc8] sm:$0xff]
        %v1137 = vld [vmem:[%s389 + $0xd0] sm:$0xff]
        %v1138 = vld [vmem:[%s389 + $0xd8] sm:$0xff]
        %v1139 = vld [vmem:[%s389 + $0xe0] sm:$0xff]
        %v1140 = vld [vmem:[%s389 + $0xe8] sm:$0xff]
        %v1141 = vld [vmem:[%s389 + $0xf0] sm:$0xff]
        %v1142 = vld [vmem:[%s389 + $0xf8] sm:$0xff]
        %1144 = vset.pattern.permute.xlu0 0
        %1145 = vperm.xlu0 %1144, %v1111
        %v1146 = vpop.permute.xlu0 %1145
        %1149 = vset.pattern.permute.xlu0 0
        %1150 = vperm.xlu0 %1149, %v1112
        %v1151 = vpop.permute.xlu0 %1150
        %1154 = vset.pattern.permute.xlu0 0
        %1155 = vperm.xlu0 %1154, %v1113
        %v1156 = vpop.permute.xlu0 %1155
        %1159 = vset.pattern.permute.xlu0 0
        %1160 = vperm.xlu0 %1159, %v1114
        %v1161 = vpop.permute.xlu0 %1160
        %1164 = vset.pattern.permute.xlu0 0
        %1165 = vperm.xlu0 %1164, %v1115
        %v1166 = vpop.permute.xlu0 %1165
        %1169 = vset.pattern.permute.xlu0 0
        %1170 = vperm.xlu0 %1169, %v1116
        %v1171 = vpop.permute.xlu0 %1170
        %1174 = vset.pattern.permute.xlu0 0
        %1175 = vperm.xlu0 %1174, %v1117
        %v1176 = vpop.permute.xlu0 %1175
        %1179 = vset.pattern.permute.xlu0 0
        %1180 = vperm.xlu0 %1179, %v1118
        %v1181 = vpop.permute.xlu0 %1180
        %1184 = vset.pattern.permute.xlu0 0
        %1185 = vperm.xlu0 %1184, %v1119
        %v1186 = vpop.permute.xlu0 %1185
        %1189 = vset.pattern.permute.xlu0 0
        %1190 = vperm.xlu0 %1189, %v1120
        %v1191 = vpop.permute.xlu0 %1190
        %1194 = vset.pattern.permute.xlu0 0
        %1195 = vperm.xlu0 %1194, %v1121
        %v1196 = vpop.permute.xlu0 %1195
        %1199 = vset.pattern.permute.xlu0 0
        %1200 = vperm.xlu0 %1199, %v1122
        %v1201 = vpop.permute.xlu0 %1200
        %1204 = vset.pattern.permute.xlu0 0
        %1205 = vperm.xlu0 %1204, %v1123
        %v1206 = vpop.permute.xlu0 %1205
        %1209 = vset.pattern.permute.xlu0 0
        %1210 = vperm.xlu0 %1209, %v1124
        %v1211 = vpop.permute.xlu0 %1210
        %1214 = vset.pattern.permute.xlu0 0
        %1215 = vperm.xlu0 %1214, %v1125
        %v1216 = vpop.permute.xlu0 %1215
        %1219 = vset.pattern.permute.xlu0 0
        %1220 = vperm.xlu0 %1219, %v1126
        %v1221 = vpop.permute.xlu0 %1220
        %1224 = vset.pattern.permute.xlu0 0
        %1225 = vperm.xlu0 %1224, %v1127
        %v1226 = vpop.permute.xlu0 %1225
        %1229 = vset.pattern.permute.xlu0 0
        %1230 = vperm.xlu0 %1229, %v1128
        %v1231 = vpop.permute.xlu0 %1230
        %1234 = vset.pattern.permute.xlu0 0
        %1235 = vperm.xlu0 %1234, %v1129
        %v1236 = vpop.permute.xlu0 %1235
        %1239 = vset.pattern.permute.xlu0 0
        %1240 = vperm.xlu0 %1239, %v1130
        %v1241 = vpop.permute.xlu0 %1240
        %1244 = vset.pattern.permute.xlu0 0
        %1245 = vperm.xlu0 %1244, %v1131
        %v1246 = vpop.permute.xlu0 %1245
        %1249 = vset.pattern.permute.xlu0 0
        %1250 = vperm.xlu0 %1249, %v1132
        %v1251 = vpop.permute.xlu0 %1250
        %1254 = vset.pattern.permute.xlu0 0
        %1255 = vperm.xlu0 %1254, %v1133
        %v1256 = vpop.permute.xlu0 %1255
        %1259 = vset.pattern.permute.xlu0 0
        %1260 = vperm.xlu0 %1259, %v1134
        %v1261 = vpop.permute.xlu0 %1260
        %1264 = vset.pattern.permute.xlu0 0
        %1265 = vperm.xlu0 %1264, %v1135
        %v1266 = vpop.permute.xlu0 %1265
        %1269 = vset.pattern.permute.xlu0 0
        %1270 = vperm.xlu0 %1269, %v1136
        %v1271 = vpop.permute.xlu0 %1270
        %1274 = vset.pattern.permute.xlu0 0
        %1275 = vperm.xlu0 %1274, %v1137
        %v1276 = vpop.permute.xlu0 %1275
        %1279 = vset.pattern.permute.xlu0 0
        %1280 = vperm.xlu0 %1279, %v1138
        %v1281 = vpop.permute.xlu0 %1280
        %1284 = vset.pattern.permute.xlu0 0
        %1285 = vperm.xlu0 %1284, %v1139
        %v1286 = vpop.permute.xlu0 %1285
        %1289 = vset.pattern.permute.xlu0 0
        %1290 = vperm.xlu0 %1289, %v1140
        %v1291 = vpop.permute.xlu0 %1290
        %1294 = vset.pattern.permute.xlu0 0
        %1295 = vperm.xlu0 %1294, %v1141
        %v1296 = vpop.permute.xlu0 %1295
        %1299 = vset.pattern.permute.xlu0 0
        %1300 = vperm.xlu0 %1299, %v1142
        %v1301 = vpop.permute.xlu0 %1300
        %v1303 = vmul.f32 %v953, %v1146
        %v1304 = vmul.f32 %v958, %v1151
        %v1305 = vmul.f32 %v963, %v1156
        %v1306 = vmul.f32 %v968, %v1161
        %v1307 = vmul.f32 %v973, %v1166
        %v1308 = vmul.f32 %v978, %v1171
        %v1309 = vmul.f32 %v983, %v1176
        %v1310 = vmul.f32 %v988, %v1181
        %v1311 = vmul.f32 %v993, %v1186
        %v1312 = vmul.f32 %v998, %v1191
        %v1313 = vmul.f32 %v1003, %v1196
        %v1314 = vmul.f32 %v1008, %v1201
        %v1315 = vmul.f32 %v1013, %v1206
        %v1316 = vmul.f32 %v1018, %v1211
        %v1317 = vmul.f32 %v1023, %v1216
        %v1318 = vmul.f32 %v1028, %v1221
        %v1319 = vmul.f32 %v1033, %v1226
        %v1320 = vmul.f32 %v1038, %v1231
        %v1321 = vmul.f32 %v1043, %v1236
        %v1322 = vmul.f32 %v1048, %v1241
        %v1323 = vmul.f32 %v1053, %v1246
        %v1324 = vmul.f32 %v1058, %v1251
        %v1325 = vmul.f32 %v1063, %v1256
        %v1326 = vmul.f32 %v1068, %v1261
        %v1327 = vmul.f32 %v1073, %v1266
        %v1328 = vmul.f32 %v1078, %v1271
        %v1329 = vmul.f32 %v1083, %v1276
        %v1330 = vmul.f32 %v1088, %v1281
        %v1331 = vmul.f32 %v1093, %v1286
        %v1332 = vmul.f32 %v1098, %v1291
        %v1333 = vmul.f32 %v1103, %v1296
        %v1334 = vmul.f32 %v1108, %v1301
        %1335 = vst.msk [vmem:[#allocation2] sm:$0xff] %vm462, %v1303
        %1336 = vst.msk [vmem:[#allocation2 + $0x8] sm:$0xff] %vm462, %v1304
        %1337 = vst.msk [vmem:[#allocation2 + $0x10] sm:$0xff] %vm462, %v1305
        %1338 = vst.msk [vmem:[#allocation2 + $0x18] sm:$0xff] %vm462, %v1306
        %1339 = vst.msk [vmem:[#allocation2 + $0x20] sm:$0xff] %vm462, %v1307
        %1340 = vst.msk [vmem:[#allocation2 + $0x28] sm:$0xff] %vm462, %v1308
        %1341 = vst.msk [vmem:[#allocation2 + $0x30] sm:$0xff] %vm462, %v1309
        %1342 = vst.msk [vmem:[#allocation2 + $0x38] sm:$0xff] %vm462, %v1310
        %1343 = vst.msk [vmem:[#allocation2 + $0x40] sm:$0xff] %vm462, %v1311
        %1344 = vst.msk [vmem:[#allocation2 + $0x48] sm:$0xff] %vm462, %v1312
        %1345 = vst.msk [vmem:[#allocation2 + $0x50] sm:$0xff] %vm462, %v1313
        %1346 = vst.msk [vmem:[#allocation2 + $0x58] sm:$0xff] %vm462, %v1314
        %1347 = vst.msk [vmem:[#allocation2 + $0x60] sm:$0xff] %vm462, %v1315
        %1348 = vst.msk [vmem:[#allocation2 + $0x68] sm:$0xff] %vm462, %v1316
        %1349 = vst.msk [vmem:[#allocation2 + $0x70] sm:$0xff] %vm462, %v1317
        %1350 = vst.msk [vmem:[#allocation2 + $0x78] sm:$0xff] %vm462, %v1318
        %1351 = vst.msk [vmem:[#allocation2 + $0x80] sm:$0xff] %vm462, %v1319
        %1352 = vst.msk [vmem:[#allocation2 + $0x88] sm:$0xff] %vm462, %v1320
        %1353 = vst.msk [vmem:[#allocation2 + $0x90] sm:$0xff] %vm462, %v1321
        %1354 = vst.msk [vmem:[#allocation2 + $0x98] sm:$0xff] %vm462, %v1322
        %1355 = vst.msk [vmem:[#allocation2 + $0xa0] sm:$0xff] %vm462, %v1323
        %1356 = vst.msk [vmem:[#allocation2 + $0xa8] sm:$0xff] %vm462, %v1324
        %1357 = vst.msk [vmem:[#allocation2 + $0xb0] sm:$0xff] %vm462, %v1325
        %1358 = vst.msk [vmem:[#allocation2 + $0xb8] sm:$0xff] %vm462, %v1326
        %1359 = vst.msk [vmem:[#allocation2 + $0xc0] sm:$0xff] %vm462, %v1327
        %1360 = vst.msk [vmem:[#allocation2 + $0xc8] sm:$0xff] %vm462, %v1328
        %1361 = vst.msk [vmem:[#allocation2 + $0xd0] sm:$0xff] %vm462, %v1329
        %1362 = vst.msk [vmem:[#allocation2 + $0xd8] sm:$0xff] %vm462, %v1330
        %1363 = vst.msk [vmem:[#allocation2 + $0xe0] sm:$0xff] %vm462, %v1331
        %1364 = vst.msk [vmem:[#allocation2 + $0xe8] sm:$0xff] %vm462, %v1332
        %1365 = vst.msk [vmem:[#allocation2 + $0xf0] sm:$0xff] %vm462, %v1333
        %1366 = vst.msk [vmem:[#allocation2 + $0xf8] sm:$0xff] %vm462, %v1334
      $region48: #{snl_stage_forward.14} parent=43 // pred_fallthru
        _
      %s1367 = smul.u32 %s25, 128
      %s1368 = scalar_lea.vmem %s384, %s1367
      %v1369 = vld [vmem:[%s1368] sm:$0xff]
      %v1370 = vld [vmem:[%s1368 + $0x8] sm:$0xff]
      %v1371 = vld [vmem:[%s1368 + $0x10] sm:$0xff]
      %v1372 = vld [vmem:[%s1368 + $0x18] sm:$0xff]
      %v1373 = vld [vmem:[%s1368 + $0x20] sm:$0xff]
      %v1374 = vld [vmem:[%s1368 + $0x28] sm:$0xff]
      %v1375 = vld [vmem:[%s1368 + $0x30] sm:$0xff]
      %v1376 = vld [vmem:[%s1368 + $0x38] sm:$0xff]
      %v1377 = vld [vmem:[%s1368 + $0x40] sm:$0xff]
      %v1378 = vld [vmem:[%s1368 + $0x48] sm:$0xff]
      %v1379 = vld [vmem:[%s1368 + $0x50] sm:$0xff]
      %v1380 = vld [vmem:[%s1368 + $0x58] sm:$0xff]
      %v1381 = vld [vmem:[%s1368 + $0x60] sm:$0xff]
      %v1382 = vld [vmem:[%s1368 + $0x68] sm:$0xff]
      %v1383 = vld [vmem:[%s1368 + $0x70] sm:$0xff]
      %v1384 = vld [vmem:[%s1368 + $0x78] sm:$0xff]
      %s1385 = scalar_lea.vmem %s389, %s1367
      %v1386 = vld [vmem:[%s1385] sm:$0xff]
      %v1387 = vld [vmem:[%s1385 + $0x8] sm:$0xff]
      %v1388 = vld [vmem:[%s1385 + $0x10] sm:$0xff]
      %v1389 = vld [vmem:[%s1385 + $0x18] sm:$0xff]
      %v1390 = vld [vmem:[%s1385 + $0x20] sm:$0xff]
      %v1391 = vld [vmem:[%s1385 + $0x28] sm:$0xff]
      %v1392 = vld [vmem:[%s1385 + $0x30] sm:$0xff]
      %v1393 = vld [vmem:[%s1385 + $0x38] sm:$0xff]
      %v1394 = vld [vmem:[%s1385 + $0x40] sm:$0xff]
      %v1395 = vld [vmem:[%s1385 + $0x48] sm:$0xff]
      %v1396 = vld [vmem:[%s1385 + $0x50] sm:$0xff]
      %v1397 = vld [vmem:[%s1385 + $0x58] sm:$0xff]
      %v1398 = vld [vmem:[%s1385 + $0x60] sm:$0xff]
      %v1399 = vld [vmem:[%s1385 + $0x68] sm:$0xff]
      %v1400 = vld [vmem:[%s1385 + $0x70] sm:$0xff]
      %v1401 = vld [vmem:[%s1385 + $0x78] sm:$0xff]
      %v1402 = vld [vmem:[%s3] sm:$0xff]
      %vm1403 = vcmask 64512
      %v1405 = vsel %vm1403, %v1369, 0
      %v1408 = vsel %vm1403, %v1370, 0
      %v1411 = vsel %vm1403, %v1371, 0
      %v1414 = vsel %vm1403, %v1372, 0
      %v1417 = vsel %vm1403, %v1373, 0
      %v1420 = vsel %vm1403, %v1374, 0
      %v1423 = vsel %vm1403, %v1375, 0
      %v1426 = vsel %vm1403, %v1376, 0
      %v1429 = vsel %vm1403, %v1377, 0
      %v1432 = vsel %vm1403, %v1378, 0
      %v1435 = vsel %vm1403, %v1379, 0
      %v1438 = vsel %vm1403, %v1380, 0
      %v1441 = vsel %vm1403, %v1381, 0
      %v1444 = vsel %vm1403, %v1382, 0
      %v1447 = vsel %vm1403, %v1383, 0
      %v1450 = vsel %vm1403, %v1384, 0
      %1452 = vmatprep.subr.mxu0 0.0
      %1453 = vmatpush1.msra.mxu0 %v1402
      %1454 = vmatprep.subr.mxu0 0.0
      %1455 = vmatpush1.msra.mxu0 0.0
      %1456 = vmatprep.subr.mxu0 0.0
      %1457 = vmatpush1.msra.mxu0 0.0
      %1458 = vmatprep.subr.mxu0 0.0
      %1459 = vmatpush1.msra.mxu0 0.0
      %1460 = vmatprep.subr.mxu0 0.0
      %1461 = vmatpush1.msra.mxu0 0.0
      %1462 = vmatprep.subr.mxu0 0.0
      %1463 = vmatpush1.msra.mxu0 0.0
      %1464 = vmatprep.subr.mxu0 0.0
      %1465 = vmatpush1.msra.mxu0 0.0
      %1466 = vmatprep.subr.mxu0 0.0
      %1467 = vmatpush1.msra.mxu0 0.0
      %1468 = vmatprep.subr.mxu0 0.0
      %1469 = vmatpush1.msra.mxu0 0.0
      %1470 = vmatprep.subr.mxu0 0.0
      %1471 = vmatpush1.msra.mxu0 0.0
      %1472 = vmatprep.subr.mxu0 0.0
      %1473 = vmatpush1.msra.mxu0 0.0
      %1474 = vmatprep.subr.mxu0 0.0
      %1475 = vmatpush1.msra.mxu0 0.0
      %1476 = vmatprep.subr.mxu0 0.0
      %1477 = vmatpush1.msra.mxu0 0.0
      %1478 = vmatprep.subr.mxu0 0.0
      %1479 = vmatpush1.msra.mxu0 0.0
      %1480 = vmatprep.subr.mxu0 0.0
      %1481 = vmatpush1.msra.mxu0 0.0
      %1482 = vmatprep.subr.mxu0 0.0
      %1483 = vmatpush1.msra.mxu0 0.0
      %1484 = vmatprep.subr.mxu0 0.0
      %1485 = vmatpush1.msra.mxu0 0.0
      %1486 = vmatprep.subr.mxu0 0.0
      %1487 = vmatpush1.msra.mxu0 0.0
      %1488 = vmatprep.subr.mxu0 0.0
      %1489 = vmatpush1.msra.mxu0 0.0
      %1490 = vmatprep.subr.mxu0 0.0
      %1491 = vmatpush1.msra.mxu0 0.0
      %1492 = vmatprep.subr.mxu0 0.0
      %1493 = vmatpush1.msra.mxu0 0.0
      %1494 = vmatprep.subr.mxu0 0.0
      %1495 = vmatpush1.msra.mxu0 0.0
      %1496 = vmatprep.subr.mxu0 0.0
      %1497 = vmatpush1.msra.mxu0 0.0
      %1498 = vmatprep.subr.mxu0 0.0
      %1499 = vmatpush1.msra.mxu0 0.0
      %1500 = vmatprep.subr.mxu0 0.0
      %1501 = vmatpush1.msra.mxu0 0.0
      %1502 = vmatprep.subr.mxu0 0.0
      %1503 = vmatpush1.msra.mxu0 0.0
      %1504 = vmatprep.subr.mxu0 0.0
      %1505 = vmatpush1.msra.mxu0 0.0
      %1506 = vmatprep.subr.mxu0 0.0
      %1507 = vmatpush1.msra.mxu0 0.0
      %1508 = vmatprep.subr.mxu0 0.0
      %1509 = vmatpush1.msra.mxu0 0.0
      %1510 = vmatprep.subr.mxu0 0.0
      %1511 = vmatpush1.msra.mxu0 0.0
      %1512 = vmatprep.subr.mxu0 0.0
      %1513 = vmatpush1.msra.mxu0 0.0
      %1514 = vmatprep.subr.mxu0 0.0
      %1515 = vmatpush1.msra.mxu0 0.0
      %1516 = vmatprep.mubr.f32.mxu0 0.0
      %1517 = vmatmul.mubr.f32.gmra.mrb[0].mxu0 %v1405
      %v1518 = vpop.f32.mrb[0].mxu0
      %v1519 = vadd.f32 0.0, %v1518
      %v1520 = vpop.f32.mrb[0].mxu0
      %1521 = vmatprep.mubr.f32.mxu0 0.0
      %1522 = vmatmul.mubr.f32.gmra.mrb[0].mxu0 %v1408
      %v1523 = vpop.f32.mrb[0].mxu0
      %v1524 = vadd.f32 0.0, %v1523
      %v1525 = vpop.f32.mrb[0].mxu0
      %1526 = vmatprep.mubr.f32.mxu0 0.0
      %1527 = vmatmul.mubr.f32.gmra.mrb[0].mxu0 %v1411
      %v1528 = vpop.f32.mrb[0].mxu0
      %v1529 = vadd.f32 0.0, %v1528
      %v1530 = vpop.f32.mrb[0].mxu0
      %1531 = vmatprep.mubr.f32.mxu0 0.0
      %1532 = vmatmul.mubr.f32.gmra.mrb[0].mxu0 %v1414
      %v1533 = vpop.f32.mrb[0].mxu0
      %v1534 = vadd.f32 0.0, %v1533
      %v1535 = vpop.f32.mrb[0].mxu0
      %1536 = vmatprep.mubr.f32.mxu0 0.0
      %1537 = vmatmul.mubr.f32.gmra.mrb[0].mxu0 %v1417
      %v1538 = vpop.f32.mrb[0].mxu0
      %v1539 = vadd.f32 0.0, %v1538
      %v1540 = vpop.f32.mrb[0].mxu0
      %1541 = vmatprep.mubr.f32.mxu0 0.0
      %1542 = vmatmul.mubr.f32.gmra.mrb[0].mxu0 %v1420
      %v1543 = vpop.f32.mrb[0].mxu0
      %v1544 = vadd.f32 0.0, %v1543
      %v1545 = vpop.f32.mrb[0].mxu0
      %1546 = vmatprep.mubr.f32.mxu0 0.0
      %1547 = vmatmul.mubr.f32.gmra.mrb[0].mxu0 %v1423
      %v1548 = vpop.f32.mrb[0].mxu0
      %v1549 = vadd.f32 0.0, %v1548
      %v1550 = vpop.f32.mrb[0].mxu0
      %1551 = vmatprep.mubr.f32.mxu0 0.0
      %1552 = vmatmul.mubr.f32.gmra.mrb[0].mxu0 %v1426
      %v1553 = vpop.f32.mrb[0].mxu0
      %v1554 = vadd.f32 0.0, %v1553
      %v1555 = vpop.f32.mrb[0].mxu0
      %1556 = vmatprep.mubr.f32.mxu0 0.0
      %1557 = vmatmul.mubr.f32.gmra.mrb[0].mxu0 %v1429
      %v1558 = vpop.f32.mrb[0].mxu0
      %v1559 = vadd.f32 0.0, %v1558
      %v1560 = vpop.f32.mrb[0].mxu0
      %1561 = vmatprep.mubr.f32.mxu0 0.0
      %1562 = vmatmul.mubr.f32.gmra.mrb[0].mxu0 %v1432
      %v1563 = vpop.f32.mrb[0].mxu0
      %v1564 = vadd.f32 0.0, %v1563
      %v1565 = vpop.f32.mrb[0].mxu0
      %1566 = vmatprep.mubr.f32.mxu0 0.0
      %1567 = vmatmul.mubr.f32.gmra.mrb[0].mxu0 %v1435
      %v1568 = vpop.f32.mrb[0].mxu0
      %v1569 = vadd.f32 0.0, %v1568
      %v1570 = vpop.f32.mrb[0].mxu0
      %1571 = vmatprep.mubr.f32.mxu0 0.0
      %1572 = vmatmul.mubr.f32.gmra.mrb[0].mxu0 %v1438
      %v1573 = vpop.f32.mrb[0].mxu0
      %v1574 = vadd.f32 0.0, %v1573
      %v1575 = vpop.f32.mrb[0].mxu0
      %1576 = vmatprep.mubr.f32.mxu0 0.0
      %1577 = vmatmul.mubr.f32.gmra.mrb[0].mxu0 %v1441
      %v1578 = vpop.f32.mrb[0].mxu0
      %v1579 = vadd.f32 0.0, %v1578
      %v1580 = vpop.f32.mrb[0].mxu0
      %1581 = vmatprep.mubr.f32.mxu0 0.0
      %1582 = vmatmul.mubr.f32.gmra.mrb[0].mxu0 %v1444
      %v1583 = vpop.f32.mrb[0].mxu0
      %v1584 = vadd.f32 0.0, %v1583
      %v1585 = vpop.f32.mrb[0].mxu0
      %1586 = vmatprep.mubr.f32.mxu0 0.0
      %1587 = vmatmul.mubr.f32.gmra.mrb[0].mxu0 %v1447
      %v1588 = vpop.f32.mrb[0].mxu0
      %v1589 = vadd.f32 0.0, %v1588
      %v1590 = vpop.f32.mrb[0].mxu0
      %1591 = vmatprep.mubr.f32.mxu0 0.0
      %1592 = vmatmul.mubr.f32.gmra.mrb[0].mxu0 %v1450
      %v1593 = vpop.f32.mrb[0].mxu0
      %v1594 = vadd.f32 0.0, %v1593
      %v1595 = vpop.f32.mrb[0].mxu0
      %1596 = vdwg.mxu0
      %v1597 = vld [vmem:[%s4] sm:$0xf]
      %vm1598 = vcmask 31744
      %v1600 = vsel %vm1598, %v1519, 0
      %v1603 = vsel %vm1598, %v1524, 0
      %v1606 = vsel %vm1598, %v1529, 0
      %v1609 = vsel %vm1598, %v1534, 0
      %v1612 = vsel %vm1598, %v1539, 0
      %v1615 = vsel %vm1598, %v1544, 0
      %v1618 = vsel %vm1598, %v1549, 0
      %v1621 = vsel %vm1598, %v1554, 0
      %v1624 = vsel %vm1598, %v1559, 0
      %v1627 = vsel %vm1598, %v1564, 0
      %v1630 = vsel %vm1598, %v1569, 0
      %v1633 = vsel %vm1598, %v1574, 0
      %v1636 = vsel %vm1598, %v1579, 0
      %v1639 = vsel %vm1598, %v1584, 0
      %v1642 = vsel %vm1598, %v1589, 0
      %v1645 = vsel %vm1598, %v1594, 0
      %vm1647 = vcmask 1043456
      %v1649 = vsel %vm1647, %v1597, 0
      %1651 = vmatprep.subr.mxu0 0.0
      %1652 = vmatpush1.msra.mxu0 %v1649
      %1653 = vmatprep.subr.mxu0 0.0
      %1654 = vmatpush1.msra.mxu0 0.0
      %1655 = vmatprep.subr.mxu0 0.0
      %1656 = vmatpush1.msra.mxu0 0.0
      %1657 = vmatprep.subr.mxu0 0.0
      %1658 = vmatpush1.msra.mxu0 0.0
      %1659 = vmatprep.subr.mxu0 0.0
      %1660 = vmatpush1.msra.mxu0 0.0
      %1661 = vmatprep.subr.mxu0 0.0
      %1662 = vmatpush1.msra.mxu0 0.0
      %1663 = vmatprep.subr.mxu0 0.0
      %1664 = vmatpush1.msra.mxu0 0.0
      %1665 = vmatprep.subr.mxu0 0.0
      %1666 = vmatpush1.msra.mxu0 0.0
      %1667 = vmatprep.subr.mxu0 0.0
      %1668 = vmatpush1.msra.mxu0 0.0
      %1669 = vmatprep.subr.mxu0 0.0
      %1670 = vmatpush1.msra.mxu0 0.0
      %1671 = vmatprep.subr.mxu0 0.0
      %1672 = vmatpush1.msra.mxu0 0.0
      %1673 = vmatprep.subr.mxu0 0.0
      %1674 = vmatpush1.msra.mxu0 0.0
      %1675 = vmatprep.subr.mxu0 0.0
      %1676 = vmatpush1.msra.mxu0 0.0
      %1677 = vmatprep.subr.mxu0 0.0
      %1678 = vmatpush1.msra.mxu0 0.0
      %1679 = vmatprep.subr.mxu0 0.0
      %1680 = vmatpush1.msra.mxu0 0.0
      %1681 = vmatprep.subr.mxu0 0.0
      %1682 = vmatpush1.msra.mxu0 0.0
      %1683 = vmatprep.subr.mxu0 0.0
      %1684 = vmatpush1.msra.mxu0 0.0
      %1685 = vmatprep.subr.mxu0 0.0
      %1686 = vmatpush1.msra.mxu0 0.0
      %1687 = vmatprep.subr.mxu0 0.0
      %1688 = vmatpush1.msra.mxu0 0.0
      %1689 = vmatprep.subr.mxu0 0.0
      %1690 = vmatpush1.msra.mxu0 0.0
      %1691 = vmatprep.subr.mxu0 0.0
      %1692 = vmatpush1.msra.mxu0 0.0
      %1693 = vmatprep.subr.mxu0 0.0
      %1694 = vmatpush1.msra.mxu0 0.0
      %1695 = vmatprep.subr.mxu0 0.0
      %1696 = vmatpush1.msra.mxu0 0.0
      %1697 = vmatprep.subr.mxu0 0.0
      %1698 = vmatpush1.msra.mxu0 0.0
      %1699 = vmatprep.subr.mxu0 0.0
      %1700 = vmatpush1.msra.mxu0 0.0
      %1701 = vmatprep.subr.mxu0 0.0
      %1702 = vmatpush1.msra.mxu0 0.0
      %1703 = vmatprep.subr.mxu0 0.0
      %1704 = vmatpush1.msra.mxu0 0.0
      %1705 = vmatprep.subr.mxu0 0.0
      %1706 = vmatpush1.msra.mxu0 0.0
      %1707 = vmatprep.subr.mxu0 0.0
      %1708 = vmatpush1.msra.mxu0 0.0
      %1709 = vmatprep.subr.mxu0 0.0
      %1710 = vmatpush1.msra.mxu0 0.0
      %1711 = vmatprep.subr.mxu0 0.0
      %1712 = vmatpush1.msra.mxu0 0.0
      %1713 = vmatprep.subr.mxu0 0.0
      %1714 = vmatpush1.msra.mxu0 0.0
      %1715 = vmatprep.mubr.f32.mxu0 0.0
      %1716 = vmatmul.mubr.f32.gmra.mrb[0].mxu0 %v1600
      %v1717 = vpop.f32.mrb[0].mxu0
      %v1718 = vadd.f32 0.0, %v1717
      %v1719 = vpop.f32.mrb[0].mxu0
      %1720 = vmatprep.mubr.f32.mxu0 0.0
      %1721 = vmatmul.mubr.f32.gmra.mrb[0].mxu0 %v1603
      %v1722 = vpop.f32.mrb[0].mxu0
      %v1723 = vadd.f32 0.0, %v1722
      %v1724 = vpop.f32.mrb[0].mxu0
      %1725 = vmatprep.mubr.f32.mxu0 0.0
      %1726 = vmatmul.mubr.f32.gmra.mrb[0].mxu0 %v1606
      %v1727 = vpop.f32.mrb[0].mxu0
      %v1728 = vadd.f32 0.0, %v1727
      %v1729 = vpop.f32.mrb[0].mxu0
      %1730 = vmatprep.mubr.f32.mxu0 0.0
      %1731 = vmatmul.mubr.f32.gmra.mrb[0].mxu0 %v1609
      %v1732 = vpop.f32.mrb[0].mxu0
      %v1733 = vadd.f32 0.0, %v1732
      %v1734 = vpop.f32.mrb[0].mxu0
      %1735 = vmatprep.mubr.f32.mxu0 0.0
      %1736 = vmatmul.mubr.f32.gmra.mrb[0].mxu0 %v1612
      %v1737 = vpop.f32.mrb[0].mxu0
      %v1738 = vadd.f32 0.0, %v1737
      %v1739 = vpop.f32.mrb[0].mxu0
      %1740 = vmatprep.mubr.f32.mxu0 0.0
      %1741 = vmatmul.mubr.f32.gmra.mrb[0].mxu0 %v1615
      %v1742 = vpop.f32.mrb[0].mxu0
      %v1743 = vadd.f32 0.0, %v1742
      %v1744 = vpop.f32.mrb[0].mxu0
      %1745 = vmatprep.mubr.f32.mxu0 0.0
      %1746 = vmatmul.mubr.f32.gmra.mrb[0].mxu0 %v1618
      %v1747 = vpop.f32.mrb[0].mxu0
      %v1748 = vadd.f32 0.0, %v1747
      %v1749 = vpop.f32.mrb[0].mxu0
      %1750 = vmatprep.mubr.f32.mxu0 0.0
      %1751 = vmatmul.mubr.f32.gmra.mrb[0].mxu0 %v1621
      %v1752 = vpop.f32.mrb[0].mxu0
      %v1753 = vadd.f32 0.0, %v1752
      %v1754 = vpop.f32.mrb[0].mxu0
      %1755 = vmatprep.mubr.f32.mxu0 0.0
      %1756 = vmatmul.mubr.f32.gmra.mrb[0].mxu0 %v1624
      %v1757 = vpop.f32.mrb[0].mxu0
      %v1758 = vadd.f32 0.0, %v1757
      %v1759 = vpop.f32.mrb[0].mxu0
      %1760 = vmatprep.mubr.f32.mxu0 0.0
      %1761 = vmatmul.mubr.f32.gmra.mrb[0].mxu0 %v1627
      %v1762 = vpop.f32.mrb[0].mxu0
      %v1763 = vadd.f32 0.0, %v1762
      %v1764 = vpop.f32.mrb[0].mxu0
      %1765 = vmatprep.mubr.f32.mxu0 0.0
      %1766 = vmatmul.mubr.f32.gmra.mrb[0].mxu0 %v1630
      %v1767 = vpop.f32.mrb[0].mxu0
      %v1768 = vadd.f32 0.0, %v1767
      %v1769 = vpop.f32.mrb[0].mxu0
      %1770 = vmatprep.mubr.f32.mxu0 0.0
      %1771 = vmatmul.mubr.f32.gmra.mrb[0].mxu0 %v1633
      %v1772 = vpop.f32.mrb[0].mxu0
      %v1773 = vadd.f32 0.0, %v1772
      %v1774 = vpop.f32.mrb[0].mxu0
      %1775 = vmatprep.mubr.f32.mxu0 0.0
      %1776 = vmatmul.mubr.f32.gmra.mrb[0].mxu0 %v1636
      %v1777 = vpop.f32.mrb[0].mxu0
      %v1778 = vadd.f32 0.0, %v1777
      %v1779 = vpop.f32.mrb[0].mxu0
      %1780 = vmatprep.mubr.f32.mxu0 0.0
      %1781 = vmatmul.mubr.f32.gmra.mrb[0].mxu0 %v1639
      %v1782 = vpop.f32.mrb[0].mxu0
      %v1783 = vadd.f32 0.0, %v1782
      %v1784 = vpop.f32.mrb[0].mxu0
      %1785 = vmatprep.mubr.f32.mxu0 0.0
      %1786 = vmatmul.mubr.f32.gmra.mrb[0].mxu0 %v1642
      %v1787 = vpop.f32.mrb[0].mxu0
      %v1788 = vadd.f32 0.0, %v1787
      %v1789 = vpop.f32.mrb[0].mxu0
      %1790 = vmatprep.mubr.f32.mxu0 0.0
      %1791 = vmatmul.mubr.f32.gmra.mrb[0].mxu0 %v1645
      %v1792 = vpop.f32.mrb[0].mxu0
      %v1793 = vadd.f32 0.0, %v1792
      %v1794 = vpop.f32.mrb[0].mxu0
      %1795 = vdwg.mxu0
      %v1796 = vld [vmem:[%s399] sm:$0xff]
      %v1797 = vld [vmem:[%s399 + $0x8] sm:$0xff]
      %v1798 = vld [vmem:[%s399 + $0x10] sm:$0xff]
      %v1799 = vld [vmem:[%s399 + $0x18] sm:$0xff]
      %v1800 = vld [vmem:[%s399 + $0x20] sm:$0xff]
      %v1801 = vld [vmem:[%s399 + $0x28] sm:$0xff]
      %v1802 = vld [vmem:[%s399 + $0x30] sm:$0xff]
      %v1803 = vld [vmem:[%s399 + $0x38] sm:$0xff]
      %v1804 = vld [vmem:[%s399 + $0x40] sm:$0xff]
      %v1805 = vld [vmem:[%s399 + $0x48] sm:$0xff]
      %v1806 = vld [vmem:[%s399 + $0x50] sm:$0xff]
      %v1807 = vld [vmem:[%s399 + $0x58] sm:$0xff]
      %v1808 = vld [vmem:[%s399 + $0x60] sm:$0xff]
      %v1809 = vld [vmem:[%s399 + $0x68] sm:$0xff]
      %v1810 = vld [vmem:[%s399 + $0x70] sm:$0xff]
      %v1811 = vld [vmem:[%s399 + $0x78] sm:$0xff]
      %v1812 = vld [vmem:[%s399 + $0x80] sm:$0xff]
      %v1813 = vld [vmem:[%s399 + $0x88] sm:$0xff]
      %v1814 = vld [vmem:[%s399 + $0x90] sm:$0xff]
      %v1815 = vld [vmem:[%s399 + $0x98] sm:$0xff]
      %v1816 = vld [vmem:[%s399 + $0xa0] sm:$0xff]
      %v1817 = vld [vmem:[%s399 + $0xa8] sm:$0xff]
      %v1818 = vld [vmem:[%s399 + $0xb0] sm:$0xff]
      %v1819 = vld [vmem:[%s399 + $0xb8] sm:$0xff]
      %v1820 = vld [vmem:[%s399 + $0xc0] sm:$0xff]
      %v1821 = vld [vmem:[%s399 + $0xc8] sm:$0xff]
      %v1822 = vld [vmem:[%s399 + $0xd0] sm:$0xff]
      %v1823 = vld [vmem:[%s399 + $0xd8] sm:$0xff]
      %v1824 = vld [vmem:[%s399 + $0xe0] sm:$0xff]
      %v1825 = vld [vmem:[%s399 + $0xe8] sm:$0xff]
      %v1826 = vld [vmem:[%s399 + $0xf0] sm:$0xff]
      %v1827 = vld [vmem:[%s399 + $0xf8] sm:$0xff]
      %v1828 = vld [vmem:[#allocation2] sm:$0xff]
      %v1829 = vld [vmem:[#allocation2 + $0x8] sm:$0xff]
      %v1830 = vld [vmem:[#allocation2 + $0x10] sm:$0xff]
      %v1831 = vld [vmem:[#allocation2 + $0x18] sm:$0xff]
      %v1832 = vld [vmem:[#allocation2 + $0x20] sm:$0xff]
      %v1833 = vld [vmem:[#allocation2 + $0x28] sm:$0xff]
      %v1834 = vld [vmem:[#allocation2 + $0x30] sm:$0xff]
      %v1835 = vld [vmem:[#allocation2 + $0x38] sm:$0xff]
      %v1836 = vld [vmem:[#allocation2 + $0x40] sm:$0xff]
      %v1837 = vld [vmem:[#allocation2 + $0x48] sm:$0xff]
      %v1838 = vld [vmem:[#allocation2 + $0x50] sm:$0xff]
      %v1839 = vld [vmem:[#allocation2 + $0x58] sm:$0xff]
      %v1840 = vld [vmem:[#allocation2 + $0x60] sm:$0xff]
      %v1841 = vld [vmem:[#allocation2 + $0x68] sm:$0xff]
      %v1842 = vld [vmem:[#allocation2 + $0x70] sm:$0xff]
      %v1843 = vld [vmem:[#allocation2 + $0x78] sm:$0xff]
      %v1844 = vld [vmem:[#allocation2 + $0x80] sm:$0xff]
      %v1845 = vld [vmem:[#allocation2 + $0x88] sm:$0xff]
      %v1846 = vld [vmem:[#allocation2 + $0x90] sm:$0xff]
      %v1847 = vld [vmem:[#allocation2 + $0x98] sm:$0xff]
      %v1848 = vld [vmem:[#allocation2 + $0xa0] sm:$0xff]
      %v1849 = vld [vmem:[#allocation2 + $0xa8] sm:$0xff]
      %v1850 = vld [vmem:[#allocation2 + $0xb0] sm:$0xff]
      %v1851 = vld [vmem:[#allocation2 + $0xb8] sm:$0xff]
      %v1852 = vld [vmem:[#allocation2 + $0xc0] sm:$0xff]
      %v1853 = vld [vmem:[#allocation2 + $0xc8] sm:$0xff]
      %v1854 = vld [vmem:[#allocation2 + $0xd0] sm:$0xff]
      %v1855 = vld [vmem:[#allocation2 + $0xd8] sm:$0xff]
      %v1856 = vld [vmem:[#allocation2 + $0xe0] sm:$0xff]
      %v1857 = vld [vmem:[#allocation2 + $0xe8] sm:$0xff]
      %v1858 = vld [vmem:[#allocation2 + $0xf0] sm:$0xff]
      %v1859 = vld [vmem:[#allocation2 + $0xf8] sm:$0xff]
      %1860 = vmatprep.subr.mxu0 0.0
      %1861 = vmatpush1.msra.mxu0 %v1828
      %1862 = vmatprep.subr.mxu0 0.0
      %1863 = vmatpush1.msra.mxu0 %v1829
      %1864 = vmatprep.subr.mxu0 0.0
      %1865 = vmatpush1.msra.mxu0 %v1830
      %1866 = vmatprep.subr.mxu0 0.0
      %1867 = vmatpush1.msra.mxu0 %v1831
      %1868 = vmatprep.subr.mxu0 0.0
      %1869 = vmatpush1.msra.mxu0 %v1832
      %1870 = vmatprep.subr.mxu0 0.0
      %1871 = vmatpush1.msra.mxu0 %v1833
      %1872 = vmatprep.subr.mxu0 0.0
      %1873 = vmatpush1.msra.mxu0 %v1834
      %1874 = vmatprep.subr.mxu0 0.0
      %1875 = vmatpush1.msra.mxu0 %v1835
      %1876 = vmatprep.subr.mxu0 0.0
      %1877 = vmatpush1.msra.mxu0 %v1836
      %1878 = vmatprep.subr.mxu0 0.0
      %1879 = vmatpush1.msra.mxu0 %v1837
      %1880 = vmatprep.subr.mxu0 0.0
      %1881 = vmatpush1.msra.mxu0 %v1838
      %1882 = vmatprep.subr.mxu0 0.0
      %1883 = vmatpush1.msra.mxu0 %v1839
      %1884 = vmatprep.subr.mxu0 0.0
      %1885 = vmatpush1.msra.mxu0 %v1840
      %1886 = vmatprep.subr.mxu0 0.0
      %1887 = vmatpush1.msra.mxu0 %v1841
      %1888 = vmatprep.subr.mxu0 0.0
      %1889 = vmatpush1.msra.mxu0 %v1842
      %1890 = vmatprep.subr.mxu0 0.0
      %1891 = vmatpush1.msra.mxu0 %v1843
      %1892 = vmatprep.subr.mxu0 0.0
      %1893 = vmatpush1.msra.mxu0 %v1844
      %1894 = vmatprep.subr.mxu0 0.0
      %1895 = vmatpush1.msra.mxu0 %v1845
      %1896 = vmatprep.subr.mxu0 0.0
      %1897 = vmatpush1.msra.mxu0 %v1846
      %1898 = vmatprep.subr.mxu0 0.0
      %1899 = vmatpush1.msra.mxu0 %v1847
      %1900 = vmatprep.subr.mxu0 0.0
      %1901 = vmatpush1.msra.mxu0 %v1848
      %1902 = vmatprep.subr.mxu0 0.0
      %1903 = vmatpush1.msra.mxu0 %v1849
      %1904 = vmatprep.subr.mxu0 0.0
      %1905 = vmatpush1.msra.mxu0 %v1850
      %1906 = vmatprep.subr.mxu0 0.0
      %1907 = vmatpush1.msra.mxu0 %v1851
      %1908 = vmatprep.subr.mxu0 0.0
      %1909 = vmatpush1.msra.mxu0 %v1852
      %1910 = vmatprep.subr.mxu0 0.0
      %1911 = vmatpush1.msra.mxu0 %v1853
      %1912 = vmatprep.subr.mxu0 0.0
      %1913 = vmatpush1.msra.mxu0 %v1854
      %1914 = vmatprep.subr.mxu0 0.0
      %1915 = vmatpush1.msra.mxu0 %v1855
      %1916 = vmatprep.subr.mxu0 0.0
      %1917 = vmatpush1.msra.mxu0 %v1856
      %1918 = vmatprep.subr.mxu0 0.0
      %1919 = vmatpush1.msra.mxu0 %v1857
      %1920 = vmatprep.subr.mxu0 0.0
      %1921 = vmatpush1.msra.mxu0 %v1858
      %1922 = vmatprep.subr.mxu0 0.0
      %1923 = vmatpush1.msra.mxu0 %v1859
      %1924 = vmatprep.mubr.f32.mxu0 %v1797
      %1925 = vmatmul.mubr.f32.gmra.mrb[0].mxu0 %v1796
      %v1926 = vpop.f32.mrb[0].mxu0
      %v1927 = vadd.f32 0.0, %v1926
      %v1928 = vpop.f32.mrb[0].mxu0
      %1929 = vmatprep.mubr.f32.mxu0 %v1799
      %1930 = vmatmul.mubr.f32.gmra.mrb[0].mxu0 %v1798
      %v1931 = vpop.f32.mrb[0].mxu0
      %v1932 = vadd.f32 0.0, %v1931
      %v1933 = vpop.f32.mrb[0].mxu0
      %1934 = vmatprep.mubr.f32.mxu0 %v1801
      %1935 = vmatmul.mubr.f32.gmra.mrb[0].mxu0 %v1800
      %v1936 = vpop.f32.mrb[0].mxu0
      %v1937 = vadd.f32 0.0, %v1936
      %v1938 = vpop.f32.mrb[0].mxu0
      %1939 = vmatprep.mubr.f32.mxu0 %v1803
      %1940 = vmatmul.mubr.f32.gmra.mrb[0].mxu0 %v1802
      %v1941 = vpop.f32.mrb[0].mxu0
      %v1942 = vadd.f32 0.0, %v1941
      %v1943 = vpop.f32.mrb[0].mxu0
      %1944 = vmatprep.mubr.f32.mxu0 %v1805
      %1945 = vmatmul.mubr.f32.gmra.mrb[0].mxu0 %v1804
      %v1946 = vpop.f32.mrb[0].mxu0
      %v1947 = vadd.f32 0.0, %v1946
      %v1948 = vpop.f32.mrb[0].mxu0
      %1949 = vmatprep.mubr.f32.mxu0 %v1807
      %1950 = vmatmul.mubr.f32.gmra.mrb[0].mxu0 %v1806
      %v1951 = vpop.f32.mrb[0].mxu0
      %v1952 = vadd.f32 0.0, %v1951
      %v1953 = vpop.f32.mrb[0].mxu0
      %1954 = vmatprep.mubr.f32.mxu0 %v1809
      %1955 = vmatmul.mubr.f32.gmra.mrb[0].mxu0 %v1808
      %v1956 = vpop.f32.mrb[0].mxu0
      %v1957 = vadd.f32 0.0, %v1956
      %v1958 = vpop.f32.mrb[0].mxu0
      %1959 = vmatprep.mubr.f32.mxu0 %v1811
      %1960 = vmatmul.mubr.f32.gmra.mrb[0].mxu0 %v1810
      %v1961 = vpop.f32.mrb[0].mxu0
      %v1962 = vadd.f32 0.0, %v1961
      %v1963 = vpop.f32.mrb[0].mxu0
      %1964 = vmatprep.mubr.f32.mxu0 %v1813
      %1965 = vmatmul.mubr.f32.gmra.mrb[0].mxu0 %v1812
      %v1966 = vpop.f32.mrb[0].mxu0
      %v1967 = vadd.f32 0.0, %v1966
      %v1968 = vpop.f32.mrb[0].mxu0
      %1969 = vmatprep.mubr.f32.mxu0 %v1815
      %1970 = vmatmul.mubr.f32.gmra.mrb[0].mxu0 %v1814
      %v1971 = vpop.f32.mrb[0].mxu0
      %v1972 = vadd.f32 0.0, %v1971
      %v1973 = vpop.f32.mrb[0].mxu0
      %1974 = vmatprep.mubr.f32.mxu0 %v1817
      %1975 = vmatmul.mubr.f32.gmra.mrb[0].mxu0 %v1816
      %v1976 = vpop.f32.mrb[0].mxu0
      %v1977 = vadd.f32 0.0, %v1976
      %v1978 = vpop.f32.mrb[0].mxu0
      %1979 = vmatprep.mubr.f32.mxu0 %v1819
      %1980 = vmatmul.mubr.f32.gmra.mrb[0].mxu0 %v1818
      %v1981 = vpop.f32.mrb[0].mxu0
      %v1982 = vadd.f32 0.0, %v1981
      %v1983 = vpop.f32.mrb[0].mxu0
      %1984 = vmatprep.mubr.f32.mxu0 %v1821
      %1985 = vmatmul.mubr.f32.gmra.mrb[0].mxu0 %v1820
      %v1986 = vpop.f32.mrb[0].mxu0
      %v1987 = vadd.f32 0.0, %v1986
      %v1988 = vpop.f32.mrb[0].mxu0
      %1989 = vmatprep.mubr.f32.mxu0 %v1823
      %1990 = vmatmul.mubr.f32.gmra.mrb[0].mxu0 %v1822
      %v1991 = vpop.f32.mrb[0].mxu0
      %v1992 = vadd.f32 0.0, %v1991
      %v1993 = vpop.f32.mrb[0].mxu0
      %1994 = vmatprep.mubr.f32.mxu0 %v1825
      %1995 = vmatmul.mubr.f32.gmra.mrb[0].mxu0 %v1824
      %v1996 = vpop.f32.mrb[0].mxu0
      %v1997 = vadd.f32 0.0, %v1996
      %v1998 = vpop.f32.mrb[0].mxu0
      %1999 = vmatprep.mubr.f32.mxu0 %v1827
      %2000 = vmatmul.mubr.f32.gmra.mrb[0].mxu0 %v1826
      %v2001 = vpop.f32.mrb[0].mxu0
      %v2002 = vadd.f32 0.0, %v2001
      %v2003 = vpop.f32.mrb[0].mxu0
      %2004 = vdwg.mxu0
      %2006 = vset.pattern.permute.xlu0 0
      %2007 = vperm.xlu0 %2006, %v1386
      %v2008 = vpop.permute.xlu0 %2007
      %2011 = vset.pattern.permute.xlu0 0
      %2012 = vperm.xlu0 %2011, %v1387
      %v2013 = vpop.permute.xlu0 %2012
      %2016 = vset.pattern.permute.xlu0 0
      %2017 = vperm.xlu0 %2016, %v1388
      %v2018 = vpop.permute.xlu0 %2017
      %2021 = vset.pattern.permute.xlu0 0
      %2022 = vperm.xlu0 %2021, %v1389
      %v2023 = vpop.permute.xlu0 %2022
      %2026 = vset.pattern.permute.xlu0 0
      %2027 = vperm.xlu0 %2026, %v1390
      %v2028 = vpop.permute.xlu0 %2027
      %2031 = vset.pattern.permute.xlu0 0
      %2032 = vperm.xlu0 %2031, %v1391
      %v2033 = vpop.permute.xlu0 %2032
      %2036 = vset.pattern.permute.xlu0 0
      %2037 = vperm.xlu0 %2036, %v1392
      %v2038 = vpop.permute.xlu0 %2037
      %2041 = vset.pattern.permute.xlu0 0
      %2042 = vperm.xlu0 %2041, %v1393
      %v2043 = vpop.permute.xlu0 %2042
      %2046 = vset.pattern.permute.xlu0 0
      %2047 = vperm.xlu0 %2046, %v1394
      %v2048 = vpop.permute.xlu0 %2047
      %2051 = vset.pattern.permute.xlu0 0
      %2052 = vperm.xlu0 %2051, %v1395
      %v2053 = vpop.permute.xlu0 %2052
      %2056 = vset.pattern.permute.xlu0 0
      %2057 = vperm.xlu0 %2056, %v1396
      %v2058 = vpop.permute.xlu0 %2057
      %2061 = vset.pattern.permute.xlu0 0
      %2062 = vperm.xlu0 %2061, %v1397
      %v2063 = vpop.permute.xlu0 %2062
      %2066 = vset.pattern.permute.xlu0 0
      %2067 = vperm.xlu0 %2066, %v1398
      %v2068 = vpop.permute.xlu0 %2067
      %2071 = vset.pattern.permute.xlu0 0
      %2072 = vperm.xlu0 %2071, %v1399
      %v2073 = vpop.permute.xlu0 %2072
      %2076 = vset.pattern.permute.xlu0 0
      %2077 = vperm.xlu0 %2076, %v1400
      %v2078 = vpop.permute.xlu0 %2077
      %2081 = vset.pattern.permute.xlu0 0
      %2082 = vperm.xlu0 %2081, %v1401
      %v2083 = vpop.permute.xlu0 %2082
      %v2085 = vmul.f32 %v2008, %v1927
      %v2086 = vmul.f32 %v2013, %v1932
      %v2087 = vmul.f32 %v2018, %v1937
      %v2088 = vmul.f32 %v2023, %v1942
      %v2089 = vmul.f32 %v2028, %v1947
      %v2090 = vmul.f32 %v2033, %v1952
      %v2091 = vmul.f32 %v2038, %v1957
      %v2092 = vmul.f32 %v2043, %v1962
      %v2093 = vmul.f32 %v2048, %v1967
      %v2094 = vmul.f32 %v2053, %v1972
      %v2095 = vmul.f32 %v2058, %v1977
      %v2096 = vmul.f32 %v2063, %v1982
      %v2097 = vmul.f32 %v2068, %v1987
      %v2098 = vmul.f32 %v2073, %v1992
      %v2099 = vmul.f32 %v2078, %v1997
      %v2100 = vmul.f32 %v2083, %v2002
      %v2101 = vsub.f32 %v1718, %v2085
      %v2102 = vsub.f32 %v1723, %v2086
      %v2103 = vsub.f32 %v1728, %v2087
      %v2104 = vsub.f32 %v1733, %v2088
      %v2105 = vsub.f32 %v1738, %v2089
      %v2106 = vsub.f32 %v1743, %v2090
      %v2107 = vsub.f32 %v1748, %v2091
      %v2108 = vsub.f32 %v1753, %v2092
      %v2109 = vsub.f32 %v1758, %v2093
      %v2110 = vsub.f32 %v1763, %v2094
      %v2111 = vsub.f32 %v1768, %v2095
      %v2112 = vsub.f32 %v1773, %v2096
      %v2113 = vsub.f32 %v1778, %v2097
      %v2114 = vsub.f32 %v1783, %v2098
      %v2115 = vsub.f32 %v1788, %v2099
      %v2116 = vsub.f32 %v1793, %v2100
      %2117 = vst.msk [vmem:[%s409] sm:$0xff] %vm1403, %v2101
      %2118 = vst.msk [vmem:[%s409 + $0x8] sm:$0xff] %vm1403, %v2102
      %2119 = vst.msk [vmem:[%s409 + $0x10] sm:$0xff] %vm1403, %v2103
      %2120 = vst.msk [vmem:[%s409 + $0x18] sm:$0xff] %vm1403, %v2104
      %2121 = vst.msk [vmem:[%s409 + $0x20] sm:$0xff] %vm1403, %v2105
      %2122 = vst.msk [vmem:[%s409 + $0x28] sm:$0xff] %vm1403, %v2106
      %2123 = vst.msk [vmem:[%s409 + $0x30] sm:$0xff] %vm1403, %v2107
      %2124 = vst.msk [vmem:[%s409 + $0x38] sm:$0xff] %vm1403, %v2108
      %2125 = vst.msk [vmem:[%s409 + $0x40] sm:$0xff] %vm1403, %v2109
      %2126 = vst.msk [vmem:[%s409 + $0x48] sm:$0xff] %vm1403, %v2110
      %2127 = vst.msk [vmem:[%s409 + $0x50] sm:$0xff] %vm1403, %v2111
      %2128 = vst.msk [vmem:[%s409 + $0x58] sm:$0xff] %vm1403, %v2112
      %2129 = vst.msk [vmem:[%s409 + $0x60] sm:$0xff] %vm1403, %v2113
      %2130 = vst.msk [vmem:[%s409 + $0x68] sm:$0xff] %vm1403, %v2114
      %2131 = vst.msk [vmem:[%s409 + $0x70] sm:$0xff] %vm1403, %v2115
      %2132 = vst.msk [vmem:[%s409 + $0x78] sm:$0xff] %vm1403, %v2116
      %v2133 = vsel %vm1403, %v2101, 0.0
      %v2134 = vsel %vm1403, %v2102, 0.0
      %v2135 = vadd.f32 %v2133, %v2134
      %v2136 = vsel %vm1403, %v2103, 0.0
      %v2137 = vadd.f32 %v2135, %v2136
      %v2138 = vsel %vm1403, %v2104, 0.0
      %v2139 = vadd.f32 %v2137, %v2138
      %v2140 = vsel %vm1403, %v2105, 0.0
      %v2141 = vadd.f32 %v2139, %v2140
      %v2142 = vsel %vm1403, %v2106, 0.0
      %v2143 = vadd.f32 %v2141, %v2142
      %v2144 = vsel %vm1403, %v2107, 0.0
      %v2145 = vadd.f32 %v2143, %v2144
      %v2146 = vsel %vm1403, %v2108, 0.0
      %v2147 = vadd.f32 %v2145, %v2146
      %v2148 = vsel %vm1403, %v2109, 0.0
      %v2149 = vadd.f32 %v2147, %v2148
      %v2150 = vsel %vm1403, %v2110, 0.0
      %v2151 = vadd.f32 %v2149, %v2150
      %v2152 = vsel %vm1403, %v2111, 0.0
      %v2153 = vadd.f32 %v2151, %v2152
      %v2154 = vsel %vm1403, %v2112, 0.0
      %v2155 = vadd.f32 %v2153, %v2154
      %v2156 = vsel %vm1403, %v2113, 0.0
      %v2157 = vadd.f32 %v2155, %v2156
      %v2158 = vsel %vm1403, %v2114, 0.0
      %v2159 = vadd.f32 %v2157, %v2158
      %v2160 = vsel %vm1403, %v2115, 0.0
      %v2161 = vadd.f32 %v2159, %v2160
      %v2162 = vsel %vm1403, %v2116, 0.0
      %v2163 = vadd.f32 %v2161, %v2162
      %v2164 = vrot.slane %v2163, 4
      %v2165 = vadd.f32 %v2163, %v2164
      %v2166 = vrot.slane %v2165, 2
      %v2167 = vadd.f32 %v2165, %v2166
      %v2168 = vrot.slane %v2167, 1
      %v2169 = vadd.f32 %v2167, %v2168
      %vm2170 = vcmask 57344
      %2171 = vst.msk [vmem:[%s417] sm:$0x1] %vm2170, %v2169
      %v2172 = vmul.f32 %v2101, %v2101
      %v2173 = vmul.f32 %v2102, %v2102
      %v2174 = vmul.f32 %v2103, %v2103
      %v2175 = vmul.f32 %v2104, %v2104
      %v2176 = vmul.f32 %v2105, %v2105
      %v2177 = vmul.f32 %v2106, %v2106
      %v2178 = vmul.f32 %v2107, %v2107
      %v2179 = vmul.f32 %v2108, %v2108
      %v2180 = vmul.f32 %v2109, %v2109
      %v2181 = vmul.f32 %v2110, %v2110
      %v2182 = vmul.f32 %v2111, %v2111
      %v2183 = vmul.f32 %v2112, %v2112
      %v2184 = vmul.f32 %v2113, %v2113
      %v2185 = vmul.f32 %v2114, %v2114
      %v2186 = vmul.f32 %v2115, %v2115
      %v2187 = vmul.f32 %v2116, %v2116
      %v2188 = vsel %vm1403, %v2172, 0.0
      %v2189 = vsel %vm1403, %v2173, 0.0
      %v2190 = vadd.f32 %v2188, %v2189
      %v2191 = vsel %vm1403, %v2174, 0.0
      %v2192 = vadd.f32 %v2190, %v2191
      %v2193 = vsel %vm1403, %v2175, 0.0
      %v2194 = vadd.f32 %v2192, %v2193
      %v2195 = vsel %vm1403, %v2176, 0.0
      %v2196 = vadd.f32 %v2194, %v2195
      %v2197 = vsel %vm1403, %v2177, 0.0
      %v2198 = vadd.f32 %v2196, %v2197
      %v2199 = vsel %vm1403, %v2178, 0.0
      %v2200 = vadd.f32 %v2198, %v2199
      %v2201 = vsel %vm1403, %v2179, 0.0
      %v2202 = vadd.f32 %v2200, %v2201
      %v2203 = vsel %vm1403, %v2180, 0.0
      %v2204 = vadd.f32 %v2202, %v2203
      %v2205 = vsel %vm1403, %v2181, 0.0
      %v2206 = vadd.f32 %v2204, %v2205
      %v2207 = vsel %vm1403, %v2182, 0.0
      %v2208 = vadd.f32 %v2206, %v2207
      %v2209 = vsel %vm1403, %v2183, 0.0
      %v2210 = vadd.f32 %v2208, %v2209
      %v2211 = vsel %vm1403, %v2184, 0.0
      %v2212 = vadd.f32 %v2210, %v2211
      %v2213 = vsel %vm1403, %v2185, 0.0
      %v2214 = vadd.f32 %v2212, %v2213
      %v2215 = vsel %vm1403, %v2186, 0.0
      %v2216 = vadd.f32 %v2214, %v2215
      %v2217 = vsel %vm1403, %v2187, 0.0
      %v2218 = vadd.f32 %v2216, %v2217
      %v2219 = vrot.slane %v2218, 4
      %v2220 = vadd.f32 %v2218, %v2219
      %v2221 = vrot.slane %v2220, 2
      %v2222 = vadd.f32 %v2220, %v2221
      %v2223 = vrot.slane %v2222, 1
      %v2224 = vadd.f32 %v2222, %v2223
      %2225 = vst.msk [vmem:[%s424] sm:$0x1] %vm2170, %v2224
      %s2226 = smul.u32 16, %s25
      %p2227 = scmp.lt.s32.totalorder %s24, 1
      %s2228 = scalar_select %p2227, %s24, 1
      %p2229 = scmp.lt.s32.totalorder %s2226, 31
      %s2230 = scalar_select %p2229, %s2226, 31
      %s2231 = smul.addr %s2228, 32
      %s2232 = sadd.s32 %s2230, %s2231
      %s2233 = smul.addr %s2232, 8
      %s2234 = scalar_lea.vmem %s6, %s2233
      %p2235 = scmp.lt.s32.totalorder %s24, 1
      %s2236 = scalar_select %p2235, %s24, 1
      %p2237 = scmp.lt.s32.totalorder %s25, 1
      %s2238 = scalar_select %p2237, %s25, 1
      %s2239 = smul.addr %s2236, 2
      %s2240 = sadd.s32 %s2238, %s2239
      %s2241 = scalar_lea.vmem %s7, %s2240
      %p2242 = scmp.lt.s32.totalorder %s24, 1
      %s2243 = scalar_select %p2242, %s24, 1
      %p2244 = scmp.lt.s32.totalorder %s25, 1
      %s2245 = scalar_select %p2244, %s25, 1
      %s2246 = smul.addr %s2243, 2
      %s2247 = sadd.s32 %s2245, %s2246
      %s2248 = scalar_lea.vmem %s8, %s2247
      // Predicated region
      $region49: #{snl_stage_forward.14} parent=43 // pred_check
        %p2249 = pneg %p195
      $region50: #{snl_stage_forward.14} parent=43 // pred_check_branch
        %2251 = sbr.rel (%p2249) target = $region52
      $region51: #{snl_stage_forward.14} parent=43 // pred_region
        %s2252 = smul.u32 16, %s25
      $region52: #{snl_stage_forward.14} parent=43 // pred_fallthru
        _
      // Predicated region
      $region53: #{snl_stage_forward.14} parent=43 // pred_check
        %p2253 = pneg %p223
      $region54: #{snl_stage_forward.14} parent=43 // pred_check_branch
        %2255 = sbr.rel (%p2253) target = $region56
      $region55: #{snl_stage_forward.14} parent=43 // pred_region
        _
      $region56: #{snl_stage_forward.14} parent=43 // pred_fallthru
        _
      // Predicated region
      $region57: #{snl_stage_forward.14} parent=43 // pred_check
        %p2256 = pneg %p251
      $region58: #{snl_stage_forward.14} parent=43 // pred_check_branch
        %2258 = sbr.rel (%p2256) target = $region60
      $region59: #{snl_stage_forward.14} parent=43 // pred_region
        _
      $region60: #{snl_stage_forward.14} parent=43 // pred_fallthru
        _
    $region44: #{snl_stage_forward.14} parent=5 // pred_fallthru
      _
    %p2259 = scmp.le.s32.totalorder 2, %s15
    // Predicated region
    $region61: #{snl_stage_forward.14} parent=5 // pred_check
      %p2260 = pneg %p2259
    $region62: #{snl_stage_forward.14} parent=5 // pred_check_branch
      %2262 = sbr.rel (%p2260) target = $region64
    $region63: #{snl_stage_forward.14} parent=5 // pred_region
      %s2263 = ssub.s32 %s15, 2
      // Predicated region
      $region65: #{snl_stage_forward.14} parent=63 // pred_check
        %p2264 = pneg %p201
      $region66: #{snl_stage_forward.14} parent=63 // pred_check_branch
        %2266 = sbr.rel (%p2264) target = $region68
      $region67: #{snl_stage_forward.14} parent=63 // pred_region
        %s2267 = smul.u32 16, %s27
        %p2268 = scmp.lt.s32.totalorder %s26, 1
        %s2269 = scalar_select %p2268, %s26, 1
        %p2270 = scmp.lt.s32.totalorder %s2267, 31
        %s2271 = scalar_select %p2270, %s2267, 31
        %s2272 = smul.addr %s2269, 32
        %s2273 = sadd.s32 %s2271, %s2272
        %s2274 = smul.addr %s2273, 8
        %s2275 = scalar_lea.vmem %s6, %s2274
      $region68: #{snl_stage_forward.14} parent=63 // pred_fallthru
        _
      // Predicated region
      $region69: #{snl_stage_forward.14} parent=63 // pred_check
        %p2276 = pneg %p229
      $region70: #{snl_stage_forward.14} parent=63 // pred_check_branch
        %2278 = sbr.rel (%p2276) target = $region72
      $region71: #{snl_stage_forward.14} parent=63 // pred_region
        %p2279 = scmp.lt.s32.totalorder %s26, 1
        %s2280 = scalar_select %p2279, %s26, 1
        %p2281 = scmp.lt.s32.totalorder %s27, 1
        %s2282 = scalar_select %p2281, %s27, 1
        %s2283 = smul.addr %s2280, 2
        %s2284 = sadd.s32 %s2282, %s2283
        %s2285 = scalar_lea.vmem %s7, %s2284
      $region72: #{snl_stage_forward.14} parent=63 // pred_fallthru
        _
      // Predicated region
      $region73: #{snl_stage_forward.14} parent=63 // pred_check
        %p2286 = pneg %p257
      $region74: #{snl_stage_forward.14} parent=63 // pred_check_branch
        %2288 = sbr.rel (%p2286) target = $region76
      $region75: #{snl_stage_forward.14} parent=63 // pred_region
        %p2289 = scmp.lt.s32.totalorder %s26, 1
        %s2290 = scalar_select %p2289, %s26, 1
        %p2291 = scmp.lt.s32.totalorder %s27, 1
        %s2292 = scalar_select %p2291, %s27, 1
        %s2293 = smul.addr %s2290, 2
        %s2294 = sadd.s32 %s2292, %s2293
        %s2295 = scalar_lea.vmem %s8, %s2294
      $region76: #{snl_stage_forward.14} parent=63 // pred_fallthru
        _
    $region64: #{snl_stage_forward.14} parent=5 // pred_fallthru
      _
  $region6: #{snl_stage_forward.14} parent=0 // loop_footer
    %s19 = sadd.s32 1, %s15
  $region7: #{snl_stage_forward.14} parent=0 // loop_footer_branch
    %14 = sbr.rel target = $region3
  $region8: #{snl_stage_forward.14} parent=0 // loop_exit
    _

</llo_original>
